<compile_context>
chip_gen: v7x
topology: tpu7x:2x2x1
jax: 0.10.0
libtpu: 0.0.40
codegen_flags: <defaults>
</compile_context>

<pallas_src>
import jax
import jax.numpy as jnp
from jax.experimental import pallas as pl
from jax.experimental.pallas import tpu as pltpu


# ----------------------------------------------------------------------------
# Fused bi-GRU + Linear kernel (single invocation, no grid)
# ----------------------------------------------------------------------------
def _encoder_kernel(x2_ref, wslab_ref, wbd_ref, bias_ref, o_ref, gi_ref, h_ref):
    S, I2 = x2_ref.shape            # I2 = 2 * input_size
    H2, G = wbd_ref.shape           # H2 = 2 * hidden, G = 6 * hidden
    H = H2 // 2
    O = o_ref.shape[1]

    b_gi = bias_ref[:, 0:G]                   # (1, 6H): r/z biases fully folded, n: bih only
    b_hn = bias_ref[:, G:G + H2]              # (1, 2H): n-gate hidden bias (inside r*(...))
    b_fc = bias_ref[:, G + H2:G + H2 + O]     # (1, O)

    # Hoisted bf16 input projection for both directions (one MXU matmul).
    # gi row t = [r_f(t) r_b(t') | z_f(t) z_b(t') | n_f(t) n_b(t')],  t' = S-1-t.
    gi_ref[...] = jnp.dot(x2_ref[...], wslab_ref[0:I2, 0:G],
                          preferred_element_type=jnp.float32) + b_gi

    w_bd = wbd_ref[...]                       # (2H, 6H) block-diagonal recurrent weights, f32

    def step(t, h):
        # h = [h_f(t-1) | h_b(t'+1)]  as a single (1, 2H) carry.
        gi = gi_ref[pl.ds(t, 1), :]           # (1, 6H) contiguous row (no lane crossing)
        # Single fused recurrent matmul per step, f32 @ HIGHEST (latency-bound, M=1, so the
        # extra MXU passes are essentially free and keep error from compounding over time).
        gh = jnp.dot(h, w_bd, preferred_element_type=jnp.float32,
                     precision=jax.lax.Precision.HIGHEST)          # (1, 6H)
        r = jax.nn.sigmoid(gi[:, 0:H2] + gh[:, 0:H2])
        z = jax.nn.sigmoid(gi[:, H2:2 * H2] + gh[:, H2:2 * H2])
        n = jnp.tanh(gi[:, 2 * H2:3 * H2] + r * (gh[:, 2 * H2:3 * H2] + b_hn))
        h = (1.0 - z) * n + z * h             # (1, 2H) = [h_f(t) | h_b(t')]
        # Store time-aligned: forward half at row t, backward half at row S-1-t.
        h_ref[pl.ds(t, 1), 0:H] = h[:, 0:H]
        h_ref[pl.ds(S - 1 - t, 1), H:H2] = h[:, H:H2]
        return h

    h0 = jnp.zeros((1, H2), jnp.float32)
    if S <= 16:
        # Small S: full static unroll (concrete indices -> simplest lowering).
        h = h0
        for t in range(S):
            h = step(t, h)
    else:
        # Larger S: bounded unroll keeps code size / vreg live ranges in check.
        jax.lax.fori_loop(0, S, step, h0, unroll=8)

    # Fused fc: one (S, 2H) @ (2H, O) bf16 matmul over time-aligned [h_f | h_b].
    o_ref[...] = jnp.dot(h_ref[...].astype(wslab_ref.dtype),
                         wslab_ref[I2:I2 + H2, 0:O],
                         preferred_element_type=jnp.float32) + b_fc


# ----------------------------------------------------------------------------
# Wrapper: weight packing + pallas_call
# ----------------------------------------------------------------------------
def _blockdiag2(a, b):
    """[[a, 0], [0, b]] block-diagonal stack of two 2-D matrices (float32)."""
    za = jnp.zeros((a.shape[0], b.shape[1]), jnp.float32)
    zb = jnp.zeros((b.shape[0], a.shape[1]), jnp.float32)
    return jnp.concatenate(
        [jnp.concatenate([a, za], axis=1),
         jnp.concatenate([zb, b], axis=1)], axis=0)


def _gate_grouped(wf_t, wb_t, H):
    """(rows_f, 3H) & (rows_b, 3H) with cols [r|z|n]  ->  (rows_f+rows_b, 6H) with cols
    [r_f r_b | z_f z_b | n_f n_b] and (fwd rows | bwd rows) block-diagonal structure."""
    return jnp.concatenate(
        [_blockdiag2(wf_t[:, g * H:(g + 1) * H], wb_t[:, g * H:(g + 1) * H])
         for g in range(3)], axis=1)


def encoder_forward(x, params):
    """Reproduces encoder.forward(x) with x of shape (seq, batch, input_size).

    NOTE: out[:, -1, :] selects the LAST BATCH ELEMENT and the GRU is independent per batch
    element, so only x[:, -1, :] feeds the kernel; other batch elements never affect the
    module's output (this assumption is inherent to the original module's forward).
    """
    S, B, I = x.shape
    wih_f, whh_f, bih_f, bhh_f = params["gru_fwd"]
    wih_b, whh_b, bih_b, bhh_b = params["gru_bwd"]
    fc_w, fc_b = params["fc_w"], params["fc_b"]
    H = whh_f.shape[1]
    O = fc_w.shape[0]

    x_last = x[:, -1, :].astype(jnp.float32)                       # (S, I)
    # Row t of x2 = [x_t | x_{S-1-t}]: one matmul yields fwd(t) and bwd(S-1-t) projections.
    x2 = jnp.concatenate([x_last, x_last[::-1]], axis=1)           # (S, 2I)

    # Input-projection weights, gate-grouped + direction block-diagonal: (2I, 6H).
    w_proj = _gate_grouped(wih_f.T, wih_b.T, H)
    # Recurrent weights, same layout: (2H, 6H); kept f32 (used at HIGHEST precision).
    w_bd = _gate_grouped(whh_f.T, whh_b.T, H).astype(jnp.float32)

    # fc weights: (2H, O); rows 0:H act on h_f, rows H:2H on h_b (PyTorch concat order).
    fc_wt = fc_w.T

    # bf16 weight slab: [ w_proj ; fc_wt (zero-padded cols) ]  ->  (2I + 2H, max(6H, O)).
    C = max(6 * H, O)
    w_slab = jnp.zeros((2 * I + 2 * H, C), jnp.float32)
    w_slab = w_slab.at[:2 * I, :6 * H].set(w_proj)
    w_slab = w_slab.at[2 * I:, :O].set(fc_wt)
    w_slab = w_slab.astype(jnp.bfloat16)

    # f32 bias slab: [ gi bias (6H) | n-gate hidden bias (2H) | fc bias (O) ].
    b_r = jnp.concatenate([bih_f[:H] + bhh_f[:H], bih_b[:H] + bhh_b[:H]])
    b_z = jnp.concatenate([bih_f[H:2 * H] + bhh_f[H:2 * H],
                           bih_b[H:2 * H] + bhh_b[H:2 * H]])
    b_n = jnp.concatenate([bih_f[2 * H:], bih_b[2 * H:]])          # bih only (bhh_n via r*(...))
    b_hn = jnp.concatenate([bhh_f[2 * H:], bhh_b[2 * H:]])
    bias = jnp.concatenate([b_r, b_z, b_n, b_hn, fc_b]).reshape(1, -1).astype(jnp.float32)

    vmem = pl.BlockSpec(memory_space=pltpu.MemorySpace.VMEM)

    # TODO(synk): at production S/H re-derive the VMEM budget (gi scratch is S*6H*4 bytes),
    # chunk the time axis / set vmem_limit_bytes, and on v7x consider one GRU direction per
    # TensorCore; irrelevant at these toy sizes.
    return pl.pallas_call(
        _encoder_kernel,
        out_shape=jax.ShapeDtypeStruct((S, O), jnp.float32),
        in_specs=[vmem, vmem, vmem, vmem],
        out_specs=vmem,
        scratch_shapes=[pltpu.VMEM((S, 6 * H), jnp.float32),   # gi (hoisted input projections)
                        pltpu.VMEM((S, 2 * H), jnp.float32)],  # time-aligned [h_f | h_b]
    )(x2.astype(jnp.bfloat16), w_slab, w_bd, bias)


# ----------------------------------------------------------------------------
# Pure-JAX reference (full-batch GRU, then the module's [:, -1, :] selection)
# ----------------------------------------------------------------------------
def _gru_dir_ref(x, wih, whh, bih, bhh, reverse):
    S, B, I = x.shape
    H = whh.shape[1]

    def step(h, xt):
        gi = xt @ wih.T + bih
        gh = h @ whh.T + bhh
        r = jax.nn.sigmoid(gi[:, :H] + gh[:, :H])
        z = jax.nn.sigmoid(gi[:, H:2 * H] + gh[:, H:2 * H])
        n = jnp.tanh(gi[:, 2 * H:] + r * gh[:, 2 * H:])
        h = (1.0 - z) * n + z * h
        return h, h

    xs = x[::-1] if reverse else x
    _, outs = jax.lax.scan(step, jnp.zeros((B, H), jnp.float32), xs)
    return outs[::-1] if reverse else outs


def encoder_forward_ref(x, params):
    of = _gru_dir_ref(x, *params["gru_fwd"], reverse=False)
    ob = _gru_dir_ref(x, *params["gru_bwd"], reverse=True)
    out = jnp.concatenate([of, ob], axis=-1)
    out = out[:, -1, :]
    return out @ params["fc_w"].T + params["fc_b"]


# ----------------------------------------------------------------------------
# Main
# ----------------------------------------------------------------------------
if __name__ == "__main__":
    # small shapes consistent with the module's forward
    S, B, I, H, O = 8, 4, 16, 32, 8

    key = jax.random.PRNGKey(0)
    ks = jax.random.split(key, 12)
    k = 1.0 / jnp.sqrt(H)
    u = lambda kk, shape: jax.random.uniform(kk, shape, jnp.float32, -k, k)

    params = {
        "gru_fwd": (u(ks[0], (3 * H, I)), u(ks[1], (3 * H, H)),
                    u(ks[2], (3 * H,)), u(ks[3], (3 * H,))),
        "gru_bwd": (u(ks[4], (3 * H, I)), u(ks[5], (3 * H, H)),
                    u(ks[6], (3 * H,)), u(ks[7], (3 * H,))),
        "fc_w": u(ks[8], (O, 2 * H)),   # see TODO(synk): in_features = 2*H
        "fc_b": u(ks[9], (O,)),
    }

    x = jax.random.normal(ks[10], (S, B, I), jnp.float32)

    out = jax.block_until_ready(encoder_forward(x, params))
    ref = jax.block_until_ready(encoder_forward_ref(x, params))

    assert out.shape == (S, O), out.shape
    # bf16 projection/fc weights + f32 HIGHEST recurrence: tighter than the previous 3e-2.
    err = float(jnp.max(jnp.abs(out - ref)))
    assert jnp.allclose(out, ref, atol=2e-2, rtol=2e-2), err

    print("KERNEL_OK")
</pallas_src>

<mosaic_0001>
module attributes {stable_mosaic.version = 11 : i64} {
  func.func @_encoder_kernel(%arg0: memref<8x32xbf16, #tpu.memory_space<vmem>>, %arg1: memref<96x192xbf16, #tpu.memory_space<vmem>>, %arg2: memref<64x192xf32, #tpu.memory_space<vmem>>, %arg3: memref<1x264xf32, #tpu.memory_space<vmem>>, %arg4: memref<8x8xf32, #tpu.memory_space<vmem>>, %arg5: memref<8x192xf32, #tpu.memory_space<vmem>>, %arg6: memref<8x64xf32, #tpu.memory_space<vmem>>) attributes {dimension_semantics = [], scalar_prefetch = 0 : i64, scratch_operands = 2 : i64, tpu.core_type = #tpu.core_type<tc>} {
    %c0 = arith.constant 0 : index
    %c0_0 = arith.constant 0 : index
    %0 = vector.load %arg3[%c0, %c0_0] : memref<1x264xf32, #tpu.memory_space<vmem>>, vector<1x192xf32>
    %c0_1 = arith.constant 0 : index
    %c192 = arith.constant 192 : index
    %1 = vector.load %arg3[%c0_1, %c192] : memref<1x264xf32, #tpu.memory_space<vmem>>, vector<1x64xf32>
    %c0_2 = arith.constant 0 : index
    %c256 = arith.constant 256 : index
    %2 = vector.load %arg3[%c0_2, %c256] : memref<1x264xf32, #tpu.memory_space<vmem>>, vector<1x8xf32>
    %c0_3 = arith.constant 0 : index
    %c0_4 = arith.constant 0 : index
    %3 = vector.load %arg0[%c0_3, %c0_4] : memref<8x32xbf16, #tpu.memory_space<vmem>>, vector<8x32xbf16>
    %c0_5 = arith.constant 0 : index
    %c0_6 = arith.constant 0 : index
    %4 = vector.load %arg1[%c0_5, %c0_6] : memref<96x192xbf16, #tpu.memory_space<vmem>>, vector<32x192xbf16>
    %cst = arith.constant dense<0.000000e+00> : vector<8x192xf32>
    %5 = tpu.matmul %3, %4, %cst {dimension_numbers = #tpu.dot_dimension_numbers<[1], [0], [0], [1], [0, 0, 1, 1], [], []>} : vector<8x32xbf16>, vector<32x192xbf16>, vector<8x192xf32> -> vector<8x192xf32>
    %6 = vector.broadcast %0 : vector<1x192xf32> to vector<8x192xf32>
    %7 = arith.addf %5, %6 : vector<8x192xf32>
    %c0_7 = arith.constant 0 : index
    %c0_8 = arith.constant 0 : index
    %8 = vector.load %arg5[%c0_7, %c0_8] : memref<8x192xf32, #tpu.memory_space<vmem>>, vector<8x192xf32>
    tpu.vector_store %arg5[%c0_7, %c0_8], %7 {strides = array<i32>} : memref<8x192xf32, #tpu.memory_space<vmem>>, vector<8x192xf32>,
    %c0_9 = arith.constant 0 : index
    %c0_10 = arith.constant 0 : index
    %9 = vector.load %arg2[%c0_9, %c0_10] : memref<64x192xf32, #tpu.memory_space<vmem>>, vector<64x192xf32>
    %cst_11 = arith.constant 0.000000e+00 : f32
    %10 = vector.broadcast %cst_11 : f32 to vector<1x64xf32>
    %c0_12 = arith.constant 0 : index
    %c0_13 = arith.constant 0 : index
    %11 = vector.load %arg5[%c0_12, %c0_13] : memref<8x192xf32, #tpu.memory_space<vmem>>, vector<1x192xf32>
    %cst_14 = arith.constant dense<0.000000e+00> : vector<1x192xf32>
    %12 = tpu.matmul %10, %9, %cst_14 {dimension_numbers = #tpu.dot_dimension_numbers<[1], [0], [0], [1], [0, 0, 1, 1], [], []>, precision = #tpu.contract_precision<fp32>} : vector<1x64xf32>, vector<64x192xf32>, vector<1x192xf32> -> vector<1x192xf32>
    %13 = vector.extract_strided_slice %11 {offsets = [0, 0], sizes = [1, 64], strides = [1, 1]} : vector<1x192xf32> to vector<1x64xf32>
    %14 = vector.extract_strided_slice %12 {offsets = [0, 0], sizes = [1, 64], strides = [1, 1]} : vector<1x192xf32> to vector<1x64xf32>
    %15 = arith.addf %13, %14 : vector<1x64xf32>
    %16 = arith.negf %15 : vector<1x64xf32>
    %17 = math.exp %16 : vector<1x64xf32>
    %cst_15 = arith.constant 1.000000e+00 : f32
    %18 = vector.broadcast %cst_15 : f32 to vector<1x64xf32>
    %19 = arith.addf %18, %17 : vector<1x64xf32>
    %20 = arith.divf %18, %19 : vector<1x64xf32>
    %21 = vector.extract_strided_slice %11 {offsets = [0, 64], sizes = [1, 64], strides = [1, 1]} : vector<1x192xf32> to vector<1x64xf32>
    %22 = vector.extract_strided_slice %12 {offsets = [0, 64], sizes = [1, 64], strides = [1, 1]} : vector<1x192xf32> to vector<1x64xf32>
    %23 = arith.addf %21, %22 : vector<1x64xf32>
    %24 = arith.negf %23 : vector<1x64xf32>
    %25 = math.exp %24 : vector<1x64xf32>
    %cst_16 = arith.constant 1.000000e+00 : f32
    %26 = vector.broadcast %cst_16 : f32 to vector<1x64xf32>
    %27 = arith.addf %26, %25 : vector<1x64xf32>
    %28 = arith.divf %26, %27 : vector<1x64xf32>
    %29 = vector.extract_strided_slice %11 {offsets = [0, 128], sizes = [1, 64], strides = [1, 1]} : vector<1x192xf32> to vector<1x64xf32>
    %30 = vector.extract_strided_slice %12 {offsets = [0, 128], sizes = [1, 64], strides = [1, 1]} : vector<1x192xf32> to vector<1x64xf32>
    %31 = arith.addf %30, %1 : vector<1x64xf32>
    %32 = arith.mulf %20, %31 : vector<1x64xf32>
    %33 = arith.addf %29, %32 : vector<1x64xf32>
    %34 = math.tanh %33 : vector<1x64xf32>
    %cst_17 = arith.constant 1.000000e+00 : f32
    %35 = vector.broadcast %cst_17 : f32 to vector<1x64xf32>
    %36 = arith.subf %35, %28 : vector<1x64xf32>
    %37 = arith.mulf %36, %34 : vector<1x64xf32>
    %38 = arith.mulf %28, %10 : vector<1x64xf32>
    %39 = arith.addf %37, %38 : vector<1x64xf32>
    %40 = vector.extract_strided_slice %39 {offsets = [0, 0], sizes = [1, 32], strides = [1, 1]} : vector<1x64xf32> to vector<1x32xf32>
    %c0_18 = arith.constant 0 : index
    %c0_19 = arith.constant 0 : index
    %41 = vector.load %arg6[%c0_18, %c0_19] : memref<8x64xf32, #tpu.memory_space<vmem>>, vector<1x32xf32>
    tpu.vector_store %arg6[%c0_18, %c0_19], %40 {strides = array<i32>} : memref<8x64xf32, #tpu.memory_space<vmem>>, vector<1x32xf32>,
    %42 = vector.extract_strided_slice %39 {offsets = [0, 32], sizes = [1, 32], strides = [1, 1]} : vector<1x64xf32> to vector<1x32xf32>
    %c7 = arith.constant 7 : index
    %c32 = arith.constant 32 : index
    %43 = vector.load %arg6[%c7, %c32] : memref<8x64xf32, #tpu.memory_space<vmem>>, vector<1x32xf32>
    tpu.vector_store %arg6[%c7, %c32], %42 {strides = array<i32>} : memref<8x64xf32, #tpu.memory_space<vmem>>, vector<1x32xf32>,
    %c1 = arith.constant 1 : index
    %c0_20 = arith.constant 0 : index
    %44 = vector.load %arg5[%c1, %c0_20] : memref<8x192xf32, #tpu.memory_space<vmem>>, vector<1x192xf32>
    %cst_21 = arith.constant dense<0.000000e+00> : vector<1x192xf32>
    %45 = tpu.matmul %39, %9, %cst_21 {dimension_numbers = #tpu.dot_dimension_numbers<[1], [0], [0], [1], [0, 0, 1, 1], [], []>, precision = #tpu.contract_precision<fp32>} : vector<1x64xf32>, vector<64x192xf32>, vector<1x192xf32> -> vector<1x192xf32>
    %46 = vector.extract_strided_slice %44 {offsets = [0, 0], sizes = [1, 64], strides = [1, 1]} : vector<1x192xf32> to vector<1x64xf32>
    %47 = vector.extract_strided_slice %45 {offsets = [0, 0], sizes = [1, 64], strides = [1, 1]} : vector<1x192xf32> to vector<1x64xf32>
    %48 = arith.addf %46, %47 : vector<1x64xf32>
    %49 = arith.negf %48 : vector<1x64xf32>
    %50 = math.exp %49 : vector<1x64xf32>
    %cst_22 = arith.constant 1.000000e+00 : f32
    %51 = vector.broadcast %cst_22 : f32 to vector<1x64xf32>
    %52 = arith.addf %51, %50 : vector<1x64xf32>
    %53 = arith.divf %51, %52 : vector<1x64xf32>
    %54 = vector.extract_strided_slice %44 {offsets = [0, 64], sizes = [1, 64], strides = [1, 1]} : vector<1x192xf32> to vector<1x64xf32>
    %55 = vector.extract_strided_slice %45 {offsets = [0, 64], sizes = [1, 64], strides = [1, 1]} : vector<1x192xf32> to vector<1x64xf32>
    %56 = arith.addf %54, %55 : vector<1x64xf32>
    %57 = arith.negf %56 : vector<1x64xf32>
    %58 = math.exp %57 : vector<1x64xf32>
    %cst_23 = arith.constant 1.000000e+00 : f32
    %59 = vector.broadcast %cst_23 : f32 to vector<1x64xf32>
    %60 = arith.addf %59, %58 : vector<1x64xf32>
    %61 = arith.divf %59, %60 : vector<1x64xf32>
    %62 = vector.extract_strided_slice %44 {offsets = [0, 128], sizes = [1, 64], strides = [1, 1]} : vector<1x192xf32> to vector<1x64xf32>
    %63 = vector.extract_strided_slice %45 {offsets = [0, 128], sizes = [1, 64], strides = [1, 1]} : vector<1x192xf32> to vector<1x64xf32>
    %64 = arith.addf %63, %1 : vector<1x64xf32>
    %65 = arith.mulf %53, %64 : vector<1x64xf32>
    %66 = arith.addf %62, %65 : vector<1x64xf32>
    %67 = math.tanh %66 : vector<1x64xf32>
    %cst_24 = arith.constant 1.000000e+00 : f32
    %68 = vector.broadcast %cst_24 : f32 to vector<1x64xf32>
    %69 = arith.subf %68, %61 : vector<1x64xf32>
    %70 = arith.mulf %69, %67 : vector<1x64xf32>
    %71 = arith.mulf %61, %39 : vector<1x64xf32>
    %72 = arith.addf %70, %71 : vector<1x64xf32>
    %73 = vector.extract_strided_slice %72 {offsets = [0, 0], sizes = [1, 32], strides = [1, 1]} : vector<1x64xf32> to vector<1x32xf32>
    %c1_25 = arith.constant 1 : index
    %c0_26 = arith.constant 0 : index
    %74 = vector.load %arg6[%c1_25, %c0_26] : memref<8x64xf32, #tpu.memory_space<vmem>>, vector<1x32xf32>
    tpu.vector_store %arg6[%c1_25, %c0_26], %73 {strides = array<i32>} : memref<8x64xf32, #tpu.memory_space<vmem>>, vector<1x32xf32>,
    %75 = vector.extract_strided_slice %72 {offsets = [0, 32], sizes = [1, 32], strides = [1, 1]} : vector<1x64xf32> to vector<1x32xf32>
    %c6 = arith.constant 6 : index
    %c32_27 = arith.constant 32 : index
    %76 = vector.load %arg6[%c6, %c32_27] : memref<8x64xf32, #tpu.memory_space<vmem>>, vector<1x32xf32>
    tpu.vector_store %arg6[%c6, %c32_27], %75 {strides = array<i32>} : memref<8x64xf32, #tpu.memory_space<vmem>>, vector<1x32xf32>,
    %c2 = arith.constant 2 : index
    %c0_28 = arith.constant 0 : index
    %77 = vector.load %arg5[%c2, %c0_28] : memref<8x192xf32, #tpu.memory_space<vmem>>, vector<1x192xf32>
    %cst_29 = arith.constant dense<0.000000e+00> : vector<1x192xf32>
    %78 = tpu.matmul %72, %9, %cst_29 {dimension_numbers = #tpu.dot_dimension_numbers<[1], [0], [0], [1], [0, 0, 1, 1], [], []>, precision = #tpu.contract_precision<fp32>} : vector<1x64xf32>, vector<64x192xf32>, vector<1x192xf32> -> vector<1x192xf32>
    %79 = vector.extract_strided_slice %77 {offsets = [0, 0], sizes = [1, 64], strides = [1, 1]} : vector<1x192xf32> to vector<1x64xf32>
    %80 = vector.extract_strided_slice %78 {offsets = [0, 0], sizes = [1, 64], strides = [1, 1]} : vector<1x192xf32> to vector<1x64xf32>
    %81 = arith.addf %79, %80 : vector<1x64xf32>
    %82 = arith.negf %81 : vector<1x64xf32>
    %83 = math.exp %82 : vector<1x64xf32>
    %cst_30 = arith.constant 1.000000e+00 : f32
    %84 = vector.broadcast %cst_30 : f32 to vector<1x64xf32>
    %85 = arith.addf %84, %83 : vector<1x64xf32>
    %86 = arith.divf %84, %85 : vector<1x64xf32>
    %87 = vector.extract_strided_slice %77 {offsets = [0, 64], sizes = [1, 64], strides = [1, 1]} : vector<1x192xf32> to vector<1x64xf32>
    %88 = vector.extract_strided_slice %78 {offsets = [0, 64], sizes = [1, 64], strides = [1, 1]} : vector<1x192xf32> to vector<1x64xf32>
    %89 = arith.addf %87, %88 : vector<1x64xf32>
    %90 = arith.negf %89 : vector<1x64xf32>
    %91 = math.exp %90 : vector<1x64xf32>
    %cst_31 = arith.constant 1.000000e+00 : f32
    %92 = vector.broadcast %cst_31 : f32 to vector<1x64xf32>
    %93 = arith.addf %92, %91 : vector<1x64xf32>
    %94 = arith.divf %92, %93 : vector<1x64xf32>
    %95 = vector.extract_strided_slice %77 {offsets = [0, 128], sizes = [1, 64], strides = [1, 1]} : vector<1x192xf32> to vector<1x64xf32>
    %96 = vector.extract_strided_slice %78 {offsets = [0, 128], sizes = [1, 64], strides = [1, 1]} : vector<1x192xf32> to vector<1x64xf32>
    %97 = arith.addf %96, %1 : vector<1x64xf32>
    %98 = arith.mulf %86, %97 : vector<1x64xf32>
    %99 = arith.addf %95, %98 : vector<1x64xf32>
    %100 = math.tanh %99 : vector<1x64xf32>
    %cst_32 = arith.constant 1.000000e+00 : f32
    %101 = vector.broadcast %cst_32 : f32 to vector<1x64xf32>
    %102 = arith.subf %101, %94 : vector<1x64xf32>
    %103 = arith.mulf %102, %100 : vector<1x64xf32>
    %104 = arith.mulf %94, %72 : vector<1x64xf32>
    %105 = arith.addf %103, %104 : vector<1x64xf32>
    %106 = vector.extract_strided_slice %105 {offsets = [0, 0], sizes = [1, 32], strides = [1, 1]} : vector<1x64xf32> to vector<1x32xf32>
    %c2_33 = arith.constant 2 : index
    %c0_34 = arith.constant 0 : index
    %107 = vector.load %arg6[%c2_33, %c0_34] : memref<8x64xf32, #tpu.memory_space<vmem>>, vector<1x32xf32>
    tpu.vector_store %arg6[%c2_33, %c0_34], %106 {strides = array<i32>} : memref<8x64xf32, #tpu.memory_space<vmem>>, vector<1x32xf32>,
    %108 = vector.extract_strided_slice %105 {offsets = [0, 32], sizes = [1, 32], strides = [1, 1]} : vector<1x64xf32> to vector<1x32xf32>
    %c5 = arith.constant 5 : index
    %c32_35 = arith.constant 32 : index
    %109 = vector.load %arg6[%c5, %c32_35] : memref<8x64xf32, #tpu.memory_space<vmem>>, vector<1x32xf32>
    tpu.vector_store %arg6[%c5, %c32_35], %108 {strides = array<i32>} : memref<8x64xf32, #tpu.memory_space<vmem>>, vector<1x32xf32>,
    %c3 = arith.constant 3 : index
    %c0_36 = arith.constant 0 : index
    %110 = vector.load %arg5[%c3, %c0_36] : memref<8x192xf32, #tpu.memory_space<vmem>>, vector<1x192xf32>
    %cst_37 = arith.constant dense<0.000000e+00> : vector<1x192xf32>
    %111 = tpu.matmul %105, %9, %cst_37 {dimension_numbers = #tpu.dot_dimension_numbers<[1], [0], [0], [1], [0, 0, 1, 1], [], []>, precision = #tpu.contract_precision<fp32>} : vector<1x64xf32>, vector<64x192xf32>, vector<1x192xf32> -> vector<1x192xf32>
    %112 = vector.extract_strided_slice %110 {offsets = [0, 0], sizes = [1, 64], strides = [1, 1]} : vector<1x192xf32> to vector<1x64xf32>
    %113 = vector.extract_strided_slice %111 {offsets = [0, 0], sizes = [1, 64], strides = [1, 1]} : vector<1x192xf32> to vector<1x64xf32>
    %114 = arith.addf %112, %113 : vector<1x64xf32>
    %115 = arith.negf %114 : vector<1x64xf32>
    %116 = math.exp %115 : vector<1x64xf32>
    %cst_38 = arith.constant 1.000000e+00 : f32
    %117 = vector.broadcast %cst_38 : f32 to vector<1x64xf32>
    %118 = arith.addf %117, %116 : vector<1x64xf32>
    %119 = arith.divf %117, %118 : vector<1x64xf32>
    %120 = vector.extract_strided_slice %110 {offsets = [0, 64], sizes = [1, 64], strides = [1, 1]} : vector<1x192xf32> to vector<1x64xf32>
    %121 = vector.extract_strided_slice %111 {offsets = [0, 64], sizes = [1, 64], strides = [1, 1]} : vector<1x192xf32> to vector<1x64xf32>
    %122 = arith.addf %120, %121 : vector<1x64xf32>
    %123 = arith.negf %122 : vector<1x64xf32>
    %124 = math.exp %123 : vector<1x64xf32>
    %cst_39 = arith.constant 1.000000e+00 : f32
    %125 = vector.broadcast %cst_39 : f32 to vector<1x64xf32>
    %126 = arith.addf %125, %124 : vector<1x64xf32>
    %127 = arith.divf %125, %126 : vector<1x64xf32>
    %128 = vector.extract_strided_slice %110 {offsets = [0, 128], sizes = [1, 64], strides = [1, 1]} : vector<1x192xf32> to vector<1x64xf32>
    %129 = vector.extract_strided_slice %111 {offsets = [0, 128], sizes = [1, 64], strides = [1, 1]} : vector<1x192xf32> to vector<1x64xf32>
    %130 = arith.addf %129, %1 : vector<1x64xf32>
    %131 = arith.mulf %119, %130 : vector<1x64xf32>
    %132 = arith.addf %128, %131 : vector<1x64xf32>
    %133 = math.tanh %132 : vector<1x64xf32>
    %cst_40 = arith.constant 1.000000e+00 : f32
    %134 = vector.broadcast %cst_40 : f32 to vector<1x64xf32>
    %135 = arith.subf %134, %127 : vector<1x64xf32>
    %136 = arith.mulf %135, %133 : vector<1x64xf32>
    %137 = arith.mulf %127, %105 : vector<1x64xf32>
    %138 = arith.addf %136, %137 : vector<1x64xf32>
    %139 = vector.extract_strided_slice %138 {offsets = [0, 0], sizes = [1, 32], strides = [1, 1]} : vector<1x64xf32> to vector<1x32xf32>
    %c3_41 = arith.constant 3 : index
    %c0_42 = arith.constant 0 : index
    %140 = vector.load %arg6[%c3_41, %c0_42] : memref<8x64xf32, #tpu.memory_space<vmem>>, vector<1x32xf32>
    tpu.vector_store %arg6[%c3_41, %c0_42], %139 {strides = array<i32>} : memref<8x64xf32, #tpu.memory_space<vmem>>, vector<1x32xf32>,
    %141 = vector.extract_strided_slice %138 {offsets = [0, 32], sizes = [1, 32], strides = [1, 1]} : vector<1x64xf32> to vector<1x32xf32>
    %c4 = arith.constant 4 : index
    %c32_43 = arith.constant 32 : index
    %142 = vector.load %arg6[%c4, %c32_43] : memref<8x64xf32, #tpu.memory_space<vmem>>, vector<1x32xf32>
    tpu.vector_store %arg6[%c4, %c32_43], %141 {strides = array<i32>} : memref<8x64xf32, #tpu.memory_space<vmem>>, vector<1x32xf32>,
    %c4_44 = arith.constant 4 : index
    %c0_45 = arith.constant 0 : index
    %143 = vector.load %arg5[%c4_44, %c0_45] : memref<8x192xf32, #tpu.memory_space<vmem>>, vector<1x192xf32>
    %cst_46 = arith.constant dense<0.000000e+00> : vector<1x192xf32>
    %144 = tpu.matmul %138, %9, %cst_46 {dimension_numbers = #tpu.dot_dimension_numbers<[1], [0], [0], [1], [0, 0, 1, 1], [], []>, precision = #tpu.contract_precision<fp32>} : vector<1x64xf32>, vector<64x192xf32>, vector<1x192xf32> -> vector<1x192xf32>
    %145 = vector.extract_strided_slice %143 {offsets = [0, 0], sizes = [1, 64], strides = [1, 1]} : vector<1x192xf32> to vector<1x64xf32>
    %146 = vector.extract_strided_slice %144 {offsets = [0, 0], sizes = [1, 64], strides = [1, 1]} : vector<1x192xf32> to vector<1x64xf32>
    %147 = arith.addf %145, %146 : vector<1x64xf32>
    %148 = arith.negf %147 : vector<1x64xf32>
    %149 = math.exp %148 : vector<1x64xf32>
    %cst_47 = arith.constant 1.000000e+00 : f32
    %150 = vector.broadcast %cst_47 : f32 to vector<1x64xf32>
    %151 = arith.addf %150, %149 : vector<1x64xf32>
    %152 = arith.divf %150, %151 : vector<1x64xf32>
    %153 = vector.extract_strided_slice %143 {offsets = [0, 64], sizes = [1, 64], strides = [1, 1]} : vector<1x192xf32> to vector<1x64xf32>
    %154 = vector.extract_strided_slice %144 {offsets = [0, 64], sizes = [1, 64], strides = [1, 1]} : vector<1x192xf32> to vector<1x64xf32>
    %155 = arith.addf %153, %154 : vector<1x64xf32>
    %156 = arith.negf %155 : vector<1x64xf32>
    %157 = math.exp %156 : vector<1x64xf32>
    %cst_48 = arith.constant 1.000000e+00 : f32
    %158 = vector.broadcast %cst_48 : f32 to vector<1x64xf32>
    %159 = arith.addf %158, %157 : vector<1x64xf32>
    %160 = arith.divf %158, %159 : vector<1x64xf32>
    %161 = vector.extract_strided_slice %143 {offsets = [0, 128], sizes = [1, 64], strides = [1, 1]} : vector<1x192xf32> to vector<1x64xf32>
    %162 = vector.extract_strided_slice %144 {offsets = [0, 128], sizes = [1, 64], strides = [1, 1]} : vector<1x192xf32> to vector<1x64xf32>
    %163 = arith.addf %162, %1 : vector<1x64xf32>
    %164 = arith.mulf %152, %163 : vector<1x64xf32>
    %165 = arith.addf %161, %164 : vector<1x64xf32>
    %166 = math.tanh %165 : vector<1x64xf32>
    %cst_49 = arith.constant 1.000000e+00 : f32
    %167 = vector.broadcast %cst_49 : f32 to vector<1x64xf32>
    %168 = arith.subf %167, %160 : vector<1x64xf32>
    %169 = arith.mulf %168, %166 : vector<1x64xf32>
    %170 = arith.mulf %160, %138 : vector<1x64xf32>
    %171 = arith.addf %169, %170 : vector<1x64xf32>
    %172 = vector.extract_strided_slice %171 {offsets = [0, 0], sizes = [1, 32], strides = [1, 1]} : vector<1x64xf32> to vector<1x32xf32>
    %c4_50 = arith.constant 4 : index
    %c0_51 = arith.constant 0 : index
    %173 = vector.load %arg6[%c4_50, %c0_51] : memref<8x64xf32, #tpu.memory_space<vmem>>, vector<1x32xf32>
    tpu.vector_store %arg6[%c4_50, %c0_51], %172 {strides = array<i32>} : memref<8x64xf32, #tpu.memory_space<vmem>>, vector<1x32xf32>,
    %174 = vector.extract_strided_slice %171 {offsets = [0, 32], sizes = [1, 32], strides = [1, 1]} : vector<1x64xf32> to vector<1x32xf32>
    %c3_52 = arith.constant 3 : index
    %c32_53 = arith.constant 32 : index
    %175 = vector.load %arg6[%c3_52, %c32_53] : memref<8x64xf32, #tpu.memory_space<vmem>>, vector<1x32xf32>
    tpu.vector_store %arg6[%c3_52, %c32_53], %174 {strides = array<i32>} : memref<8x64xf32, #tpu.memory_space<vmem>>, vector<1x32xf32>,
    %c5_54 = arith.constant 5 : index
    %c0_55 = arith.constant 0 : index
    %176 = vector.load %arg5[%c5_54, %c0_55] : memref<8x192xf32, #tpu.memory_space<vmem>>, vector<1x192xf32>
    %cst_56 = arith.constant dense<0.000000e+00> : vector<1x192xf32>
    %177 = tpu.matmul %171, %9, %cst_56 {dimension_numbers = #tpu.dot_dimension_numbers<[1], [0], [0], [1], [0, 0, 1, 1], [], []>, precision = #tpu.contract_precision<fp32>} : vector<1x64xf32>, vector<64x192xf32>, vector<1x192xf32> -> vector<1x192xf32>
    %178 = vector.extract_strided_slice %176 {offsets = [0, 0], sizes = [1, 64], strides = [1, 1]} : vector<1x192xf32> to vector<1x64xf32>
    %179 = vector.extract_strided_slice %177 {offsets = [0, 0], sizes = [1, 64], strides = [1, 1]} : vector<1x192xf32> to vector<1x64xf32>
    %180 = arith.addf %178, %179 : vector<1x64xf32>
    %181 = arith.negf %180 : vector<1x64xf32>
    %182 = math.exp %181 : vector<1x64xf32>
    %cst_57 = arith.constant 1.000000e+00 : f32
    %183 = vector.broadcast %cst_57 : f32 to vector<1x64xf32>
    %184 = arith.addf %183, %182 : vector<1x64xf32>
    %185 = arith.divf %183, %184 : vector<1x64xf32>
    %186 = vector.extract_strided_slice %176 {offsets = [0, 64], sizes = [1, 64], strides = [1, 1]} : vector<1x192xf32> to vector<1x64xf32>
    %187 = vector.extract_strided_slice %177 {offsets = [0, 64], sizes = [1, 64], strides = [1, 1]} : vector<1x192xf32> to vector<1x64xf32>
    %188 = arith.addf %186, %187 : vector<1x64xf32>
    %189 = arith.negf %188 : vector<1x64xf32>
    %190 = math.exp %189 : vector<1x64xf32>
    %cst_58 = arith.constant 1.000000e+00 : f32
    %191 = vector.broadcast %cst_58 : f32 to vector<1x64xf32>
    %192 = arith.addf %191, %190 : vector<1x64xf32>
    %193 = arith.divf %191, %192 : vector<1x64xf32>
    %194 = vector.extract_strided_slice %176 {offsets = [0, 128], sizes = [1, 64], strides = [1, 1]} : vector<1x192xf32> to vector<1x64xf32>
    %195 = vector.extract_strided_slice %177 {offsets = [0, 128], sizes = [1, 64], strides = [1, 1]} : vector<1x192xf32> to vector<1x64xf32>
    %196 = arith.addf %195, %1 : vector<1x64xf32>
    %197 = arith.mulf %185, %196 : vector<1x64xf32>
    %198 = arith.addf %194, %197 : vector<1x64xf32>
    %199 = math.tanh %198 : vector<1x64xf32>
    %cst_59 = arith.constant 1.000000e+00 : f32
    %200 = vector.broadcast %cst_59 : f32 to vector<1x64xf32>
    %201 = arith.subf %200, %193 : vector<1x64xf32>
    %202 = arith.mulf %201, %199 : vector<1x64xf32>
    %203 = arith.mulf %193, %171 : vector<1x64xf32>
    %204 = arith.addf %202, %203 : vector<1x64xf32>
    %205 = vector.extract_strided_slice %204 {offsets = [0, 0], sizes = [1, 32], strides = [1, 1]} : vector<1x64xf32> to vector<1x32xf32>
    %c5_60 = arith.constant 5 : index
    %c0_61 = arith.constant 0 : index
    %206 = vector.load %arg6[%c5_60, %c0_61] : memref<8x64xf32, #tpu.memory_space<vmem>>, vector<1x32xf32>
    tpu.vector_store %arg6[%c5_60, %c0_61], %205 {strides = array<i32>} : memref<8x64xf32, #tpu.memory_space<vmem>>, vector<1x32xf32>,
    %207 = vector.extract_strided_slice %204 {offsets = [0, 32], sizes = [1, 32], strides = [1, 1]} : vector<1x64xf32> to vector<1x32xf32>
    %c2_62 = arith.constant 2 : index
    %c32_63 = arith.constant 32 : index
    %208 = vector.load %arg6[%c2_62, %c32_63] : memref<8x64xf32, #tpu.memory_space<vmem>>, vector<1x32xf32>
    tpu.vector_store %arg6[%c2_62, %c32_63], %207 {strides = array<i32>} : memref<8x64xf32, #tpu.memory_space<vmem>>, vector<1x32xf32>,
    %c6_64 = arith.constant 6 : index
    %c0_65 = arith.constant 0 : index
    %209 = vector.load %arg5[%c6_64, %c0_65] : memref<8x192xf32, #tpu.memory_space<vmem>>, vector<1x192xf32>
    %cst_66 = arith.constant dense<0.000000e+00> : vector<1x192xf32>
    %210 = tpu.matmul %204, %9, %cst_66 {dimension_numbers = #tpu.dot_dimension_numbers<[1], [0], [0], [1], [0, 0, 1, 1], [], []>, precision = #tpu.contract_precision<fp32>} : vector<1x64xf32>, vector<64x192xf32>, vector<1x192xf32> -> vector<1x192xf32>
    %211 = vector.extract_strided_slice %209 {offsets = [0, 0], sizes = [1, 64], strides = [1, 1]} : vector<1x192xf32> to vector<1x64xf32>
    %212 = vector.extract_strided_slice %210 {offsets = [0, 0], sizes = [1, 64], strides = [1, 1]} : vector<1x192xf32> to vector<1x64xf32>
    %213 = arith.addf %211, %212 : vector<1x64xf32>
    %214 = arith.negf %213 : vector<1x64xf32>
    %215 = math.exp %214 : vector<1x64xf32>
    %cst_67 = arith.constant 1.000000e+00 : f32
    %216 = vector.broadcast %cst_67 : f32 to vector<1x64xf32>
    %217 = arith.addf %216, %215 : vector<1x64xf32>
    %218 = arith.divf %216, %217 : vector<1x64xf32>
    %219 = vector.extract_strided_slice %209 {offsets = [0, 64], sizes = [1, 64], strides = [1, 1]} : vector<1x192xf32> to vector<1x64xf32>
    %220 = vector.extract_strided_slice %210 {offsets = [0, 64], sizes = [1, 64], strides = [1, 1]} : vector<1x192xf32> to vector<1x64xf32>
    %221 = arith.addf %219, %220 : vector<1x64xf32>
    %222 = arith.negf %221 : vector<1x64xf32>
    %223 = math.exp %222 : vector<1x64xf32>
    %cst_68 = arith.constant 1.000000e+00 : f32
    %224 = vector.broadcast %cst_68 : f32 to vector<1x64xf32>
    %225 = arith.addf %224, %223 : vector<1x64xf32>
    %226 = arith.divf %224, %225 : vector<1x64xf32>
    %227 = vector.extract_strided_slice %209 {offsets = [0, 128], sizes = [1, 64], strides = [1, 1]} : vector<1x192xf32> to vector<1x64xf32>
    %228 = vector.extract_strided_slice %210 {offsets = [0, 128], sizes = [1, 64], strides = [1, 1]} : vector<1x192xf32> to vector<1x64xf32>
    %229 = arith.addf %228, %1 : vector<1x64xf32>
    %230 = arith.mulf %218, %229 : vector<1x64xf32>
    %231 = arith.addf %227, %230 : vector<1x64xf32>
    %232 = math.tanh %231 : vector<1x64xf32>
    %cst_69 = arith.constant 1.000000e+00 : f32
    %233 = vector.broadcast %cst_69 : f32 to vector<1x64xf32>
    %234 = arith.subf %233, %226 : vector<1x64xf32>
    %235 = arith.mulf %234, %232 : vector<1x64xf32>
    %236 = arith.mulf %226, %204 : vector<1x64xf32>
    %237 = arith.addf %235, %236 : vector<1x64xf32>
    %238 = vector.extract_strided_slice %237 {offsets = [0, 0], sizes = [1, 32], strides = [1, 1]} : vector<1x64xf32> to vector<1x32xf32>
    %c6_70 = arith.constant 6 : index
    %c0_71 = arith.constant 0 : index
    %239 = vector.load %arg6[%c6_70, %c0_71] : memref<8x64xf32, #tpu.memory_space<vmem>>, vector<1x32xf32>
    tpu.vector_store %arg6[%c6_70, %c0_71], %238 {strides = array<i32>} : memref<8x64xf32, #tpu.memory_space<vmem>>, vector<1x32xf32>,
    %240 = vector.extract_strided_slice %237 {offsets = [0, 32], sizes = [1, 32], strides = [1, 1]} : vector<1x64xf32> to vector<1x32xf32>
    %c1_72 = arith.constant 1 : index
    %c32_73 = arith.constant 32 : index
    %241 = vector.load %arg6[%c1_72, %c32_73] : memref<8x64xf32, #tpu.memory_space<vmem>>, vector<1x32xf32>
    tpu.vector_store %arg6[%c1_72, %c32_73], %240 {strides = array<i32>} : memref<8x64xf32, #tpu.memory_space<vmem>>, vector<1x32xf32>,
    %c7_74 = arith.constant 7 : index
    %c0_75 = arith.constant 0 : index
    %242 = vector.load %arg5[%c7_74, %c0_75] : memref<8x192xf32, #tpu.memory_space<vmem>>, vector<1x192xf32>
    %cst_76 = arith.constant dense<0.000000e+00> : vector<1x192xf32>
    %243 = tpu.matmul %237, %9, %cst_76 {dimension_numbers = #tpu.dot_dimension_numbers<[1], [0], [0], [1], [0, 0, 1, 1], [], []>, precision = #tpu.contract_precision<fp32>} : vector<1x64xf32>, vector<64x192xf32>, vector<1x192xf32> -> vector<1x192xf32>
    %244 = vector.extract_strided_slice %242 {offsets = [0, 0], sizes = [1, 64], strides = [1, 1]} : vector<1x192xf32> to vector<1x64xf32>
    %245 = vector.extract_strided_slice %243 {offsets = [0, 0], sizes = [1, 64], strides = [1, 1]} : vector<1x192xf32> to vector<1x64xf32>
    %246 = arith.addf %244, %245 : vector<1x64xf32>
    %247 = arith.negf %246 : vector<1x64xf32>
    %248 = math.exp %247 : vector<1x64xf32>
    %cst_77 = arith.constant 1.000000e+00 : f32
    %249 = vector.broadcast %cst_77 : f32 to vector<1x64xf32>
    %250 = arith.addf %249, %248 : vector<1x64xf32>
    %251 = arith.divf %249, %250 : vector<1x64xf32>
    %252 = vector.extract_strided_slice %242 {offsets = [0, 64], sizes = [1, 64], strides = [1, 1]} : vector<1x192xf32> to vector<1x64xf32>
    %253 = vector.extract_strided_slice %243 {offsets = [0, 64], sizes = [1, 64], strides = [1, 1]} : vector<1x192xf32> to vector<1x64xf32>
    %254 = arith.addf %252, %253 : vector<1x64xf32>
    %255 = arith.negf %254 : vector<1x64xf32>
    %256 = math.exp %255 : vector<1x64xf32>
    %cst_78 = arith.constant 1.000000e+00 : f32
    %257 = vector.broadcast %cst_78 : f32 to vector<1x64xf32>
    %258 = arith.addf %257, %256 : vector<1x64xf32>
    %259 = arith.divf %257, %258 : vector<1x64xf32>
    %260 = vector.extract_strided_slice %242 {offsets = [0, 128], sizes = [1, 64], strides = [1, 1]} : vector<1x192xf32> to vector<1x64xf32>
    %261 = vector.extract_strided_slice %243 {offsets = [0, 128], sizes = [1, 64], strides = [1, 1]} : vector<1x192xf32> to vector<1x64xf32>
    %262 = arith.addf %261, %1 : vector<1x64xf32>
    %263 = arith.mulf %251, %262 : vector<1x64xf32>
    %264 = arith.addf %260, %263 : vector<1x64xf32>
    %265 = math.tanh %264 : vector<1x64xf32>
    %cst_79 = arith.constant 1.000000e+00 : f32
    %266 = vector.broadcast %cst_79 : f32 to vector<1x64xf32>
    %267 = arith.subf %266, %259 : vector<1x64xf32>
    %268 = arith.mulf %267, %265 : vector<1x64xf32>
    %269 = arith.mulf %259, %237 : vector<1x64xf32>
    %270 = arith.addf %268, %269 : vector<1x64xf32>
    %271 = vector.extract_strided_slice %270 {offsets = [0, 0], sizes = [1, 32], strides = [1, 1]} : vector<1x64xf32> to vector<1x32xf32>
    %c7_80 = arith.constant 7 : index
    %c0_81 = arith.constant 0 : index
    %272 = vector.load %arg6[%c7_80, %c0_81] : memref<8x64xf32, #tpu.memory_space<vmem>>, vector<1x32xf32>
    tpu.vector_store %arg6[%c7_80, %c0_81], %271 {strides = array<i32>} : memref<8x64xf32, #tpu.memory_space<vmem>>, vector<1x32xf32>,
    %273 = vector.extract_strided_slice %270 {offsets = [0, 32], sizes = [1, 32], strides = [1, 1]} : vector<1x64xf32> to vector<1x32xf32>
    %c0_82 = arith.constant 0 : index
    %c32_83 = arith.constant 32 : index
    %274 = vector.load %arg6[%c0_82, %c32_83] : memref<8x64xf32, #tpu.memory_space<vmem>>, vector<1x32xf32>
    tpu.vector_store %arg6[%c0_82, %c32_83], %273 {strides = array<i32>} : memref<8x64xf32, #tpu.memory_space<vmem>>, vector<1x32xf32>,
    %c0_84 = arith.constant 0 : index
    %c0_85 = arith.constant 0 : index
    %275 = vector.load %arg6[%c0_84, %c0_85] : memref<8x64xf32, #tpu.memory_space<vmem>>, vector<8x64xf32>
    %276 = arith.truncf %275 : vector<8x64xf32> to vector<8x64xbf16>
    %c32_86 = arith.constant 32 : index
    %c0_87 = arith.constant 0 : index
    %277 = vector.load %arg1[%c32_86, %c0_87] : memref<96x192xbf16, #tpu.memory_space<vmem>>, vector<64x8xbf16>
    %cst_88 = arith.constant dense<0.000000e+00> : vector<8x8xf32>
    %278 = tpu.matmul %276, %277, %cst_88 {dimension_numbers = #tpu.dot_dimension_numbers<[1], [0], [0], [1], [0, 0, 1, 1], [], []>} : vector<8x64xbf16>, vector<64x8xbf16>, vector<8x8xf32> -> vector<8x8xf32>
    %279 = vector.broadcast %2 : vector<1x8xf32> to vector<8x8xf32>
    %280 = arith.addf %278, %279 : vector<8x8xf32>
    %c0_89 = arith.constant 0 : index
    %c0_90 = arith.constant 0 : index
    %281 = vector.load %arg4[%c0_89, %c0_90] : memref<8x8xf32, #tpu.memory_space<vmem>>, vector<8x8xf32>
    tpu.vector_store %arg4[%c0_89, %c0_90], %280 {strides = array<i32>} : memref<8x8xf32, #tpu.memory_space<vmem>>, vector<8x8xf32>,
    return
  }
}

</mosaic_0001>

<llo_original>
// kernel: tpu_custom_call.1
$region0: #{tpu_custom_call.1}
  #allocation0 [shape = 'u32[]', space=smem, size = 0x4, offset = 0x4, fixed_abs, tag = 'smem constant byte address 0x4 - core index']
  #allocation1 [shape = 'u32[144,128]{1,0:T(1,128)}', space=vmem, size = 0x12000, scoped, tag = 'internal scratch']
  #allocation2 [shape = 'f32[8,192]{1,0:T(8,128)}', space=vmem, size = 0x2000, scoped, tag = 'scratch operand']
  #allocation3 [shape = 'f32[8,64]{1,0:T(8,128)}', space=vmem, size = 0x1000, scoped, tag = 'scratch operand']
  %s0 = inlined_call_operand.hbm [shape: bf16[8,32], index: 0, kind: input, shape index: {}]
  %s1 = inlined_call_operand.hbm [shape: bf16[96,192], index: 1, kind: input, shape index: {}]
  %s2 = inlined_call_operand.hbm [shape: f32[64,192], index: 2, kind: input, shape index: {}]
  %s3 = inlined_call_operand.vmem [shape: f32[1,264], index: 3, kind: input, shape index: {}]
  %s4 = inlined_call_operand.hbm [shape: f32[8,8], index: 4, kind: output, shape index: {}]
  %s5 = sld [smem:[#allocation0]]
  $region38: #{tpu_custom_call.1} parent=0
    _
  %s7 = ssub.s32 1, %s5
  %s8 = scalar_select 0, %s7, %s5
  $region1: #{tpu_custom_call.1} parent=0
    #allocation4 [shape = 'u8[2048]{0}', space=vmem, size = 0x800, scoped, tag = 'input window, operand 0, single buffered']
    #allocation5 [shape = 's32[1]{0}', space=sflag, size = 0x4, scoped, tag = 'scoped memory for tpu_custom_call.1']
    #allocation6 [shape = 's32[1]{0}', space=sflag, size = 0x4, scoped, tag = 'scoped memory for tpu_custom_call.1']
    #allocation7 [shape = 'u8[49152]{0}', space=vmem, size = 0xc000, scoped, tag = 'input window, operand 1, single buffered']
    #allocation8 [shape = 's32[1]{0}', space=sflag, size = 0x4, scoped, tag = 'scoped memory for tpu_custom_call.1']
    #allocation9 [shape = 'u8[65536]{0}', space=vmem, size = 0x10000, scoped, tag = 'input window, operand 2, single buffered']
    #allocation10 [shape = 'u8[4096]{0}', space=vmem, size = 0x1000, scoped, tag = 'output window, operand 0, single buffered']
    %9 = vsyncpa [#allocation5], 0
    %10 = vsyncpa [#allocation8], 0
    %11 = vsyncpa [#allocation6], 0
    // Predicated region
    $region2: #{tpu_custom_call.1} parent=1 // pred_check
      _
    $region3: #{tpu_custom_call.1} parent=1 // pred_check_branch
      %13 = sbr.rel (0) target = $region5
    $region4: #{tpu_custom_call.1} parent=1 // pred_region
      %s15 = ssub.s32 64, 64
      %16 = vsyncadd [#allocation5], %s15
      %s18 = sshll.u32 [#allocation4], 4
      %s19 = int_to_ptr.vmem [resolvable:$true] %s18
      %21 = dma.hbm_to_vmem [thread:$0]  %s0, 64, %s19, [#allocation5]
    $region5: #{tpu_custom_call.1} parent=1 // pred_fallthru
      _
    // Predicated region
    $region6: #{tpu_custom_call.1} parent=1 // pred_check
      _
    $region7: #{tpu_custom_call.1} parent=1 // pred_check_branch
      %23 = sbr.rel (0) target = $region9
    $region8: #{tpu_custom_call.1} parent=1 // pred_region
      %s25 = ssub.s32 1536, 1536
      %26 = vsyncadd [#allocation8], %s25
      %s27 = sshll.u32 [#allocation7], 4
      %s28 = int_to_ptr.vmem [resolvable:$true] %s27
      %33 = dma.hbm_to_vmem [thread:$0]  %s1, 1536, %s28, [#allocation8], 128, 128, 8
    $region9: #{tpu_custom_call.1} parent=1 // pred_fallthru
      _
    // Predicated region
    $region10: #{tpu_custom_call.1} parent=1 // pred_check
      _
    $region11: #{tpu_custom_call.1} parent=1 // pred_check_branch
      %35 = sbr.rel (0) target = $region13
    $region12: #{tpu_custom_call.1} parent=1 // pred_region
      %s37 = ssub.s32 2048, 2048
      %38 = vsyncadd [#allocation8], %s37
      %s39 = sshll.u32 [#allocation9], 4
      %s40 = int_to_ptr.vmem [resolvable:$true] %s39
      %45 = dma.hbm_to_vmem [thread:$0]  %s2, 2048, %s40, [#allocation8], 256, 256, 16
    $region13: #{tpu_custom_call.1} parent=1 // pred_fallthru
      _
    // Predicated region
    $region14: #{tpu_custom_call.1} parent=1 // pred_check
      _
    $region15: #{tpu_custom_call.1} parent=1 // pred_check_branch
      %47 = sbr.rel (0) target = $region17
    $region16: #{tpu_custom_call.1} parent=1 // pred_region
      _
    $region17: #{tpu_custom_call.1} parent=1 // pred_fallthru
      _
    // Predicated region
    $region18: #{tpu_custom_call.1} parent=1 // pred_check
      _
    $region19: #{tpu_custom_call.1} parent=1 // pred_check_branch
      %49 = sbr.rel (0) target = $region21
    $region20: #{tpu_custom_call.1} parent=1 // pred_region
      %50 = dma.done [#allocation5], 64
    $region21: #{tpu_custom_call.1} parent=1 // pred_fallthru
      _
    // Predicated region
    $region22: #{tpu_custom_call.1} parent=1 // pred_check
      _
    $region23: #{tpu_custom_call.1} parent=1 // pred_check_branch
      %52 = sbr.rel (0) target = $region25
    $region24: #{tpu_custom_call.1} parent=1 // pred_region
      %53 = dma.done [#allocation8], 1536
    $region25: #{tpu_custom_call.1} parent=1 // pred_fallthru
      _
    // Predicated region
    $region26: #{tpu_custom_call.1} parent=1 // pred_check
      _
    $region27: #{tpu_custom_call.1} parent=1 // pred_check_branch
      %55 = sbr.rel (0) target = $region29
    $region28: #{tpu_custom_call.1} parent=1 // pred_region
      %56 = dma.done [#allocation8], 2048
    $region29: #{tpu_custom_call.1} parent=1 // pred_fallthru
      _
    %v58 = vld [vmem:[%s3] sm:$0x3]
    %v59 = vld [vmem:[%s3 + $0x1] sm:$0x1]
    %v60 = vld [vmem:[%s3 + $0x2] sm:$0x1]
    %v61 = vld [vmem:[#allocation4] sm:$0xf]
    %v62 = vld [vmem:[#allocation7] sm:$0xff]
    %v63 = vld [vmem:[#allocation7 + $0x8] sm:$0xff]
    %v64 = vld [vmem:[#allocation7 + $0x10] sm:$0xff]
    %v65 = vld [vmem:[#allocation7 + $0x18] sm:$0xff]
    %v67 = vlaneseq
    %v68 = vshrl.u32 %v67, 7
    %v69 = vsub.s32 0, %v68
    %v70 = vrot.slane %v58, %v69
    %v71 = vlaneseq
    %v72 = vshrl.u32 %v71, 7
    %v73 = vsub.s32 1, %v72
    %v74 = vrot.slane %v58, %v73
    %v81 = vunpack.c.l.b16 %v62
    %v82 = vunpack.c.h.b16 %v62
    %v83 = vunpack.c.l.b16 %v63
    %v84 = vunpack.c.h.b16 %v63
    %v85 = vunpack.c.l.b16 %v64
    %v86 = vunpack.c.h.b16 %v64
    %v87 = vunpack.c.l.b16 %v65
    %v88 = vunpack.c.h.b16 %v65
    %v89 = vpack.c.b16 %v83, %v81
    %v90 = vpack.c.b16 %v84, %v82
    %v91 = vpack.c.b16 %v87, %v85
    %v92 = vpack.c.b16 %v88, %v86
    %vm97 = vcmask 261120
    %v99 = vsel %vm97, %v61, 0
    %101 = vmatprep.subr.bf16.mxu0 %v90
    %102 = vmatpush1.bf16.msra.mxu0 %v89
    %103 = vmatprep.subr.bf16.mxu0 %v92
    %104 = vmatpush1.bf16.msra.mxu0 %v91
    %105 = vmatprep.subr.bf16.mxu0 0
    %106 = vmatpush1.bf16.msra.mxu0 0
    %107 = vmatprep.subr.bf16.mxu0 0
    %108 = vmatpush1.bf16.msra.mxu0 0
    %109 = vmatprep.subr.bf16.mxu0 0
    %110 = vmatpush1.bf16.msra.mxu0 0
    %111 = vmatprep.subr.bf16.mxu0 0
    %112 = vmatpush1.bf16.msra.mxu0 0
    %113 = vmatprep.subr.bf16.mxu0 0
    %114 = vmatpush1.bf16.msra.mxu0 0
    %115 = vmatprep.subr.bf16.mxu0 0
    %116 = vmatpush1.bf16.msra.mxu0 0
    %117 = vmatprep.subr.bf16.mxu0 0
    %118 = vmatpush1.bf16.msra.mxu0 0
    %119 = vmatprep.subr.bf16.mxu0 0
    %120 = vmatpush1.bf16.msra.mxu0 0
    %121 = vmatprep.subr.bf16.mxu0 0
    %122 = vmatpush1.bf16.msra.mxu0 0
    %123 = vmatprep.subr.bf16.mxu0 0
    %124 = vmatpush1.bf16.msra.mxu0 0
    %125 = vmatprep.subr.bf16.mxu0 0
    %126 = vmatpush1.bf16.msra.mxu0 0
    %127 = vmatprep.subr.bf16.mxu0 0
    %128 = vmatpush1.bf16.msra.mxu0 0
    %129 = vmatprep.subr.bf16.mxu0 0
    %130 = vmatpush1.bf16.msra.mxu0 0
    %131 = vmatprep.subr.bf16.mxu0 0
    %132 = vmatpush1.bf16.msra.mxu0 0
    %133 = vmatprep.mubr.bf16.mxu0 0
    %134 = vmatmul.mubr.bf16.gmra.mrb[0].mxu0 %v99
    %v135 = vpop.f32.mrb[0].mxu0
    %v136 = vadd.f32 %v70, %v135
    %v137 = vpop.f32.mrb[0].mxu0
    %v138 = vadd.f32 %v74, %v137
    %v139 = vpop.f32.mrb[0].mxu0
    %v140 = vpop.f32.mrb[0].mxu0
    %141 = vdwg.mxu0
    %142 = vst [vmem:[#allocation2] sm:$0xff] %v136
    %vm143 = vcmask 523264
    %144 = vst.msk [vmem:[#allocation2 + $0x8] sm:$0xff] %vm143, %v138
    %v145 = vld [vmem:[#allocation9] sm:$0xff]
    %v146 = vld [vmem:[#allocation9 + $0x8] sm:$0xff]
    %v147 = vld [vmem:[#allocation9 + $0x10] sm:$0xff]
    %v148 = vld [vmem:[#allocation9 + $0x18] sm:$0xff]
    %v149 = vld [vmem:[#allocation9 + $0x20] sm:$0xff]
    %v150 = vld [vmem:[#allocation9 + $0x28] sm:$0xff]
    %v151 = vld [vmem:[#allocation9 + $0x30] sm:$0xff]
    %v152 = vld [vmem:[#allocation9 + $0x38] sm:$0xff]
    %v153 = vld [vmem:[#allocation9 + $0x40] sm:$0xff]
    %v154 = vld [vmem:[#allocation9 + $0x48] sm:$0xff]
    %v155 = vld [vmem:[#allocation9 + $0x50] sm:$0xff]
    %v156 = vld [vmem:[#allocation9 + $0x58] sm:$0xff]
    %v157 = vld [vmem:[#allocation9 + $0x60] sm:$0xff]
    %v158 = vld [vmem:[#allocation9 + $0x68] sm:$0xff]
    %v159 = vld [vmem:[#allocation9 + $0x70] sm:$0xff]
    %v160 = vld [vmem:[#allocation9 + $0x78] sm:$0xff]
    %v161 = vld [vmem:[#allocation2] ss:$8 sm:$0x3]
    %v163 = vsel %vm143, 0.0, 0
    %v165 = vand.u32 %v146, 4294901760
    %166 = vmatprep.subr.mxu0 %v165
    %v167 = vand.u32 %v145, 4294901760
    %168 = vmatpush1.msra.mxu0 %v167
    %v169 = vand.u32 %v148, 4294901760
    %170 = vmatprep.subr.mxu0 %v169
    %v171 = vand.u32 %v147, 4294901760
    %172 = vmatpush1.msra.mxu0 %v171
    %v173 = vand.u32 %v150, 4294901760
    %174 = vmatprep.subr.mxu0 %v173
    %v175 = vand.u32 %v149, 4294901760
    %176 = vmatpush1.msra.mxu0 %v175
    %v177 = vand.u32 %v152, 4294901760
    %178 = vmatprep.subr.mxu0 %v177
    %v179 = vand.u32 %v151, 4294901760
    %180 = vmatpush1.msra.mxu0 %v179
    %v181 = vand.u32 %v154, 4294901760
    %182 = vmatprep.subr.mxu0 %v181
    %v183 = vand.u32 %v153, 4294901760
    %184 = vmatpush1.msra.mxu0 %v183
    %v185 = vand.u32 %v156, 4294901760
    %186 = vmatprep.subr.mxu0 %v185
    %v187 = vand.u32 %v155, 4294901760
    %188 = vmatpush1.msra.mxu0 %v187
    %v189 = vand.u32 %v158, 4294901760
    %190 = vmatprep.subr.mxu0 %v189
    %v191 = vand.u32 %v157, 4294901760
    %192 = vmatpush1.msra.mxu0 %v191
    %v193 = vand.u32 %v160, 4294901760
    %194 = vmatprep.subr.mxu0 %v193
    %v195 = vand.u32 %v159, 4294901760
    %196 = vmatpush1.msra.mxu0 %v195
    %197 = vmatprep.subr.mxu0 0.0
    %198 = vmatpush1.msra.mxu0 0.0
    %199 = vmatprep.subr.mxu0 0.0
    %200 = vmatpush1.msra.mxu0 0.0
    %201 = vmatprep.subr.mxu0 0.0
    %202 = vmatpush1.msra.mxu0 0.0
    %203 = vmatprep.subr.mxu0 0.0
    %204 = vmatpush1.msra.mxu0 0.0
    %205 = vmatprep.subr.mxu0 0.0
    %206 = vmatpush1.msra.mxu0 0.0
    %207 = vmatprep.subr.mxu0 0.0
    %208 = vmatpush1.msra.mxu0 0.0
    %209 = vmatprep.subr.mxu0 0.0
    %210 = vmatpush1.msra.mxu0 0.0
    %211 = vmatprep.subr.mxu0 0.0
    %212 = vmatpush1.msra.mxu0 0.0
    %213 = vmatprep.subr.mxu0 0.0
    %214 = vmatpush1.msra.mxu0 0.0
    %215 = vmatprep.subr.mxu0 0.0
    %216 = vmatpush1.msra.mxu0 0.0
    %217 = vmatprep.subr.mxu0 0.0
    %218 = vmatpush1.msra.mxu0 0.0
    %219 = vmatprep.subr.mxu0 0.0
    %220 = vmatpush1.msra.mxu0 0.0
    %221 = vmatprep.subr.mxu0 0.0
    %222 = vmatpush1.msra.mxu0 0.0
    %223 = vmatprep.subr.mxu0 0.0
    %224 = vmatpush1.msra.mxu0 0.0
    %225 = vmatprep.subr.mxu0 0.0
    %226 = vmatpush1.msra.mxu0 0.0
    %227 = vmatprep.subr.mxu0 0.0
    %228 = vmatpush1.msra.mxu0 0.0
    %229 = vmatprep.subr.mxu0 0.0
    %230 = vmatpush1.msra.mxu0 0.0
    %231 = vmatprep.subr.mxu0 0.0
    %232 = vmatpush1.msra.mxu0 0.0
    %233 = vmatprep.subr.mxu0 0.0
    %234 = vmatpush1.msra.mxu0 0.0
    %235 = vmatprep.subr.mxu0 0.0
    %236 = vmatpush1.msra.mxu0 0.0
    %237 = vmatprep.subr.mxu0 0.0
    %238 = vmatpush1.msra.mxu0 0.0
    %239 = vmatprep.subr.mxu0 0.0
    %240 = vmatpush1.msra.mxu0 0.0
    %241 = vmatprep.subr.mxu0 0.0
    %242 = vmatpush1.msra.mxu0 0.0
    %243 = vmatprep.subr.mxu0 0.0
    %244 = vmatpush1.msra.mxu0 0.0
    %245 = vmatprep.mubr.f32.mxu0 0.0
    %v246 = vand.u32 %v163, 4294901760
    %v247 = vsub.f32 %v163, %v246
    %v248 = vand.u32 %v247, 4294901760
    %v249 = vsub.f32 %v247, %v248
    %v250 = vand.u32 %v249, 4294901760
    %251 = vmatmul.mubr.f32.gmra.mrb[0].mxu0 %v250
    %v252 = vpop.f32.mrb[0].mxu0
    %v253 = vadd.f32 0.0, %v252
    %v254 = vpop.f32.mrb[0].mxu0
    %v255 = vadd.f32 0.0, %v254
    %256 = vdwg.mxu0
    %v257 = vand.u32 %v146, 4294901760
    %v258 = vsub.f32 %v146, %v257
    %v259 = vand.u32 %v258, 4294901760
    %v260 = vsub.f32 %v258, %v259
    %v261 = vand.u32 %v260, 4294901760
    %262 = vmatprep.subr.mxu0 %v261
    %v263 = vand.u32 %v145, 4294901760
    %v264 = vsub.f32 %v145, %v263
    %v265 = vand.u32 %v264, 4294901760
    %v266 = vsub.f32 %v264, %v265
    %v267 = vand.u32 %v266, 4294901760
    %268 = vmatpush1.msra.mxu0 %v267
    %v269 = vand.u32 %v148, 4294901760
    %v270 = vsub.f32 %v148, %v269
    %v271 = vand.u32 %v270, 4294901760
    %v272 = vsub.f32 %v270, %v271
    %v273 = vand.u32 %v272, 4294901760
    %274 = vmatprep.subr.mxu0 %v273
    %v275 = vand.u32 %v147, 4294901760
    %v276 = vsub.f32 %v147, %v275
    %v277 = vand.u32 %v276, 4294901760
    %v278 = vsub.f32 %v276, %v277
    %v279 = vand.u32 %v278, 4294901760
    %280 = vmatpush1.msra.mxu0 %v279
    %v281 = vand.u32 %v150, 4294901760
    %v282 = vsub.f32 %v150, %v281
    %v283 = vand.u32 %v282, 4294901760
    %v284 = vsub.f32 %v282, %v283
    %v285 = vand.u32 %v284, 4294901760
    %286 = vmatprep.subr.mxu0 %v285
    %v287 = vand.u32 %v149, 4294901760
    %v288 = vsub.f32 %v149, %v287
    %v289 = vand.u32 %v288, 4294901760
    %v290 = vsub.f32 %v288, %v289
    %v291 = vand.u32 %v290, 4294901760
    %292 = vmatpush1.msra.mxu0 %v291
    %v293 = vand.u32 %v152, 4294901760
    %v294 = vsub.f32 %v152, %v293
    %v295 = vand.u32 %v294, 4294901760
    %v296 = vsub.f32 %v294, %v295
    %v297 = vand.u32 %v296, 4294901760
    %298 = vmatprep.subr.mxu0 %v297
    %v299 = vand.u32 %v151, 4294901760
    %v300 = vsub.f32 %v151, %v299
    %v301 = vand.u32 %v300, 4294901760
    %v302 = vsub.f32 %v300, %v301
    %v303 = vand.u32 %v302, 4294901760
    %304 = vmatpush1.msra.mxu0 %v303
    %v305 = vand.u32 %v154, 4294901760
    %v306 = vsub.f32 %v154, %v305
    %v307 = vand.u32 %v306, 4294901760
    %v308 = vsub.f32 %v306, %v307
    %v309 = vand.u32 %v308, 4294901760
    %310 = vmatprep.subr.mxu0 %v309
    %v311 = vand.u32 %v153, 4294901760
    %v312 = vsub.f32 %v153, %v311
    %v313 = vand.u32 %v312, 4294901760
    %v314 = vsub.f32 %v312, %v313
    %v315 = vand.u32 %v314, 4294901760
    %316 = vmatpush1.msra.mxu0 %v315
    %v317 = vand.u32 %v156, 4294901760
    %v318 = vsub.f32 %v156, %v317
    %v319 = vand.u32 %v318, 4294901760
    %v320 = vsub.f32 %v318, %v319
    %v321 = vand.u32 %v320, 4294901760
    %322 = vmatprep.subr.mxu0 %v321
    %v323 = vand.u32 %v155, 4294901760
    %v324 = vsub.f32 %v155, %v323
    %v325 = vand.u32 %v324, 4294901760
    %v326 = vsub.f32 %v324, %v325
    %v327 = vand.u32 %v326, 4294901760
    %328 = vmatpush1.msra.mxu0 %v327
    %v329 = vand.u32 %v158, 4294901760
    %v330 = vsub.f32 %v158, %v329
    %v331 = vand.u32 %v330, 4294901760
    %v332 = vsub.f32 %v330, %v331
    %v333 = vand.u32 %v332, 4294901760
    %334 = vmatprep.subr.mxu0 %v333
    %v335 = vand.u32 %v157, 4294901760
    %v336 = vsub.f32 %v157, %v335
    %v337 = vand.u32 %v336, 4294901760
    %v338 = vsub.f32 %v336, %v337
    %v339 = vand.u32 %v338, 4294901760
    %340 = vmatpush1.msra.mxu0 %v339
    %v341 = vand.u32 %v160, 4294901760
    %v342 = vsub.f32 %v160, %v341
    %v343 = vand.u32 %v342, 4294901760
    %v344 = vsub.f32 %v342, %v343
    %v345 = vand.u32 %v344, 4294901760
    %346 = vmatprep.subr.mxu0 %v345
    %v347 = vand.u32 %v159, 4294901760
    %v348 = vsub.f32 %v159, %v347
    %v349 = vand.u32 %v348, 4294901760
    %v350 = vsub.f32 %v348, %v349
    %v351 = vand.u32 %v350, 4294901760
    %352 = vmatpush1.msra.mxu0 %v351
    %353 = vmatprep.subr.mxu0 0.0
    %354 = vmatpush1.msra.mxu0 0.0
    %355 = vmatprep.subr.mxu0 0.0
    %356 = vmatpush1.msra.mxu0 0.0
    %357 = vmatprep.subr.mxu0 0.0
    %358 = vmatpush1.msra.mxu0 0.0
    %359 = vmatprep.subr.mxu0 0.0
    %360 = vmatpush1.msra.mxu0 0.0
    %361 = vmatprep.subr.mxu0 0.0
    %362 = vmatpush1.msra.mxu0 0.0
    %363 = vmatprep.subr.mxu0 0.0
    %364 = vmatpush1.msra.mxu0 0.0
    %365 = vmatprep.subr.mxu0 0.0
    %366 = vmatpush1.msra.mxu0 0.0
    %367 = vmatprep.subr.mxu0 0.0
    %368 = vmatpush1.msra.mxu0 0.0
    %369 = vmatprep.subr.mxu0 0.0
    %370 = vmatpush1.msra.mxu0 0.0
    %371 = vmatprep.subr.mxu0 0.0
    %372 = vmatpush1.msra.mxu0 0.0
    %373 = vmatprep.subr.mxu0 0.0
    %374 = vmatpush1.msra.mxu0 0.0
    %375 = vmatprep.subr.mxu0 0.0
    %376 = vmatpush1.msra.mxu0 0.0
    %377 = vmatprep.subr.mxu0 0.0
    %378 = vmatpush1.msra.mxu0 0.0
    %379 = vmatprep.subr.mxu0 0.0
    %380 = vmatpush1.msra.mxu0 0.0
    %381 = vmatprep.subr.mxu0 0.0
    %382 = vmatpush1.msra.mxu0 0.0
    %383 = vmatprep.subr.mxu0 0.0
    %384 = vmatpush1.msra.mxu0 0.0
    %385 = vmatprep.subr.mxu0 0.0
    %386 = vmatpush1.msra.mxu0 0.0
    %387 = vmatprep.subr.mxu0 0.0
    %388 = vmatpush1.msra.mxu0 0.0
    %389 = vmatprep.subr.mxu0 0.0
    %390 = vmatpush1.msra.mxu0 0.0
    %391 = vmatprep.subr.mxu0 0.0
    %392 = vmatpush1.msra.mxu0 0.0
    %393 = vmatprep.subr.mxu0 0.0
    %394 = vmatpush1.msra.mxu0 0.0
    %395 = vmatprep.subr.mxu0 0.0
    %396 = vmatpush1.msra.mxu0 0.0
    %397 = vmatprep.subr.mxu0 0.0
    %398 = vmatpush1.msra.mxu0 0.0
    %399 = vmatprep.subr.mxu0 0.0
    %400 = vmatpush1.msra.mxu0 0.0
    %401 = vmatprep.mubr.f32.mxu0 0.0
    %v402 = vand.u32 %v163, 4294901760
    %403 = vmatmul.mubr.f32.gmra.mrb[0].mxu0 %v402
    %v404 = vpop.f32.mrb[0].mxu0
    %v405 = vadd.f32 %v253, %v404
    %v406 = vpop.f32.mrb[0].mxu0
    %v407 = vadd.f32 %v255, %v406
    %408 = vdwg.mxu0
    %v409 = vand.u32 %v146, 4294901760
    %v410 = vsub.f32 %v146, %v409
    %411 = vmatprep.subr.mxu0 %v410
    %v412 = vand.u32 %v145, 4294901760
    %v413 = vsub.f32 %v145, %v412
    %414 = vmatpush1.msra.mxu0 %v413
    %v415 = vand.u32 %v148, 4294901760
    %v416 = vsub.f32 %v148, %v415
    %417 = vmatprep.subr.mxu0 %v416
    %v418 = vand.u32 %v147, 4294901760
    %v419 = vsub.f32 %v147, %v418
    %420 = vmatpush1.msra.mxu0 %v419
    %v421 = vand.u32 %v150, 4294901760
    %v422 = vsub.f32 %v150, %v421
    %423 = vmatprep.subr.mxu0 %v422
    %v424 = vand.u32 %v149, 4294901760
    %v425 = vsub.f32 %v149, %v424
    %426 = vmatpush1.msra.mxu0 %v425
    %v427 = vand.u32 %v152, 4294901760
    %v428 = vsub.f32 %v152, %v427
    %429 = vmatprep.subr.mxu0 %v428
    %v430 = vand.u32 %v151, 4294901760
    %v431 = vsub.f32 %v151, %v430
    %432 = vmatpush1.msra.mxu0 %v431
    %v433 = vand.u32 %v154, 4294901760
    %v434 = vsub.f32 %v154, %v433
    %435 = vmatprep.subr.mxu0 %v434
    %v436 = vand.u32 %v153, 4294901760
    %v437 = vsub.f32 %v153, %v436
    %438 = vmatpush1.msra.mxu0 %v437
    %v439 = vand.u32 %v156, 4294901760
    %v440 = vsub.f32 %v156, %v439
    %441 = vmatprep.subr.mxu0 %v440
    %v442 = vand.u32 %v155, 4294901760
    %v443 = vsub.f32 %v155, %v442
    %444 = vmatpush1.msra.mxu0 %v443
    %v445 = vand.u32 %v158, 4294901760
    %v446 = vsub.f32 %v158, %v445
    %447 = vmatprep.subr.mxu0 %v446
    %v448 = vand.u32 %v157, 4294901760
    %v449 = vsub.f32 %v157, %v448
    %450 = vmatpush1.msra.mxu0 %v449
    %v451 = vand.u32 %v160, 4294901760
    %v452 = vsub.f32 %v160, %v451
    %453 = vmatprep.subr.mxu0 %v452
    %v454 = vand.u32 %v159, 4294901760
    %v455 = vsub.f32 %v159, %v454
    %456 = vmatpush1.msra.mxu0 %v455
    %457 = vmatprep.subr.mxu0 0.0
    %458 = vmatpush1.msra.mxu0 0.0
    %459 = vmatprep.subr.mxu0 0.0
    %460 = vmatpush1.msra.mxu0 0.0
    %461 = vmatprep.subr.mxu0 0.0
    %462 = vmatpush1.msra.mxu0 0.0
    %463 = vmatprep.subr.mxu0 0.0
    %464 = vmatpush1.msra.mxu0 0.0
    %465 = vmatprep.subr.mxu0 0.0
    %466 = vmatpush1.msra.mxu0 0.0
    %467 = vmatprep.subr.mxu0 0.0
    %468 = vmatpush1.msra.mxu0 0.0
    %469 = vmatprep.subr.mxu0 0.0
    %470 = vmatpush1.msra.mxu0 0.0
    %471 = vmatprep.subr.mxu0 0.0
    %472 = vmatpush1.msra.mxu0 0.0
    %473 = vmatprep.subr.mxu0 0.0
    %474 = vmatpush1.msra.mxu0 0.0
    %475 = vmatprep.subr.mxu0 0.0
    %476 = vmatpush1.msra.mxu0 0.0
    %477 = vmatprep.subr.mxu0 0.0
    %478 = vmatpush1.msra.mxu0 0.0
    %479 = vmatprep.subr.mxu0 0.0
    %480 = vmatpush1.msra.mxu0 0.0
    %481 = vmatprep.subr.mxu0 0.0
    %482 = vmatpush1.msra.mxu0 0.0
    %483 = vmatprep.subr.mxu0 0.0
    %484 = vmatpush1.msra.mxu0 0.0
    %485 = vmatprep.subr.mxu0 0.0
    %486 = vmatpush1.msra.mxu0 0.0
    %487 = vmatprep.subr.mxu0 0.0
    %488 = vmatpush1.msra.mxu0 0.0
    %489 = vmatprep.subr.mxu0 0.0
    %490 = vmatpush1.msra.mxu0 0.0
    %491 = vmatprep.subr.mxu0 0.0
    %492 = vmatpush1.msra.mxu0 0.0
    %493 = vmatprep.subr.mxu0 0.0
    %494 = vmatpush1.msra.mxu0 0.0
    %495 = vmatprep.subr.mxu0 0.0
    %496 = vmatpush1.msra.mxu0 0.0
    %497 = vmatprep.subr.mxu0 0.0
    %498 = vmatpush1.msra.mxu0 0.0
    %499 = vmatprep.subr.mxu0 0.0
    %500 = vmatpush1.msra.mxu0 0.0
    %501 = vmatprep.subr.mxu0 0.0
    %502 = vmatpush1.msra.mxu0 0.0
    %503 = vmatprep.subr.mxu0 0.0
    %504 = vmatpush1.msra.mxu0 0.0
    %505 = vmatprep.mubr.f32.mxu0 0.0
    %v506 = vand.u32 %v163, 4294901760
    %v507 = vsub.f32 %v163, %v506
    %508 = vmatmul.mubr.f32.gmra.mrb[0].mxu0 %v507
    %v509 = vpop.f32.mrb[0].mxu0
    %v510 = vadd.f32 %v405, %v509
    %v511 = vpop.f32.mrb[0].mxu0
    %v512 = vadd.f32 %v407, %v511
    %513 = vdwg.mxu0
    %v514 = vand.u32 %v146, 4294901760
    %515 = vmatprep.subr.mxu0 %v514
    %v516 = vand.u32 %v145, 4294901760
    %517 = vmatpush1.msra.mxu0 %v516
    %v518 = vand.u32 %v148, 4294901760
    %519 = vmatprep.subr.mxu0 %v518
    %v520 = vand.u32 %v147, 4294901760
    %521 = vmatpush1.msra.mxu0 %v520
    %v522 = vand.u32 %v150, 4294901760
    %523 = vmatprep.subr.mxu0 %v522
    %v524 = vand.u32 %v149, 4294901760
    %525 = vmatpush1.msra.mxu0 %v524
    %v526 = vand.u32 %v152, 4294901760
    %527 = vmatprep.subr.mxu0 %v526
    %v528 = vand.u32 %v151, 4294901760
    %529 = vmatpush1.msra.mxu0 %v528
    %v530 = vand.u32 %v154, 4294901760
    %531 = vmatprep.subr.mxu0 %v530
    %v532 = vand.u32 %v153, 4294901760
    %533 = vmatpush1.msra.mxu0 %v532
    %v534 = vand.u32 %v156, 4294901760
    %535 = vmatprep.subr.mxu0 %v534
    %v536 = vand.u32 %v155, 4294901760
    %537 = vmatpush1.msra.mxu0 %v536
    %v538 = vand.u32 %v158, 4294901760
    %539 = vmatprep.subr.mxu0 %v538
    %v540 = vand.u32 %v157, 4294901760
    %541 = vmatpush1.msra.mxu0 %v540
    %v542 = vand.u32 %v160, 4294901760
    %543 = vmatprep.subr.mxu0 %v542
    %v544 = vand.u32 %v159, 4294901760
    %545 = vmatpush1.msra.mxu0 %v544
    %546 = vmatprep.subr.mxu0 0.0
    %547 = vmatpush1.msra.mxu0 0.0
    %548 = vmatprep.subr.mxu0 0.0
    %549 = vmatpush1.msra.mxu0 0.0
    %550 = vmatprep.subr.mxu0 0.0
    %551 = vmatpush1.msra.mxu0 0.0
    %552 = vmatprep.subr.mxu0 0.0
    %553 = vmatpush1.msra.mxu0 0.0
    %554 = vmatprep.subr.mxu0 0.0
    %555 = vmatpush1.msra.mxu0 0.0
    %556 = vmatprep.subr.mxu0 0.0
    %557 = vmatpush1.msra.mxu0 0.0
    %558 = vmatprep.subr.mxu0 0.0
    %559 = vmatpush1.msra.mxu0 0.0
    %560 = vmatprep.subr.mxu0 0.0
    %561 = vmatpush1.msra.mxu0 0.0
    %562 = vmatprep.subr.mxu0 0.0
    %563 = vmatpush1.msra.mxu0 0.0
    %564 = vmatprep.subr.mxu0 0.0
    %565 = vmatpush1.msra.mxu0 0.0
    %566 = vmatprep.subr.mxu0 0.0
    %567 = vmatpush1.msra.mxu0 0.0
    %568 = vmatprep.subr.mxu0 0.0
    %569 = vmatpush1.msra.mxu0 0.0
    %570 = vmatprep.subr.mxu0 0.0
    %571 = vmatpush1.msra.mxu0 0.0
    %572 = vmatprep.subr.mxu0 0.0
    %573 = vmatpush1.msra.mxu0 0.0
    %574 = vmatprep.subr.mxu0 0.0
    %575 = vmatpush1.msra.mxu0 0.0
    %576 = vmatprep.subr.mxu0 0.0
    %577 = vmatpush1.msra.mxu0 0.0
    %578 = vmatprep.subr.mxu0 0.0
    %579 = vmatpush1.msra.mxu0 0.0
    %580 = vmatprep.subr.mxu0 0.0
    %581 = vmatpush1.msra.mxu0 0.0
    %582 = vmatprep.subr.mxu0 0.0
    %583 = vmatpush1.msra.mxu0 0.0
    %584 = vmatprep.subr.mxu0 0.0
    %585 = vmatpush1.msra.mxu0 0.0
    %586 = vmatprep.subr.mxu0 0.0
    %587 = vmatpush1.msra.mxu0 0.0
    %588 = vmatprep.subr.mxu0 0.0
    %589 = vmatpush1.msra.mxu0 0.0
    %590 = vmatprep.subr.mxu0 0.0
    %591 = vmatpush1.msra.mxu0 0.0
    %592 = vmatprep.subr.mxu0 0.0
    %593 = vmatpush1.msra.mxu0 0.0
    %594 = vmatprep.mubr.f32.mxu0 0.0
    %v595 = vand.u32 %v163, 4294901760
    %v596 = vsub.f32 %v163, %v595
    %v597 = vand.u32 %v596, 4294901760
    %598 = vmatmul.mubr.f32.gmra.mrb[0].mxu0 %v597
    %v599 = vpop.f32.mrb[0].mxu0
    %v600 = vadd.f32 %v510, %v599
    %v601 = vpop.f32.mrb[0].mxu0
    %v602 = vadd.f32 %v512, %v601
    %603 = vdwg.mxu0
    %v604 = vand.u32 %v146, 4294901760
    %v605 = vsub.f32 %v146, %v604
    %v606 = vand.u32 %v605, 4294901760
    %607 = vmatprep.subr.mxu0 %v606
    %v608 = vand.u32 %v145, 4294901760
    %v609 = vsub.f32 %v145, %v608
    %v610 = vand.u32 %v609, 4294901760
    %611 = vmatpush1.msra.mxu0 %v610
    %v612 = vand.u32 %v148, 4294901760
    %v613 = vsub.f32 %v148, %v612
    %v614 = vand.u32 %v613, 4294901760
    %615 = vmatprep.subr.mxu0 %v614
    %v616 = vand.u32 %v147, 4294901760
    %v617 = vsub.f32 %v147, %v616
    %v618 = vand.u32 %v617, 4294901760
    %619 = vmatpush1.msra.mxu0 %v618
    %v620 = vand.u32 %v150, 4294901760
    %v621 = vsub.f32 %v150, %v620
    %v622 = vand.u32 %v621, 4294901760
    %623 = vmatprep.subr.mxu0 %v622
    %v624 = vand.u32 %v149, 4294901760
    %v625 = vsub.f32 %v149, %v624
    %v626 = vand.u32 %v625, 4294901760
    %627 = vmatpush1.msra.mxu0 %v626
    %v628 = vand.u32 %v152, 4294901760
    %v629 = vsub.f32 %v152, %v628
    %v630 = vand.u32 %v629, 4294901760
    %631 = vmatprep.subr.mxu0 %v630
    %v632 = vand.u32 %v151, 4294901760
    %v633 = vsub.f32 %v151, %v632
    %v634 = vand.u32 %v633, 4294901760
    %635 = vmatpush1.msra.mxu0 %v634
    %v636 = vand.u32 %v154, 4294901760
    %v637 = vsub.f32 %v154, %v636
    %v638 = vand.u32 %v637, 4294901760
    %639 = vmatprep.subr.mxu0 %v638
    %v640 = vand.u32 %v153, 4294901760
    %v641 = vsub.f32 %v153, %v640
    %v642 = vand.u32 %v641, 4294901760
    %643 = vmatpush1.msra.mxu0 %v642
    %v644 = vand.u32 %v156, 4294901760
    %v645 = vsub.f32 %v156, %v644
    %v646 = vand.u32 %v645, 4294901760
    %647 = vmatprep.subr.mxu0 %v646
    %v648 = vand.u32 %v155, 4294901760
    %v649 = vsub.f32 %v155, %v648
    %v650 = vand.u32 %v649, 4294901760
    %651 = vmatpush1.msra.mxu0 %v650
    %v652 = vand.u32 %v158, 4294901760
    %v653 = vsub.f32 %v158, %v652
    %v654 = vand.u32 %v653, 4294901760
    %655 = vmatprep.subr.mxu0 %v654
    %v656 = vand.u32 %v157, 4294901760
    %v657 = vsub.f32 %v157, %v656
    %v658 = vand.u32 %v657, 4294901760
    %659 = vmatpush1.msra.mxu0 %v658
    %v660 = vand.u32 %v160, 4294901760
    %v661 = vsub.f32 %v160, %v660
    %v662 = vand.u32 %v661, 4294901760
    %663 = vmatprep.subr.mxu0 %v662
    %v664 = vand.u32 %v159, 4294901760
    %v665 = vsub.f32 %v159, %v664
    %v666 = vand.u32 %v665, 4294901760
    %667 = vmatpush1.msra.mxu0 %v666
    %668 = vmatprep.subr.mxu0 0.0
    %669 = vmatpush1.msra.mxu0 0.0
    %670 = vmatprep.subr.mxu0 0.0
    %671 = vmatpush1.msra.mxu0 0.0
    %672 = vmatprep.subr.mxu0 0.0
    %673 = vmatpush1.msra.mxu0 0.0
    %674 = vmatprep.subr.mxu0 0.0
    %675 = vmatpush1.msra.mxu0 0.0
    %676 = vmatprep.subr.mxu0 0.0
    %677 = vmatpush1.msra.mxu0 0.0
    %678 = vmatprep.subr.mxu0 0.0
    %679 = vmatpush1.msra.mxu0 0.0
    %680 = vmatprep.subr.mxu0 0.0
    %681 = vmatpush1.msra.mxu0 0.0
    %682 = vmatprep.subr.mxu0 0.0
    %683 = vmatpush1.msra.mxu0 0.0
    %684 = vmatprep.subr.mxu0 0.0
    %685 = vmatpush1.msra.mxu0 0.0
    %686 = vmatprep.subr.mxu0 0.0
    %687 = vmatpush1.msra.mxu0 0.0
    %688 = vmatprep.subr.mxu0 0.0
    %689 = vmatpush1.msra.mxu0 0.0
    %690 = vmatprep.subr.mxu0 0.0
    %691 = vmatpush1.msra.mxu0 0.0
    %692 = vmatprep.subr.mxu0 0.0
    %693 = vmatpush1.msra.mxu0 0.0
    %694 = vmatprep.subr.mxu0 0.0
    %695 = vmatpush1.msra.mxu0 0.0
    %696 = vmatprep.subr.mxu0 0.0
    %697 = vmatpush1.msra.mxu0 0.0
    %698 = vmatprep.subr.mxu0 0.0
    %699 = vmatpush1.msra.mxu0 0.0
    %700 = vmatprep.subr.mxu0 0.0
    %701 = vmatpush1.msra.mxu0 0.0
    %702 = vmatprep.subr.mxu0 0.0
    %703 = vmatpush1.msra.mxu0 0.0
    %704 = vmatprep.subr.mxu0 0.0
    %705 = vmatpush1.msra.mxu0 0.0
    %706 = vmatprep.subr.mxu0 0.0
    %707 = vmatpush1.msra.mxu0 0.0
    %708 = vmatprep.subr.mxu0 0.0
    %709 = vmatpush1.msra.mxu0 0.0
    %710 = vmatprep.subr.mxu0 0.0
    %711 = vmatpush1.msra.mxu0 0.0
    %712 = vmatprep.subr.mxu0 0.0
    %713 = vmatpush1.msra.mxu0 0.0
    %714 = vmatprep.subr.mxu0 0.0
    %715 = vmatpush1.msra.mxu0 0.0
    %716 = vmatprep.mubr.f32.mxu0 0.0
    %v717 = vand.u32 %v163, 4294901760
    %718 = vmatmul.mubr.f32.gmra.mrb[0].mxu0 %v717
    %v719 = vpop.f32.mrb[0].mxu0
    %v720 = vadd.f32 %v600, %v719
    %v721 = vpop.f32.mrb[0].mxu0
    %v722 = vadd.f32 %v602, %v721
    %723 = vdwg.mxu0
    %v724 = vand.u32 %v146, 4294901760
    %725 = vmatprep.subr.mxu0 %v724
    %v726 = vand.u32 %v145, 4294901760
    %727 = vmatpush1.msra.mxu0 %v726
    %v728 = vand.u32 %v148, 4294901760
    %729 = vmatprep.subr.mxu0 %v728
    %v730 = vand.u32 %v147, 4294901760
    %731 = vmatpush1.msra.mxu0 %v730
    %v732 = vand.u32 %v150, 4294901760
    %733 = vmatprep.subr.mxu0 %v732
    %v734 = vand.u32 %v149, 4294901760
    %735 = vmatpush1.msra.mxu0 %v734
    %v736 = vand.u32 %v152, 4294901760
    %737 = vmatprep.subr.mxu0 %v736
    %v738 = vand.u32 %v151, 4294901760
    %739 = vmatpush1.msra.mxu0 %v738
    %v740 = vand.u32 %v154, 4294901760
    %741 = vmatprep.subr.mxu0 %v740
    %v742 = vand.u32 %v153, 4294901760
    %743 = vmatpush1.msra.mxu0 %v742
    %v744 = vand.u32 %v156, 4294901760
    %745 = vmatprep.subr.mxu0 %v744
    %v746 = vand.u32 %v155, 4294901760
    %747 = vmatpush1.msra.mxu0 %v746
    %v748 = vand.u32 %v158, 4294901760
    %749 = vmatprep.subr.mxu0 %v748
    %v750 = vand.u32 %v157, 4294901760
    %751 = vmatpush1.msra.mxu0 %v750
    %v752 = vand.u32 %v160, 4294901760
    %753 = vmatprep.subr.mxu0 %v752
    %v754 = vand.u32 %v159, 4294901760
    %755 = vmatpush1.msra.mxu0 %v754
    %756 = vmatprep.subr.mxu0 0.0
    %757 = vmatpush1.msra.mxu0 0.0
    %758 = vmatprep.subr.mxu0 0.0
    %759 = vmatpush1.msra.mxu0 0.0
    %760 = vmatprep.subr.mxu0 0.0
    %761 = vmatpush1.msra.mxu0 0.0
    %762 = vmatprep.subr.mxu0 0.0
    %763 = vmatpush1.msra.mxu0 0.0
    %764 = vmatprep.subr.mxu0 0.0
    %765 = vmatpush1.msra.mxu0 0.0
    %766 = vmatprep.subr.mxu0 0.0
    %767 = vmatpush1.msra.mxu0 0.0
    %768 = vmatprep.subr.mxu0 0.0
    %769 = vmatpush1.msra.mxu0 0.0
    %770 = vmatprep.subr.mxu0 0.0
    %771 = vmatpush1.msra.mxu0 0.0
    %772 = vmatprep.subr.mxu0 0.0
    %773 = vmatpush1.msra.mxu0 0.0
    %774 = vmatprep.subr.mxu0 0.0
    %775 = vmatpush1.msra.mxu0 0.0
    %776 = vmatprep.subr.mxu0 0.0
    %777 = vmatpush1.msra.mxu0 0.0
    %778 = vmatprep.subr.mxu0 0.0
    %779 = vmatpush1.msra.mxu0 0.0
    %780 = vmatprep.subr.mxu0 0.0
    %781 = vmatpush1.msra.mxu0 0.0
    %782 = vmatprep.subr.mxu0 0.0
    %783 = vmatpush1.msra.mxu0 0.0
    %784 = vmatprep.subr.mxu0 0.0
    %785 = vmatpush1.msra.mxu0 0.0
    %786 = vmatprep.subr.mxu0 0.0
    %787 = vmatpush1.msra.mxu0 0.0
    %788 = vmatprep.subr.mxu0 0.0
    %789 = vmatpush1.msra.mxu0 0.0
    %790 = vmatprep.subr.mxu0 0.0
    %791 = vmatpush1.msra.mxu0 0.0
    %792 = vmatprep.subr.mxu0 0.0
    %793 = vmatpush1.msra.mxu0 0.0
    %794 = vmatprep.subr.mxu0 0.0
    %795 = vmatpush1.msra.mxu0 0.0
    %796 = vmatprep.subr.mxu0 0.0
    %797 = vmatpush1.msra.mxu0 0.0
    %798 = vmatprep.subr.mxu0 0.0
    %799 = vmatpush1.msra.mxu0 0.0
    %800 = vmatprep.subr.mxu0 0.0
    %801 = vmatpush1.msra.mxu0 0.0
    %802 = vmatprep.subr.mxu0 0.0
    %803 = vmatpush1.msra.mxu0 0.0
    %804 = vmatprep.mubr.f32.mxu0 0.0
    %v805 = vand.u32 %v163, 4294901760
    %806 = vmatmul.mubr.f32.gmra.mrb[0].mxu0 %v805
    %v807 = vpop.f32.mrb[0].mxu0
    %v808 = vadd.f32 %v720, %v807
    %v809 = vpop.f32.mrb[0].mxu0
    %v810 = vadd.f32 %v722, %v809
    %811 = vdwg.mxu0
    %v812 = vadd.f32 %v161, %v808
    %v813 = vxor.u32 %v812, 2147483648
    %v814 = vmul.f32 %v813, 1.442695
    %v815 = vpow.pop %v814
    %v816 = vadd.f32 %v815, 1.0
    %v817 = vrcp.pop %v816
    %v818 = vmul.f32 1.0, %v817
    %v820 = vlaneseq
    %v821 = vshrl.u32 %v820, 7
    %v822 = vsub.s32 0, %v821
    %v823 = vrot.slane %v59, %v822
    %824 = vrot.lane.b32.xlu0 %v823, 64
    %v825 = vpop.permute.xlu0 %824
    %v827 = vadd.f32 %v810, %v825
    %v828 = vmul.f32 %v818, %v827
    %v830 = vrot.slane %v161, 1
    %v832 = vadd.f32 %v830, %v828
    %v833 = vtanh.pop %v832
    %v834 = vsub.f32 1.0, %v818
    %836 = vrot.lane.b32.xlu0 %v833, 64
    %v837 = vpop.permute.xlu0 %836
    %v839 = vmul.f32 %v834, %v837
    %v840 = vmul.f32 %v818, 0.0
    %v841 = vadd.f32 %v839, %v840
    %v843 = vlaneseq
    %v844 = vshrl.u32 %v843, 7
    %v845 = vsub.s32 0, %v844
    %v846 = vrot.slane %v841, %v845
    %847 = vrot.lane.b32.xlu0 %v846, 64
    %v848 = vpop.permute.xlu0 %847
    %vm850 = vcmask 253952
    %851 = vst.msk [vmem:[#allocation3] sm:$0x1] %vm850, %v848
    %vm852 = vcmask 516352
    %853 = vst.msk [vmem:[#allocation3 + $0x7] sm:$0x1] %vm852, %v848
    %s854 = scalar_lea.vmem [#allocation2], 1
    %v855 = vld [vmem:[%s854] ss:$8 sm:$0x3]
    %v856 = vsel %vm143, %v848, 0
    %v858 = vand.u32 %v146, 4294901760
    %859 = vmatprep.subr.mxu0 %v858
    %v860 = vand.u32 %v145, 4294901760
    %861 = vmatpush1.msra.mxu0 %v860
    %v862 = vand.u32 %v148, 4294901760
    %863 = vmatprep.subr.mxu0 %v862
    %v864 = vand.u32 %v147, 4294901760
    %865 = vmatpush1.msra.mxu0 %v864
    %v866 = vand.u32 %v150, 4294901760
    %867 = vmatprep.subr.mxu0 %v866
    %v868 = vand.u32 %v149, 4294901760
    %869 = vmatpush1.msra.mxu0 %v868
    %v870 = vand.u32 %v152, 4294901760
    %871 = vmatprep.subr.mxu0 %v870
    %v872 = vand.u32 %v151, 4294901760
    %873 = vmatpush1.msra.mxu0 %v872
    %v874 = vand.u32 %v154, 4294901760
    %875 = vmatprep.subr.mxu0 %v874
    %v876 = vand.u32 %v153, 4294901760
    %877 = vmatpush1.msra.mxu0 %v876
    %v878 = vand.u32 %v156, 4294901760
    %879 = vmatprep.subr.mxu0 %v878
    %v880 = vand.u32 %v155, 4294901760
    %881 = vmatpush1.msra.mxu0 %v880
    %v882 = vand.u32 %v158, 4294901760
    %883 = vmatprep.subr.mxu0 %v882
    %v884 = vand.u32 %v157, 4294901760
    %885 = vmatpush1.msra.mxu0 %v884
    %v886 = vand.u32 %v160, 4294901760
    %887 = vmatprep.subr.mxu0 %v886
    %v888 = vand.u32 %v159, 4294901760
    %889 = vmatpush1.msra.mxu0 %v888
    %890 = vmatprep.subr.mxu0 0.0
    %891 = vmatpush1.msra.mxu0 0.0
    %892 = vmatprep.subr.mxu0 0.0
    %893 = vmatpush1.msra.mxu0 0.0
    %894 = vmatprep.subr.mxu0 0.0
    %895 = vmatpush1.msra.mxu0 0.0
    %896 = vmatprep.subr.mxu0 0.0
    %897 = vmatpush1.msra.mxu0 0.0
    %898 = vmatprep.subr.mxu0 0.0
    %899 = vmatpush1.msra.mxu0 0.0
    %900 = vmatprep.subr.mxu0 0.0
    %901 = vmatpush1.msra.mxu0 0.0
    %902 = vmatprep.subr.mxu0 0.0
    %903 = vmatpush1.msra.mxu0 0.0
    %904 = vmatprep.subr.mxu0 0.0
    %905 = vmatpush1.msra.mxu0 0.0
    %906 = vmatprep.subr.mxu0 0.0
    %907 = vmatpush1.msra.mxu0 0.0
    %908 = vmatprep.subr.mxu0 0.0
    %909 = vmatpush1.msra.mxu0 0.0
    %910 = vmatprep.subr.mxu0 0.0
    %911 = vmatpush1.msra.mxu0 0.0
    %912 = vmatprep.subr.mxu0 0.0
    %913 = vmatpush1.msra.mxu0 0.0
    %914 = vmatprep.subr.mxu0 0.0
    %915 = vmatpush1.msra.mxu0 0.0
    %916 = vmatprep.subr.mxu0 0.0
    %917 = vmatpush1.msra.mxu0 0.0
    %918 = vmatprep.subr.mxu0 0.0
    %919 = vmatpush1.msra.mxu0 0.0
    %920 = vmatprep.subr.mxu0 0.0
    %921 = vmatpush1.msra.mxu0 0.0
    %922 = vmatprep.subr.mxu0 0.0
    %923 = vmatpush1.msra.mxu0 0.0
    %924 = vmatprep.subr.mxu0 0.0
    %925 = vmatpush1.msra.mxu0 0.0
    %926 = vmatprep.subr.mxu0 0.0
    %927 = vmatpush1.msra.mxu0 0.0
    %928 = vmatprep.subr.mxu0 0.0
    %929 = vmatpush1.msra.mxu0 0.0
    %930 = vmatprep.subr.mxu0 0.0
    %931 = vmatpush1.msra.mxu0 0.0
    %932 = vmatprep.subr.mxu0 0.0
    %933 = vmatpush1.msra.mxu0 0.0
    %934 = vmatprep.subr.mxu0 0.0
    %935 = vmatpush1.msra.mxu0 0.0
    %936 = vmatprep.subr.mxu0 0.0
    %937 = vmatpush1.msra.mxu0 0.0
    %938 = vmatprep.mubr.f32.mxu0 0.0
    %v939 = vand.u32 %v856, 4294901760
    %v940 = vsub.f32 %v856, %v939
    %v941 = vand.u32 %v940, 4294901760
    %v942 = vsub.f32 %v940, %v941
    %v943 = vand.u32 %v942, 4294901760
    %944 = vmatmul.mubr.f32.gmra.mrb[0].mxu0 %v943
    %v945 = vpop.f32.mrb[0].mxu0
    %v946 = vadd.f32 0.0, %v945
    %v947 = vpop.f32.mrb[0].mxu0
    %v948 = vadd.f32 0.0, %v947
    %949 = vdwg.mxu0
    %v950 = vand.u32 %v146, 4294901760
    %v951 = vsub.f32 %v146, %v950
    %v952 = vand.u32 %v951, 4294901760
    %v953 = vsub.f32 %v951, %v952
    %v954 = vand.u32 %v953, 4294901760
    %955 = vmatprep.subr.mxu0 %v954
    %v956 = vand.u32 %v145, 4294901760
    %v957 = vsub.f32 %v145, %v956
    %v958 = vand.u32 %v957, 4294901760
    %v959 = vsub.f32 %v957, %v958
    %v960 = vand.u32 %v959, 4294901760
    %961 = vmatpush1.msra.mxu0 %v960
    %v962 = vand.u32 %v148, 4294901760
    %v963 = vsub.f32 %v148, %v962
    %v964 = vand.u32 %v963, 4294901760
    %v965 = vsub.f32 %v963, %v964
    %v966 = vand.u32 %v965, 4294901760
    %967 = vmatprep.subr.mxu0 %v966
    %v968 = vand.u32 %v147, 4294901760
    %v969 = vsub.f32 %v147, %v968
    %v970 = vand.u32 %v969, 4294901760
    %v971 = vsub.f32 %v969, %v970
    %v972 = vand.u32 %v971, 4294901760
    %973 = vmatpush1.msra.mxu0 %v972
    %v974 = vand.u32 %v150, 4294901760
    %v975 = vsub.f32 %v150, %v974
    %v976 = vand.u32 %v975, 4294901760
    %v977 = vsub.f32 %v975, %v976
    %v978 = vand.u32 %v977, 4294901760
    %979 = vmatprep.subr.mxu0 %v978
    %v980 = vand.u32 %v149, 4294901760
    %v981 = vsub.f32 %v149, %v980
    %v982 = vand.u32 %v981, 4294901760
    %v983 = vsub.f32 %v981, %v982
    %v984 = vand.u32 %v983, 4294901760
    %985 = vmatpush1.msra.mxu0 %v984
    %v986 = vand.u32 %v152, 4294901760
    %v987 = vsub.f32 %v152, %v986
    %v988 = vand.u32 %v987, 4294901760
    %v989 = vsub.f32 %v987, %v988
    %v990 = vand.u32 %v989, 4294901760
    %991 = vmatprep.subr.mxu0 %v990
    %v992 = vand.u32 %v151, 4294901760
    %v993 = vsub.f32 %v151, %v992
    %v994 = vand.u32 %v993, 4294901760
    %v995 = vsub.f32 %v993, %v994
    %v996 = vand.u32 %v995, 4294901760
    %997 = vmatpush1.msra.mxu0 %v996
    %v998 = vand.u32 %v154, 4294901760
    %v999 = vsub.f32 %v154, %v998
    %v1000 = vand.u32 %v999, 4294901760
    %v1001 = vsub.f32 %v999, %v1000
    %v1002 = vand.u32 %v1001, 4294901760
    %1003 = vmatprep.subr.mxu0 %v1002
    %v1004 = vand.u32 %v153, 4294901760
    %v1005 = vsub.f32 %v153, %v1004
    %v1006 = vand.u32 %v1005, 4294901760
    %v1007 = vsub.f32 %v1005, %v1006
    %v1008 = vand.u32 %v1007, 4294901760
    %1009 = vmatpush1.msra.mxu0 %v1008
    %v1010 = vand.u32 %v156, 4294901760
    %v1011 = vsub.f32 %v156, %v1010
    %v1012 = vand.u32 %v1011, 4294901760
    %v1013 = vsub.f32 %v1011, %v1012
    %v1014 = vand.u32 %v1013, 4294901760
    %1015 = vmatprep.subr.mxu0 %v1014
    %v1016 = vand.u32 %v155, 4294901760
    %v1017 = vsub.f32 %v155, %v1016
    %v1018 = vand.u32 %v1017, 4294901760
    %v1019 = vsub.f32 %v1017, %v1018
    %v1020 = vand.u32 %v1019, 4294901760
    %1021 = vmatpush1.msra.mxu0 %v1020
    %v1022 = vand.u32 %v158, 4294901760
    %v1023 = vsub.f32 %v158, %v1022
    %v1024 = vand.u32 %v1023, 4294901760
    %v1025 = vsub.f32 %v1023, %v1024
    %v1026 = vand.u32 %v1025, 4294901760
    %1027 = vmatprep.subr.mxu0 %v1026
    %v1028 = vand.u32 %v157, 4294901760
    %v1029 = vsub.f32 %v157, %v1028
    %v1030 = vand.u32 %v1029, 4294901760
    %v1031 = vsub.f32 %v1029, %v1030
    %v1032 = vand.u32 %v1031, 4294901760
    %1033 = vmatpush1.msra.mxu0 %v1032
    %v1034 = vand.u32 %v160, 4294901760
    %v1035 = vsub.f32 %v160, %v1034
    %v1036 = vand.u32 %v1035, 4294901760
    %v1037 = vsub.f32 %v1035, %v1036
    %v1038 = vand.u32 %v1037, 4294901760
    %1039 = vmatprep.subr.mxu0 %v1038
    %v1040 = vand.u32 %v159, 4294901760
    %v1041 = vsub.f32 %v159, %v1040
    %v1042 = vand.u32 %v1041, 4294901760
    %v1043 = vsub.f32 %v1041, %v1042
    %v1044 = vand.u32 %v1043, 4294901760
    %1045 = vmatpush1.msra.mxu0 %v1044
    %1046 = vmatprep.subr.mxu0 0.0
    %1047 = vmatpush1.msra.mxu0 0.0
    %1048 = vmatprep.subr.mxu0 0.0
    %1049 = vmatpush1.msra.mxu0 0.0
    %1050 = vmatprep.subr.mxu0 0.0
    %1051 = vmatpush1.msra.mxu0 0.0
    %1052 = vmatprep.subr.mxu0 0.0
    %1053 = vmatpush1.msra.mxu0 0.0
    %1054 = vmatprep.subr.mxu0 0.0
    %1055 = vmatpush1.msra.mxu0 0.0
    %1056 = vmatprep.subr.mxu0 0.0
    %1057 = vmatpush1.msra.mxu0 0.0
    %1058 = vmatprep.subr.mxu0 0.0
    %1059 = vmatpush1.msra.mxu0 0.0
    %1060 = vmatprep.subr.mxu0 0.0
    %1061 = vmatpush1.msra.mxu0 0.0
    %1062 = vmatprep.subr.mxu0 0.0
    %1063 = vmatpush1.msra.mxu0 0.0
    %1064 = vmatprep.subr.mxu0 0.0
    %1065 = vmatpush1.msra.mxu0 0.0
    %1066 = vmatprep.subr.mxu0 0.0
    %1067 = vmatpush1.msra.mxu0 0.0
    %1068 = vmatprep.subr.mxu0 0.0
    %1069 = vmatpush1.msra.mxu0 0.0
    %1070 = vmatprep.subr.mxu0 0.0
    %1071 = vmatpush1.msra.mxu0 0.0
    %1072 = vmatprep.subr.mxu0 0.0
    %1073 = vmatpush1.msra.mxu0 0.0
    %1074 = vmatprep.subr.mxu0 0.0
    %1075 = vmatpush1.msra.mxu0 0.0
    %1076 = vmatprep.subr.mxu0 0.0
    %1077 = vmatpush1.msra.mxu0 0.0
    %1078 = vmatprep.subr.mxu0 0.0
    %1079 = vmatpush1.msra.mxu0 0.0
    %1080 = vmatprep.subr.mxu0 0.0
    %1081 = vmatpush1.msra.mxu0 0.0
    %1082 = vmatprep.subr.mxu0 0.0
    %1083 = vmatpush1.msra.mxu0 0.0
    %1084 = vmatprep.subr.mxu0 0.0
    %1085 = vmatpush1.msra.mxu0 0.0
    %1086 = vmatprep.subr.mxu0 0.0
    %1087 = vmatpush1.msra.mxu0 0.0
    %1088 = vmatprep.subr.mxu0 0.0
    %1089 = vmatpush1.msra.mxu0 0.0
    %1090 = vmatprep.subr.mxu0 0.0
    %1091 = vmatpush1.msra.mxu0 0.0
    %1092 = vmatprep.subr.mxu0 0.0
    %1093 = vmatpush1.msra.mxu0 0.0
    %1094 = vmatprep.mubr.f32.mxu0 0.0
    %v1095 = vand.u32 %v856, 4294901760
    %1096 = vmatmul.mubr.f32.gmra.mrb[0].mxu0 %v1095
    %v1097 = vpop.f32.mrb[0].mxu0
    %v1098 = vadd.f32 %v946, %v1097
    %v1099 = vpop.f32.mrb[0].mxu0
    %v1100 = vadd.f32 %v948, %v1099
    %1101 = vdwg.mxu0
    %v1102 = vand.u32 %v146, 4294901760
    %v1103 = vsub.f32 %v146, %v1102
    %1104 = vmatprep.subr.mxu0 %v1103
    %v1105 = vand.u32 %v145, 4294901760
    %v1106 = vsub.f32 %v145, %v1105
    %1107 = vmatpush1.msra.mxu0 %v1106
    %v1108 = vand.u32 %v148, 4294901760
    %v1109 = vsub.f32 %v148, %v1108
    %1110 = vmatprep.subr.mxu0 %v1109
    %v1111 = vand.u32 %v147, 4294901760
    %v1112 = vsub.f32 %v147, %v1111
    %1113 = vmatpush1.msra.mxu0 %v1112
    %v1114 = vand.u32 %v150, 4294901760
    %v1115 = vsub.f32 %v150, %v1114
    %1116 = vmatprep.subr.mxu0 %v1115
    %v1117 = vand.u32 %v149, 4294901760
    %v1118 = vsub.f32 %v149, %v1117
    %1119 = vmatpush1.msra.mxu0 %v1118
    %v1120 = vand.u32 %v152, 4294901760
    %v1121 = vsub.f32 %v152, %v1120
    %1122 = vmatprep.subr.mxu0 %v1121
    %v1123 = vand.u32 %v151, 4294901760
    %v1124 = vsub.f32 %v151, %v1123
    %1125 = vmatpush1.msra.mxu0 %v1124
    %v1126 = vand.u32 %v154, 4294901760
    %v1127 = vsub.f32 %v154, %v1126
    %1128 = vmatprep.subr.mxu0 %v1127
    %v1129 = vand.u32 %v153, 4294901760
    %v1130 = vsub.f32 %v153, %v1129
    %1131 = vmatpush1.msra.mxu0 %v1130
    %v1132 = vand.u32 %v156, 4294901760
    %v1133 = vsub.f32 %v156, %v1132
    %1134 = vmatprep.subr.mxu0 %v1133
    %v1135 = vand.u32 %v155, 4294901760
    %v1136 = vsub.f32 %v155, %v1135
    %1137 = vmatpush1.msra.mxu0 %v1136
    %v1138 = vand.u32 %v158, 4294901760
    %v1139 = vsub.f32 %v158, %v1138
    %1140 = vmatprep.subr.mxu0 %v1139
    %v1141 = vand.u32 %v157, 4294901760
    %v1142 = vsub.f32 %v157, %v1141
    %1143 = vmatpush1.msra.mxu0 %v1142
    %v1144 = vand.u32 %v160, 4294901760
    %v1145 = vsub.f32 %v160, %v1144
    %1146 = vmatprep.subr.mxu0 %v1145
    %v1147 = vand.u32 %v159, 4294901760
    %v1148 = vsub.f32 %v159, %v1147
    %1149 = vmatpush1.msra.mxu0 %v1148
    %1150 = vmatprep.subr.mxu0 0.0
    %1151 = vmatpush1.msra.mxu0 0.0
    %1152 = vmatprep.subr.mxu0 0.0
    %1153 = vmatpush1.msra.mxu0 0.0
    %1154 = vmatprep.subr.mxu0 0.0
    %1155 = vmatpush1.msra.mxu0 0.0
    %1156 = vmatprep.subr.mxu0 0.0
    %1157 = vmatpush1.msra.mxu0 0.0
    %1158 = vmatprep.subr.mxu0 0.0
    %1159 = vmatpush1.msra.mxu0 0.0
    %1160 = vmatprep.subr.mxu0 0.0
    %1161 = vmatpush1.msra.mxu0 0.0
    %1162 = vmatprep.subr.mxu0 0.0
    %1163 = vmatpush1.msra.mxu0 0.0
    %1164 = vmatprep.subr.mxu0 0.0
    %1165 = vmatpush1.msra.mxu0 0.0
    %1166 = vmatprep.subr.mxu0 0.0
    %1167 = vmatpush1.msra.mxu0 0.0
    %1168 = vmatprep.subr.mxu0 0.0
    %1169 = vmatpush1.msra.mxu0 0.0
    %1170 = vmatprep.subr.mxu0 0.0
    %1171 = vmatpush1.msra.mxu0 0.0
    %1172 = vmatprep.subr.mxu0 0.0
    %1173 = vmatpush1.msra.mxu0 0.0
    %1174 = vmatprep.subr.mxu0 0.0
    %1175 = vmatpush1.msra.mxu0 0.0
    %1176 = vmatprep.subr.mxu0 0.0
    %1177 = vmatpush1.msra.mxu0 0.0
    %1178 = vmatprep.subr.mxu0 0.0
    %1179 = vmatpush1.msra.mxu0 0.0
    %1180 = vmatprep.subr.mxu0 0.0
    %1181 = vmatpush1.msra.mxu0 0.0
    %1182 = vmatprep.subr.mxu0 0.0
    %1183 = vmatpush1.msra.mxu0 0.0
    %1184 = vmatprep.subr.mxu0 0.0
    %1185 = vmatpush1.msra.mxu0 0.0
    %1186 = vmatprep.subr.mxu0 0.0
    %1187 = vmatpush1.msra.mxu0 0.0
    %1188 = vmatprep.subr.mxu0 0.0
    %1189 = vmatpush1.msra.mxu0 0.0
    %1190 = vmatprep.subr.mxu0 0.0
    %1191 = vmatpush1.msra.mxu0 0.0
    %1192 = vmatprep.subr.mxu0 0.0
    %1193 = vmatpush1.msra.mxu0 0.0
    %1194 = vmatprep.subr.mxu0 0.0
    %1195 = vmatpush1.msra.mxu0 0.0
    %1196 = vmatprep.subr.mxu0 0.0
    %1197 = vmatpush1.msra.mxu0 0.0
    %1198 = vmatprep.mubr.f32.mxu0 0.0
    %v1199 = vand.u32 %v856, 4294901760
    %v1200 = vsub.f32 %v856, %v1199
    %1201 = vmatmul.mubr.f32.gmra.mrb[0].mxu0 %v1200
    %v1202 = vpop.f32.mrb[0].mxu0
    %v1203 = vadd.f32 %v1098, %v1202
    %v1204 = vpop.f32.mrb[0].mxu0
    %v1205 = vadd.f32 %v1100, %v1204
    %1206 = vdwg.mxu0
    %v1207 = vand.u32 %v146, 4294901760
    %1208 = vmatprep.subr.mxu0 %v1207
    %v1209 = vand.u32 %v145, 4294901760
    %1210 = vmatpush1.msra.mxu0 %v1209
    %v1211 = vand.u32 %v148, 4294901760
    %1212 = vmatprep.subr.mxu0 %v1211
    %v1213 = vand.u32 %v147, 4294901760
    %1214 = vmatpush1.msra.mxu0 %v1213
    %v1215 = vand.u32 %v150, 4294901760
    %1216 = vmatprep.subr.mxu0 %v1215
    %v1217 = vand.u32 %v149, 4294901760
    %1218 = vmatpush1.msra.mxu0 %v1217
    %v1219 = vand.u32 %v152, 4294901760
    %1220 = vmatprep.subr.mxu0 %v1219
    %v1221 = vand.u32 %v151, 4294901760
    %1222 = vmatpush1.msra.mxu0 %v1221
    %v1223 = vand.u32 %v154, 4294901760
    %1224 = vmatprep.subr.mxu0 %v1223
    %v1225 = vand.u32 %v153, 4294901760
    %1226 = vmatpush1.msra.mxu0 %v1225
    %v1227 = vand.u32 %v156, 4294901760
    %1228 = vmatprep.subr.mxu0 %v1227
    %v1229 = vand.u32 %v155, 4294901760
    %1230 = vmatpush1.msra.mxu0 %v1229
    %v1231 = vand.u32 %v158, 4294901760
    %1232 = vmatprep.subr.mxu0 %v1231
    %v1233 = vand.u32 %v157, 4294901760
    %1234 = vmatpush1.msra.mxu0 %v1233
    %v1235 = vand.u32 %v160, 4294901760
    %1236 = vmatprep.subr.mxu0 %v1235
    %v1237 = vand.u32 %v159, 4294901760
    %1238 = vmatpush1.msra.mxu0 %v1237
    %1239 = vmatprep.subr.mxu0 0.0
    %1240 = vmatpush1.msra.mxu0 0.0
    %1241 = vmatprep.subr.mxu0 0.0
    %1242 = vmatpush1.msra.mxu0 0.0
    %1243 = vmatprep.subr.mxu0 0.0
    %1244 = vmatpush1.msra.mxu0 0.0
    %1245 = vmatprep.subr.mxu0 0.0
    %1246 = vmatpush1.msra.mxu0 0.0
    %1247 = vmatprep.subr.mxu0 0.0
    %1248 = vmatpush1.msra.mxu0 0.0
    %1249 = vmatprep.subr.mxu0 0.0
    %1250 = vmatpush1.msra.mxu0 0.0
    %1251 = vmatprep.subr.mxu0 0.0
    %1252 = vmatpush1.msra.mxu0 0.0
    %1253 = vmatprep.subr.mxu0 0.0
    %1254 = vmatpush1.msra.mxu0 0.0
    %1255 = vmatprep.subr.mxu0 0.0
    %1256 = vmatpush1.msra.mxu0 0.0
    %1257 = vmatprep.subr.mxu0 0.0
    %1258 = vmatpush1.msra.mxu0 0.0
    %1259 = vmatprep.subr.mxu0 0.0
    %1260 = vmatpush1.msra.mxu0 0.0
    %1261 = vmatprep.subr.mxu0 0.0
    %1262 = vmatpush1.msra.mxu0 0.0
    %1263 = vmatprep.subr.mxu0 0.0
    %1264 = vmatpush1.msra.mxu0 0.0
    %1265 = vmatprep.subr.mxu0 0.0
    %1266 = vmatpush1.msra.mxu0 0.0
    %1267 = vmatprep.subr.mxu0 0.0
    %1268 = vmatpush1.msra.mxu0 0.0
    %1269 = vmatprep.subr.mxu0 0.0
    %1270 = vmatpush1.msra.mxu0 0.0
    %1271 = vmatprep.subr.mxu0 0.0
    %1272 = vmatpush1.msra.mxu0 0.0
    %1273 = vmatprep.subr.mxu0 0.0
    %1274 = vmatpush1.msra.mxu0 0.0
    %1275 = vmatprep.subr.mxu0 0.0
    %1276 = vmatpush1.msra.mxu0 0.0
    %1277 = vmatprep.subr.mxu0 0.0
    %1278 = vmatpush1.msra.mxu0 0.0
    %1279 = vmatprep.subr.mxu0 0.0
    %1280 = vmatpush1.msra.mxu0 0.0
    %1281 = vmatprep.subr.mxu0 0.0
    %1282 = vmatpush1.msra.mxu0 0.0
    %1283 = vmatprep.subr.mxu0 0.0
    %1284 = vmatpush1.msra.mxu0 0.0
    %1285 = vmatprep.subr.mxu0 0.0
    %1286 = vmatpush1.msra.mxu0 0.0
    %1287 = vmatprep.mubr.f32.mxu0 0.0
    %v1288 = vand.u32 %v856, 4294901760
    %v1289 = vsub.f32 %v856, %v1288
    %v1290 = vand.u32 %v1289, 4294901760
    %1291 = vmatmul.mubr.f32.gmra.mrb[0].mxu0 %v1290
    %v1292 = vpop.f32.mrb[0].mxu0
    %v1293 = vadd.f32 %v1203, %v1292
    %v1294 = vpop.f32.mrb[0].mxu0
    %v1295 = vadd.f32 %v1205, %v1294
    %1296 = vdwg.mxu0
    %v1297 = vand.u32 %v146, 4294901760
    %v1298 = vsub.f32 %v146, %v1297
    %v1299 = vand.u32 %v1298, 4294901760
    %1300 = vmatprep.subr.mxu0 %v1299
    %v1301 = vand.u32 %v145, 4294901760
    %v1302 = vsub.f32 %v145, %v1301
    %v1303 = vand.u32 %v1302, 4294901760
    %1304 = vmatpush1.msra.mxu0 %v1303
    %v1305 = vand.u32 %v148, 4294901760
    %v1306 = vsub.f32 %v148, %v1305
    %v1307 = vand.u32 %v1306, 4294901760
    %1308 = vmatprep.subr.mxu0 %v1307
    %v1309 = vand.u32 %v147, 4294901760
    %v1310 = vsub.f32 %v147, %v1309
    %v1311 = vand.u32 %v1310, 4294901760
    %1312 = vmatpush1.msra.mxu0 %v1311
    %v1313 = vand.u32 %v150, 4294901760
    %v1314 = vsub.f32 %v150, %v1313
    %v1315 = vand.u32 %v1314, 4294901760
    %1316 = vmatprep.subr.mxu0 %v1315
    %v1317 = vand.u32 %v149, 4294901760
    %v1318 = vsub.f32 %v149, %v1317
    %v1319 = vand.u32 %v1318, 4294901760
    %1320 = vmatpush1.msra.mxu0 %v1319
    %v1321 = vand.u32 %v152, 4294901760
    %v1322 = vsub.f32 %v152, %v1321
    %v1323 = vand.u32 %v1322, 4294901760
    %1324 = vmatprep.subr.mxu0 %v1323
    %v1325 = vand.u32 %v151, 4294901760
    %v1326 = vsub.f32 %v151, %v1325
    %v1327 = vand.u32 %v1326, 4294901760
    %1328 = vmatpush1.msra.mxu0 %v1327
    %v1329 = vand.u32 %v154, 4294901760
    %v1330 = vsub.f32 %v154, %v1329
    %v1331 = vand.u32 %v1330, 4294901760
    %1332 = vmatprep.subr.mxu0 %v1331
    %v1333 = vand.u32 %v153, 4294901760
    %v1334 = vsub.f32 %v153, %v1333
    %v1335 = vand.u32 %v1334, 4294901760
    %1336 = vmatpush1.msra.mxu0 %v1335
    %v1337 = vand.u32 %v156, 4294901760
    %v1338 = vsub.f32 %v156, %v1337
    %v1339 = vand.u32 %v1338, 4294901760
    %1340 = vmatprep.subr.mxu0 %v1339
    %v1341 = vand.u32 %v155, 4294901760
    %v1342 = vsub.f32 %v155, %v1341
    %v1343 = vand.u32 %v1342, 4294901760
    %1344 = vmatpush1.msra.mxu0 %v1343
    %v1345 = vand.u32 %v158, 4294901760
    %v1346 = vsub.f32 %v158, %v1345
    %v1347 = vand.u32 %v1346, 4294901760
    %1348 = vmatprep.subr.mxu0 %v1347
    %v1349 = vand.u32 %v157, 4294901760
    %v1350 = vsub.f32 %v157, %v1349
    %v1351 = vand.u32 %v1350, 4294901760
    %1352 = vmatpush1.msra.mxu0 %v1351
    %v1353 = vand.u32 %v160, 4294901760
    %v1354 = vsub.f32 %v160, %v1353
    %v1355 = vand.u32 %v1354, 4294901760
    %1356 = vmatprep.subr.mxu0 %v1355
    %v1357 = vand.u32 %v159, 4294901760
    %v1358 = vsub.f32 %v159, %v1357
    %v1359 = vand.u32 %v1358, 4294901760
    %1360 = vmatpush1.msra.mxu0 %v1359
    %1361 = vmatprep.subr.mxu0 0.0
    %1362 = vmatpush1.msra.mxu0 0.0
    %1363 = vmatprep.subr.mxu0 0.0
    %1364 = vmatpush1.msra.mxu0 0.0
    %1365 = vmatprep.subr.mxu0 0.0
    %1366 = vmatpush1.msra.mxu0 0.0
    %1367 = vmatprep.subr.mxu0 0.0
    %1368 = vmatpush1.msra.mxu0 0.0
    %1369 = vmatprep.subr.mxu0 0.0
    %1370 = vmatpush1.msra.mxu0 0.0
    %1371 = vmatprep.subr.mxu0 0.0
    %1372 = vmatpush1.msra.mxu0 0.0
    %1373 = vmatprep.subr.mxu0 0.0
    %1374 = vmatpush1.msra.mxu0 0.0
    %1375 = vmatprep.subr.mxu0 0.0
    %1376 = vmatpush1.msra.mxu0 0.0
    %1377 = vmatprep.subr.mxu0 0.0
    %1378 = vmatpush1.msra.mxu0 0.0
    %1379 = vmatprep.subr.mxu0 0.0
    %1380 = vmatpush1.msra.mxu0 0.0
    %1381 = vmatprep.subr.mxu0 0.0
    %1382 = vmatpush1.msra.mxu0 0.0
    %1383 = vmatprep.subr.mxu0 0.0
    %1384 = vmatpush1.msra.mxu0 0.0
    %1385 = vmatprep.subr.mxu0 0.0
    %1386 = vmatpush1.msra.mxu0 0.0
    %1387 = vmatprep.subr.mxu0 0.0
    %1388 = vmatpush1.msra.mxu0 0.0
    %1389 = vmatprep.subr.mxu0 0.0
    %1390 = vmatpush1.msra.mxu0 0.0
    %1391 = vmatprep.subr.mxu0 0.0
    %1392 = vmatpush1.msra.mxu0 0.0
    %1393 = vmatprep.subr.mxu0 0.0
    %1394 = vmatpush1.msra.mxu0 0.0
    %1395 = vmatprep.subr.mxu0 0.0
    %1396 = vmatpush1.msra.mxu0 0.0
    %1397 = vmatprep.subr.mxu0 0.0
    %1398 = vmatpush1.msra.mxu0 0.0
    %1399 = vmatprep.subr.mxu0 0.0
    %1400 = vmatpush1.msra.mxu0 0.0
    %1401 = vmatprep.subr.mxu0 0.0
    %1402 = vmatpush1.msra.mxu0 0.0
    %1403 = vmatprep.subr.mxu0 0.0
    %1404 = vmatpush1.msra.mxu0 0.0
    %1405 = vmatprep.subr.mxu0 0.0
    %1406 = vmatpush1.msra.mxu0 0.0
    %1407 = vmatprep.subr.mxu0 0.0
    %1408 = vmatpush1.msra.mxu0 0.0
    %1409 = vmatprep.mubr.f32.mxu0 0.0
    %v1410 = vand.u32 %v856, 4294901760
    %1411 = vmatmul.mubr.f32.gmra.mrb[0].mxu0 %v1410
    %v1412 = vpop.f32.mrb[0].mxu0
    %v1413 = vadd.f32 %v1293, %v1412
    %v1414 = vpop.f32.mrb[0].mxu0
    %v1415 = vadd.f32 %v1295, %v1414
    %1416 = vdwg.mxu0
    %v1417 = vand.u32 %v146, 4294901760
    %1418 = vmatprep.subr.mxu0 %v1417
    %v1419 = vand.u32 %v145, 4294901760
    %1420 = vmatpush1.msra.mxu0 %v1419
    %v1421 = vand.u32 %v148, 4294901760
    %1422 = vmatprep.subr.mxu0 %v1421
    %v1423 = vand.u32 %v147, 4294901760
    %1424 = vmatpush1.msra.mxu0 %v1423
    %v1425 = vand.u32 %v150, 4294901760
    %1426 = vmatprep.subr.mxu0 %v1425
    %v1427 = vand.u32 %v149, 4294901760
    %1428 = vmatpush1.msra.mxu0 %v1427
    %v1429 = vand.u32 %v152, 4294901760
    %1430 = vmatprep.subr.mxu0 %v1429
    %v1431 = vand.u32 %v151, 4294901760
    %1432 = vmatpush1.msra.mxu0 %v1431
    %v1433 = vand.u32 %v154, 4294901760
    %1434 = vmatprep.subr.mxu0 %v1433
    %v1435 = vand.u32 %v153, 4294901760
    %1436 = vmatpush1.msra.mxu0 %v1435
    %v1437 = vand.u32 %v156, 4294901760
    %1438 = vmatprep.subr.mxu0 %v1437
    %v1439 = vand.u32 %v155, 4294901760
    %1440 = vmatpush1.msra.mxu0 %v1439
    %v1441 = vand.u32 %v158, 4294901760
    %1442 = vmatprep.subr.mxu0 %v1441
    %v1443 = vand.u32 %v157, 4294901760
    %1444 = vmatpush1.msra.mxu0 %v1443
    %v1445 = vand.u32 %v160, 4294901760
    %1446 = vmatprep.subr.mxu0 %v1445
    %v1447 = vand.u32 %v159, 4294901760
    %1448 = vmatpush1.msra.mxu0 %v1447
    %1449 = vmatprep.subr.mxu0 0.0
    %1450 = vmatpush1.msra.mxu0 0.0
    %1451 = vmatprep.subr.mxu0 0.0
    %1452 = vmatpush1.msra.mxu0 0.0
    %1453 = vmatprep.subr.mxu0 0.0
    %1454 = vmatpush1.msra.mxu0 0.0
    %1455 = vmatprep.subr.mxu0 0.0
    %1456 = vmatpush1.msra.mxu0 0.0
    %1457 = vmatprep.subr.mxu0 0.0
    %1458 = vmatpush1.msra.mxu0 0.0
    %1459 = vmatprep.subr.mxu0 0.0
    %1460 = vmatpush1.msra.mxu0 0.0
    %1461 = vmatprep.subr.mxu0 0.0
    %1462 = vmatpush1.msra.mxu0 0.0
    %1463 = vmatprep.subr.mxu0 0.0
    %1464 = vmatpush1.msra.mxu0 0.0
    %1465 = vmatprep.subr.mxu0 0.0
    %1466 = vmatpush1.msra.mxu0 0.0
    %1467 = vmatprep.subr.mxu0 0.0
    %1468 = vmatpush1.msra.mxu0 0.0
    %1469 = vmatprep.subr.mxu0 0.0
    %1470 = vmatpush1.msra.mxu0 0.0
    %1471 = vmatprep.subr.mxu0 0.0
    %1472 = vmatpush1.msra.mxu0 0.0
    %1473 = vmatprep.subr.mxu0 0.0
    %1474 = vmatpush1.msra.mxu0 0.0
    %1475 = vmatprep.subr.mxu0 0.0
    %1476 = vmatpush1.msra.mxu0 0.0
    %1477 = vmatprep.subr.mxu0 0.0
    %1478 = vmatpush1.msra.mxu0 0.0
    %1479 = vmatprep.subr.mxu0 0.0
    %1480 = vmatpush1.msra.mxu0 0.0
    %1481 = vmatprep.subr.mxu0 0.0
    %1482 = vmatpush1.msra.mxu0 0.0
    %1483 = vmatprep.subr.mxu0 0.0
    %1484 = vmatpush1.msra.mxu0 0.0
    %1485 = vmatprep.subr.mxu0 0.0
    %1486 = vmatpush1.msra.mxu0 0.0
    %1487 = vmatprep.subr.mxu0 0.0
    %1488 = vmatpush1.msra.mxu0 0.0
    %1489 = vmatprep.subr.mxu0 0.0
    %1490 = vmatpush1.msra.mxu0 0.0
    %1491 = vmatprep.subr.mxu0 0.0
    %1492 = vmatpush1.msra.mxu0 0.0
    %1493 = vmatprep.subr.mxu0 0.0
    %1494 = vmatpush1.msra.mxu0 0.0
    %1495 = vmatprep.subr.mxu0 0.0
    %1496 = vmatpush1.msra.mxu0 0.0
    %1497 = vmatprep.mubr.f32.mxu0 0.0
    %v1498 = vand.u32 %v856, 4294901760
    %1499 = vmatmul.mubr.f32.gmra.mrb[0].mxu0 %v1498
    %v1500 = vpop.f32.mrb[0].mxu0
    %v1501 = vadd.f32 %v1413, %v1500
    %v1502 = vpop.f32.mrb[0].mxu0
    %v1503 = vadd.f32 %v1415, %v1502
    %1504 = vdwg.mxu0
    %v1505 = vadd.f32 %v855, %v1501
    %v1506 = vxor.u32 %v1505, 2147483648
    %v1507 = vmul.f32 %v1506, 1.442695
    %v1508 = vpow.pop %v1507
    %v1509 = vadd.f32 %v1508, 1.0
    %v1510 = vrcp.pop %v1509
    %v1511 = vmul.f32 1.0, %v1510
    %v1512 = vadd.f32 %v1503, %v825
    %v1513 = vmul.f32 %v1511, %v1512
    %v1515 = vrot.slane %v855, 1
    %v1517 = vadd.f32 %v1515, %v1513
    %v1518 = vtanh.pop %v1517
    %v1519 = vsub.f32 1.0, %v1511
    %1521 = vrot.lane.b32.xlu0 %v1518, 64
    %v1522 = vpop.permute.xlu0 %1521
    %v1524 = vmul.f32 %v1519, %v1522
    %v1525 = vmul.f32 %v1511, %v841
    %v1526 = vadd.f32 %v1524, %v1525
    %v1528 = vlaneseq
    %v1529 = vshrl.u32 %v1528, 7
    %v1530 = vsub.s32 0, %v1529
    %v1531 = vrot.slane %v1526, %v1530
    %1532 = vrot.lane.b32.xlu0 %v1531, 64
    %v1533 = vpop.permute.xlu0 %1532
    %1535 = vst.msk [vmem:[#allocation3 + $0x1] sm:$0x1] %vm850, %v1533
    %1536 = vst.msk [vmem:[#allocation3 + $0x6] sm:$0x1] %vm852, %v1533
    %s1537 = scalar_lea.vmem [#allocation2], 2
    %v1538 = vld [vmem:[%s1537] ss:$8 sm:$0x3]
    %v1539 = vsel %vm143, %v1533, 0
    %v1541 = vand.u32 %v146, 4294901760
    %1542 = vmatprep.subr.mxu0 %v1541
    %v1543 = vand.u32 %v145, 4294901760
    %1544 = vmatpush1.msra.mxu0 %v1543
    %v1545 = vand.u32 %v148, 4294901760
    %1546 = vmatprep.subr.mxu0 %v1545
    %v1547 = vand.u32 %v147, 4294901760
    %1548 = vmatpush1.msra.mxu0 %v1547
    %v1549 = vand.u32 %v150, 4294901760
    %1550 = vmatprep.subr.mxu0 %v1549
    %v1551 = vand.u32 %v149, 4294901760
    %1552 = vmatpush1.msra.mxu0 %v1551
    %v1553 = vand.u32 %v152, 4294901760
    %1554 = vmatprep.subr.mxu0 %v1553
    %v1555 = vand.u32 %v151, 4294901760
    %1556 = vmatpush1.msra.mxu0 %v1555
    %v1557 = vand.u32 %v154, 4294901760
    %1558 = vmatprep.subr.mxu0 %v1557
    %v1559 = vand.u32 %v153, 4294901760
    %1560 = vmatpush1.msra.mxu0 %v1559
    %v1561 = vand.u32 %v156, 4294901760
    %1562 = vmatprep.subr.mxu0 %v1561
    %v1563 = vand.u32 %v155, 4294901760
    %1564 = vmatpush1.msra.mxu0 %v1563
    %v1565 = vand.u32 %v158, 4294901760
    %1566 = vmatprep.subr.mxu0 %v1565
    %v1567 = vand.u32 %v157, 4294901760
    %1568 = vmatpush1.msra.mxu0 %v1567
    %v1569 = vand.u32 %v160, 4294901760
    %1570 = vmatprep.subr.mxu0 %v1569
    %v1571 = vand.u32 %v159, 4294901760
    %1572 = vmatpush1.msra.mxu0 %v1571
    %1573 = vmatprep.subr.mxu0 0.0
    %1574 = vmatpush1.msra.mxu0 0.0
    %1575 = vmatprep.subr.mxu0 0.0
    %1576 = vmatpush1.msra.mxu0 0.0
    %1577 = vmatprep.subr.mxu0 0.0
    %1578 = vmatpush1.msra.mxu0 0.0
    %1579 = vmatprep.subr.mxu0 0.0
    %1580 = vmatpush1.msra.mxu0 0.0
    %1581 = vmatprep.subr.mxu0 0.0
    %1582 = vmatpush1.msra.mxu0 0.0
    %1583 = vmatprep.subr.mxu0 0.0
    %1584 = vmatpush1.msra.mxu0 0.0
    %1585 = vmatprep.subr.mxu0 0.0
    %1586 = vmatpush1.msra.mxu0 0.0
    %1587 = vmatprep.subr.mxu0 0.0
    %1588 = vmatpush1.msra.mxu0 0.0
    %1589 = vmatprep.subr.mxu0 0.0
    %1590 = vmatpush1.msra.mxu0 0.0
    %1591 = vmatprep.subr.mxu0 0.0
    %1592 = vmatpush1.msra.mxu0 0.0
    %1593 = vmatprep.subr.mxu0 0.0
    %1594 = vmatpush1.msra.mxu0 0.0
    %1595 = vmatprep.subr.mxu0 0.0
    %1596 = vmatpush1.msra.mxu0 0.0
    %1597 = vmatprep.subr.mxu0 0.0
    %1598 = vmatpush1.msra.mxu0 0.0
    %1599 = vmatprep.subr.mxu0 0.0
    %1600 = vmatpush1.msra.mxu0 0.0
    %1601 = vmatprep.subr.mxu0 0.0
    %1602 = vmatpush1.msra.mxu0 0.0
    %1603 = vmatprep.subr.mxu0 0.0
    %1604 = vmatpush1.msra.mxu0 0.0
    %1605 = vmatprep.subr.mxu0 0.0
    %1606 = vmatpush1.msra.mxu0 0.0
    %1607 = vmatprep.subr.mxu0 0.0
    %1608 = vmatpush1.msra.mxu0 0.0
    %1609 = vmatprep.subr.mxu0 0.0
    %1610 = vmatpush1.msra.mxu0 0.0
    %1611 = vmatprep.subr.mxu0 0.0
    %1612 = vmatpush1.msra.mxu0 0.0
    %1613 = vmatprep.subr.mxu0 0.0
    %1614 = vmatpush1.msra.mxu0 0.0
    %1615 = vmatprep.subr.mxu0 0.0
    %1616 = vmatpush1.msra.mxu0 0.0
    %1617 = vmatprep.subr.mxu0 0.0
    %1618 = vmatpush1.msra.mxu0 0.0
    %1619 = vmatprep.subr.mxu0 0.0
    %1620 = vmatpush1.msra.mxu0 0.0
    %1621 = vmatprep.mubr.f32.mxu0 0.0
    %v1622 = vand.u32 %v1539, 4294901760
    %v1623 = vsub.f32 %v1539, %v1622
    %v1624 = vand.u32 %v1623, 4294901760
    %v1625 = vsub.f32 %v1623, %v1624
    %v1626 = vand.u32 %v1625, 4294901760
    %1627 = vmatmul.mubr.f32.gmra.mrb[0].mxu0 %v1626
    %v1628 = vpop.f32.mrb[0].mxu0
    %v1629 = vadd.f32 0.0, %v1628
    %v1630 = vpop.f32.mrb[0].mxu0
    %v1631 = vadd.f32 0.0, %v1630
    %1632 = vdwg.mxu0
    %v1633 = vand.u32 %v146, 4294901760
    %v1634 = vsub.f32 %v146, %v1633
    %v1635 = vand.u32 %v1634, 4294901760
    %v1636 = vsub.f32 %v1634, %v1635
    %v1637 = vand.u32 %v1636, 4294901760
    %1638 = vmatprep.subr.mxu0 %v1637
    %v1639 = vand.u32 %v145, 4294901760
    %v1640 = vsub.f32 %v145, %v1639
    %v1641 = vand.u32 %v1640, 4294901760
    %v1642 = vsub.f32 %v1640, %v1641
    %v1643 = vand.u32 %v1642, 4294901760
    %1644 = vmatpush1.msra.mxu0 %v1643
    %v1645 = vand.u32 %v148, 4294901760
    %v1646 = vsub.f32 %v148, %v1645
    %v1647 = vand.u32 %v1646, 4294901760
    %v1648 = vsub.f32 %v1646, %v1647
    %v1649 = vand.u32 %v1648, 4294901760
    %1650 = vmatprep.subr.mxu0 %v1649
    %v1651 = vand.u32 %v147, 4294901760
    %v1652 = vsub.f32 %v147, %v1651
    %v1653 = vand.u32 %v1652, 4294901760
    %v1654 = vsub.f32 %v1652, %v1653
    %v1655 = vand.u32 %v1654, 4294901760
    %1656 = vmatpush1.msra.mxu0 %v1655
    %v1657 = vand.u32 %v150, 4294901760
    %v1658 = vsub.f32 %v150, %v1657
    %v1659 = vand.u32 %v1658, 4294901760
    %v1660 = vsub.f32 %v1658, %v1659
    %v1661 = vand.u32 %v1660, 4294901760
    %1662 = vmatprep.subr.mxu0 %v1661
    %v1663 = vand.u32 %v149, 4294901760
    %v1664 = vsub.f32 %v149, %v1663
    %v1665 = vand.u32 %v1664, 4294901760
    %v1666 = vsub.f32 %v1664, %v1665
    %v1667 = vand.u32 %v1666, 4294901760
    %1668 = vmatpush1.msra.mxu0 %v1667
    %v1669 = vand.u32 %v152, 4294901760
    %v1670 = vsub.f32 %v152, %v1669
    %v1671 = vand.u32 %v1670, 4294901760
    %v1672 = vsub.f32 %v1670, %v1671
    %v1673 = vand.u32 %v1672, 4294901760
    %1674 = vmatprep.subr.mxu0 %v1673
    %v1675 = vand.u32 %v151, 4294901760
    %v1676 = vsub.f32 %v151, %v1675
    %v1677 = vand.u32 %v1676, 4294901760
    %v1678 = vsub.f32 %v1676, %v1677
    %v1679 = vand.u32 %v1678, 4294901760
    %1680 = vmatpush1.msra.mxu0 %v1679
    %v1681 = vand.u32 %v154, 4294901760
    %v1682 = vsub.f32 %v154, %v1681
    %v1683 = vand.u32 %v1682, 4294901760
    %v1684 = vsub.f32 %v1682, %v1683
    %v1685 = vand.u32 %v1684, 4294901760
    %1686 = vmatprep.subr.mxu0 %v1685
    %v1687 = vand.u32 %v153, 4294901760
    %v1688 = vsub.f32 %v153, %v1687
    %v1689 = vand.u32 %v1688, 4294901760
    %v1690 = vsub.f32 %v1688, %v1689
    %v1691 = vand.u32 %v1690, 4294901760
    %1692 = vmatpush1.msra.mxu0 %v1691
    %v1693 = vand.u32 %v156, 4294901760
    %v1694 = vsub.f32 %v156, %v1693
    %v1695 = vand.u32 %v1694, 4294901760
    %v1696 = vsub.f32 %v1694, %v1695
    %v1697 = vand.u32 %v1696, 4294901760
    %1698 = vmatprep.subr.mxu0 %v1697
    %v1699 = vand.u32 %v155, 4294901760
    %v1700 = vsub.f32 %v155, %v1699
    %v1701 = vand.u32 %v1700, 4294901760
    %v1702 = vsub.f32 %v1700, %v1701
    %v1703 = vand.u32 %v1702, 4294901760
    %1704 = vmatpush1.msra.mxu0 %v1703
    %v1705 = vand.u32 %v158, 4294901760
    %v1706 = vsub.f32 %v158, %v1705
    %v1707 = vand.u32 %v1706, 4294901760
    %v1708 = vsub.f32 %v1706, %v1707
    %v1709 = vand.u32 %v1708, 4294901760
    %1710 = vmatprep.subr.mxu0 %v1709
    %v1711 = vand.u32 %v157, 4294901760
    %v1712 = vsub.f32 %v157, %v1711
    %v1713 = vand.u32 %v1712, 4294901760
    %v1714 = vsub.f32 %v1712, %v1713
    %v1715 = vand.u32 %v1714, 4294901760
    %1716 = vmatpush1.msra.mxu0 %v1715
    %v1717 = vand.u32 %v160, 4294901760
    %v1718 = vsub.f32 %v160, %v1717
    %v1719 = vand.u32 %v1718, 4294901760
    %v1720 = vsub.f32 %v1718, %v1719
    %v1721 = vand.u32 %v1720, 4294901760
    %1722 = vmatprep.subr.mxu0 %v1721
    %v1723 = vand.u32 %v159, 4294901760
    %v1724 = vsub.f32 %v159, %v1723
    %v1725 = vand.u32 %v1724, 4294901760
    %v1726 = vsub.f32 %v1724, %v1725
    %v1727 = vand.u32 %v1726, 4294901760
    %1728 = vmatpush1.msra.mxu0 %v1727
    %1729 = vmatprep.subr.mxu0 0.0
    %1730 = vmatpush1.msra.mxu0 0.0
    %1731 = vmatprep.subr.mxu0 0.0
    %1732 = vmatpush1.msra.mxu0 0.0
    %1733 = vmatprep.subr.mxu0 0.0
    %1734 = vmatpush1.msra.mxu0 0.0
    %1735 = vmatprep.subr.mxu0 0.0
    %1736 = vmatpush1.msra.mxu0 0.0
    %1737 = vmatprep.subr.mxu0 0.0
    %1738 = vmatpush1.msra.mxu0 0.0
    %1739 = vmatprep.subr.mxu0 0.0
    %1740 = vmatpush1.msra.mxu0 0.0
    %1741 = vmatprep.subr.mxu0 0.0
    %1742 = vmatpush1.msra.mxu0 0.0
    %1743 = vmatprep.subr.mxu0 0.0
    %1744 = vmatpush1.msra.mxu0 0.0
    %1745 = vmatprep.subr.mxu0 0.0
    %1746 = vmatpush1.msra.mxu0 0.0
    %1747 = vmatprep.subr.mxu0 0.0
    %1748 = vmatpush1.msra.mxu0 0.0
    %1749 = vmatprep.subr.mxu0 0.0
    %1750 = vmatpush1.msra.mxu0 0.0
    %1751 = vmatprep.subr.mxu0 0.0
    %1752 = vmatpush1.msra.mxu0 0.0
    %1753 = vmatprep.subr.mxu0 0.0
    %1754 = vmatpush1.msra.mxu0 0.0
    %1755 = vmatprep.subr.mxu0 0.0
    %1756 = vmatpush1.msra.mxu0 0.0
    %1757 = vmatprep.subr.mxu0 0.0
    %1758 = vmatpush1.msra.mxu0 0.0
    %1759 = vmatprep.subr.mxu0 0.0
    %1760 = vmatpush1.msra.mxu0 0.0
    %1761 = vmatprep.subr.mxu0 0.0
    %1762 = vmatpush1.msra.mxu0 0.0
    %1763 = vmatprep.subr.mxu0 0.0
    %1764 = vmatpush1.msra.mxu0 0.0
    %1765 = vmatprep.subr.mxu0 0.0
    %1766 = vmatpush1.msra.mxu0 0.0
    %1767 = vmatprep.subr.mxu0 0.0
    %1768 = vmatpush1.msra.mxu0 0.0
    %1769 = vmatprep.subr.mxu0 0.0
    %1770 = vmatpush1.msra.mxu0 0.0
    %1771 = vmatprep.subr.mxu0 0.0
    %1772 = vmatpush1.msra.mxu0 0.0
    %1773 = vmatprep.subr.mxu0 0.0
    %1774 = vmatpush1.msra.mxu0 0.0
    %1775 = vmatprep.subr.mxu0 0.0
    %1776 = vmatpush1.msra.mxu0 0.0
    %1777 = vmatprep.mubr.f32.mxu0 0.0
    %v1778 = vand.u32 %v1539, 4294901760
    %1779 = vmatmul.mubr.f32.gmra.mrb[0].mxu0 %v1778
    %v1780 = vpop.f32.mrb[0].mxu0
    %v1781 = vadd.f32 %v1629, %v1780
    %v1782 = vpop.f32.mrb[0].mxu0
    %v1783 = vadd.f32 %v1631, %v1782
    %1784 = vdwg.mxu0
    %v1785 = vand.u32 %v146, 4294901760
    %v1786 = vsub.f32 %v146, %v1785
    %1787 = vmatprep.subr.mxu0 %v1786
    %v1788 = vand.u32 %v145, 4294901760
    %v1789 = vsub.f32 %v145, %v1788
    %1790 = vmatpush1.msra.mxu0 %v1789
    %v1791 = vand.u32 %v148, 4294901760
    %v1792 = vsub.f32 %v148, %v1791
    %1793 = vmatprep.subr.mxu0 %v1792
    %v1794 = vand.u32 %v147, 4294901760
    %v1795 = vsub.f32 %v147, %v1794
    %1796 = vmatpush1.msra.mxu0 %v1795
    %v1797 = vand.u32 %v150, 4294901760
    %v1798 = vsub.f32 %v150, %v1797
    %1799 = vmatprep.subr.mxu0 %v1798
    %v1800 = vand.u32 %v149, 4294901760
    %v1801 = vsub.f32 %v149, %v1800
    %1802 = vmatpush1.msra.mxu0 %v1801
    %v1803 = vand.u32 %v152, 4294901760
    %v1804 = vsub.f32 %v152, %v1803
    %1805 = vmatprep.subr.mxu0 %v1804
    %v1806 = vand.u32 %v151, 4294901760
    %v1807 = vsub.f32 %v151, %v1806
    %1808 = vmatpush1.msra.mxu0 %v1807
    %v1809 = vand.u32 %v154, 4294901760
    %v1810 = vsub.f32 %v154, %v1809
    %1811 = vmatprep.subr.mxu0 %v1810
    %v1812 = vand.u32 %v153, 4294901760
    %v1813 = vsub.f32 %v153, %v1812
    %1814 = vmatpush1.msra.mxu0 %v1813
    %v1815 = vand.u32 %v156, 4294901760
    %v1816 = vsub.f32 %v156, %v1815
    %1817 = vmatprep.subr.mxu0 %v1816
    %v1818 = vand.u32 %v155, 4294901760
    %v1819 = vsub.f32 %v155, %v1818
    %1820 = vmatpush1.msra.mxu0 %v1819
    %v1821 = vand.u32 %v158, 4294901760
    %v1822 = vsub.f32 %v158, %v1821
    %1823 = vmatprep.subr.mxu0 %v1822
    %v1824 = vand.u32 %v157, 4294901760
    %v1825 = vsub.f32 %v157, %v1824
    %1826 = vmatpush1.msra.mxu0 %v1825
    %v1827 = vand.u32 %v160, 4294901760
    %v1828 = vsub.f32 %v160, %v1827
    %1829 = vmatprep.subr.mxu0 %v1828
    %v1830 = vand.u32 %v159, 4294901760
    %v1831 = vsub.f32 %v159, %v1830
    %1832 = vmatpush1.msra.mxu0 %v1831
    %1833 = vmatprep.subr.mxu0 0.0
    %1834 = vmatpush1.msra.mxu0 0.0
    %1835 = vmatprep.subr.mxu0 0.0
    %1836 = vmatpush1.msra.mxu0 0.0
    %1837 = vmatprep.subr.mxu0 0.0
    %1838 = vmatpush1.msra.mxu0 0.0
    %1839 = vmatprep.subr.mxu0 0.0
    %1840 = vmatpush1.msra.mxu0 0.0
    %1841 = vmatprep.subr.mxu0 0.0
    %1842 = vmatpush1.msra.mxu0 0.0
    %1843 = vmatprep.subr.mxu0 0.0
    %1844 = vmatpush1.msra.mxu0 0.0
    %1845 = vmatprep.subr.mxu0 0.0
    %1846 = vmatpush1.msra.mxu0 0.0
    %1847 = vmatprep.subr.mxu0 0.0
    %1848 = vmatpush1.msra.mxu0 0.0
    %1849 = vmatprep.subr.mxu0 0.0
    %1850 = vmatpush1.msra.mxu0 0.0
    %1851 = vmatprep.subr.mxu0 0.0
    %1852 = vmatpush1.msra.mxu0 0.0
    %1853 = vmatprep.subr.mxu0 0.0
    %1854 = vmatpush1.msra.mxu0 0.0
    %1855 = vmatprep.subr.mxu0 0.0
    %1856 = vmatpush1.msra.mxu0 0.0
    %1857 = vmatprep.subr.mxu0 0.0
    %1858 = vmatpush1.msra.mxu0 0.0
    %1859 = vmatprep.subr.mxu0 0.0
    %1860 = vmatpush1.msra.mxu0 0.0
    %1861 = vmatprep.subr.mxu0 0.0
    %1862 = vmatpush1.msra.mxu0 0.0
    %1863 = vmatprep.subr.mxu0 0.0
    %1864 = vmatpush1.msra.mxu0 0.0
    %1865 = vmatprep.subr.mxu0 0.0
    %1866 = vmatpush1.msra.mxu0 0.0
    %1867 = vmatprep.subr.mxu0 0.0
    %1868 = vmatpush1.msra.mxu0 0.0
    %1869 = vmatprep.subr.mxu0 0.0
    %1870 = vmatpush1.msra.mxu0 0.0
    %1871 = vmatprep.subr.mxu0 0.0
    %1872 = vmatpush1.msra.mxu0 0.0
    %1873 = vmatprep.subr.mxu0 0.0
    %1874 = vmatpush1.msra.mxu0 0.0
    %1875 = vmatprep.subr.mxu0 0.0
    %1876 = vmatpush1.msra.mxu0 0.0
    %1877 = vmatprep.subr.mxu0 0.0
    %1878 = vmatpush1.msra.mxu0 0.0
    %1879 = vmatprep.subr.mxu0 0.0
    %1880 = vmatpush1.msra.mxu0 0.0
    %1881 = vmatprep.mubr.f32.mxu0 0.0
    %v1882 = vand.u32 %v1539, 4294901760
    %v1883 = vsub.f32 %v1539, %v1882
    %1884 = vmatmul.mubr.f32.gmra.mrb[0].mxu0 %v1883
    %v1885 = vpop.f32.mrb[0].mxu0
    %v1886 = vadd.f32 %v1781, %v1885
    %v1887 = vpop.f32.mrb[0].mxu0
    %v1888 = vadd.f32 %v1783, %v1887
    %1889 = vdwg.mxu0
    %v1890 = vand.u32 %v146, 4294901760
    %1891 = vmatprep.subr.mxu0 %v1890
    %v1892 = vand.u32 %v145, 4294901760
    %1893 = vmatpush1.msra.mxu0 %v1892
    %v1894 = vand.u32 %v148, 4294901760
    %1895 = vmatprep.subr.mxu0 %v1894
    %v1896 = vand.u32 %v147, 4294901760
    %1897 = vmatpush1.msra.mxu0 %v1896
    %v1898 = vand.u32 %v150, 4294901760
    %1899 = vmatprep.subr.mxu0 %v1898
    %v1900 = vand.u32 %v149, 4294901760
    %1901 = vmatpush1.msra.mxu0 %v1900
    %v1902 = vand.u32 %v152, 4294901760
    %1903 = vmatprep.subr.mxu0 %v1902
    %v1904 = vand.u32 %v151, 4294901760
    %1905 = vmatpush1.msra.mxu0 %v1904
    %v1906 = vand.u32 %v154, 4294901760
    %1907 = vmatprep.subr.mxu0 %v1906
    %v1908 = vand.u32 %v153, 4294901760
    %1909 = vmatpush1.msra.mxu0 %v1908
    %v1910 = vand.u32 %v156, 4294901760
    %1911 = vmatprep.subr.mxu0 %v1910
    %v1912 = vand.u32 %v155, 4294901760
    %1913 = vmatpush1.msra.mxu0 %v1912
    %v1914 = vand.u32 %v158, 4294901760
    %1915 = vmatprep.subr.mxu0 %v1914
    %v1916 = vand.u32 %v157, 4294901760
    %1917 = vmatpush1.msra.mxu0 %v1916
    %v1918 = vand.u32 %v160, 4294901760
    %1919 = vmatprep.subr.mxu0 %v1918
    %v1920 = vand.u32 %v159, 4294901760
    %1921 = vmatpush1.msra.mxu0 %v1920
    %1922 = vmatprep.subr.mxu0 0.0
    %1923 = vmatpush1.msra.mxu0 0.0
    %1924 = vmatprep.subr.mxu0 0.0
    %1925 = vmatpush1.msra.mxu0 0.0
    %1926 = vmatprep.subr.mxu0 0.0
    %1927 = vmatpush1.msra.mxu0 0.0
    %1928 = vmatprep.subr.mxu0 0.0
    %1929 = vmatpush1.msra.mxu0 0.0
    %1930 = vmatprep.subr.mxu0 0.0
    %1931 = vmatpush1.msra.mxu0 0.0
    %1932 = vmatprep.subr.mxu0 0.0
    %1933 = vmatpush1.msra.mxu0 0.0
    %1934 = vmatprep.subr.mxu0 0.0
    %1935 = vmatpush1.msra.mxu0 0.0
    %1936 = vmatprep.subr.mxu0 0.0
    %1937 = vmatpush1.msra.mxu0 0.0
    %1938 = vmatprep.subr.mxu0 0.0
    %1939 = vmatpush1.msra.mxu0 0.0
    %1940 = vmatprep.subr.mxu0 0.0
    %1941 = vmatpush1.msra.mxu0 0.0
    %1942 = vmatprep.subr.mxu0 0.0
    %1943 = vmatpush1.msra.mxu0 0.0
    %1944 = vmatprep.subr.mxu0 0.0
    %1945 = vmatpush1.msra.mxu0 0.0
    %1946 = vmatprep.subr.mxu0 0.0
    %1947 = vmatpush1.msra.mxu0 0.0
    %1948 = vmatprep.subr.mxu0 0.0
    %1949 = vmatpush1.msra.mxu0 0.0
    %1950 = vmatprep.subr.mxu0 0.0
    %1951 = vmatpush1.msra.mxu0 0.0
    %1952 = vmatprep.subr.mxu0 0.0
    %1953 = vmatpush1.msra.mxu0 0.0
    %1954 = vmatprep.subr.mxu0 0.0
    %1955 = vmatpush1.msra.mxu0 0.0
    %1956 = vmatprep.subr.mxu0 0.0
    %1957 = vmatpush1.msra.mxu0 0.0
    %1958 = vmatprep.subr.mxu0 0.0
    %1959 = vmatpush1.msra.mxu0 0.0
    %1960 = vmatprep.subr.mxu0 0.0
    %1961 = vmatpush1.msra.mxu0 0.0
    %1962 = vmatprep.subr.mxu0 0.0
    %1963 = vmatpush1.msra.mxu0 0.0
    %1964 = vmatprep.subr.mxu0 0.0
    %1965 = vmatpush1.msra.mxu0 0.0
    %1966 = vmatprep.subr.mxu0 0.0
    %1967 = vmatpush1.msra.mxu0 0.0
    %1968 = vmatprep.subr.mxu0 0.0
    %1969 = vmatpush1.msra.mxu0 0.0
    %1970 = vmatprep.mubr.f32.mxu0 0.0
    %v1971 = vand.u32 %v1539, 4294901760
    %v1972 = vsub.f32 %v1539, %v1971
    %v1973 = vand.u32 %v1972, 4294901760
    %1974 = vmatmul.mubr.f32.gmra.mrb[0].mxu0 %v1973
    %v1975 = vpop.f32.mrb[0].mxu0
    %v1976 = vadd.f32 %v1886, %v1975
    %v1977 = vpop.f32.mrb[0].mxu0
    %v1978 = vadd.f32 %v1888, %v1977
    %1979 = vdwg.mxu0
    %v1980 = vand.u32 %v146, 4294901760
    %v1981 = vsub.f32 %v146, %v1980
    %v1982 = vand.u32 %v1981, 4294901760
    %1983 = vmatprep.subr.mxu0 %v1982
    %v1984 = vand.u32 %v145, 4294901760
    %v1985 = vsub.f32 %v145, %v1984
    %v1986 = vand.u32 %v1985, 4294901760
    %1987 = vmatpush1.msra.mxu0 %v1986
    %v1988 = vand.u32 %v148, 4294901760
    %v1989 = vsub.f32 %v148, %v1988
    %v1990 = vand.u32 %v1989, 4294901760
    %1991 = vmatprep.subr.mxu0 %v1990
    %v1992 = vand.u32 %v147, 4294901760
    %v1993 = vsub.f32 %v147, %v1992
    %v1994 = vand.u32 %v1993, 4294901760
    %1995 = vmatpush1.msra.mxu0 %v1994
    %v1996 = vand.u32 %v150, 4294901760
    %v1997 = vsub.f32 %v150, %v1996
    %v1998 = vand.u32 %v1997, 4294901760
    %1999 = vmatprep.subr.mxu0 %v1998
    %v2000 = vand.u32 %v149, 4294901760
    %v2001 = vsub.f32 %v149, %v2000
    %v2002 = vand.u32 %v2001, 4294901760
    %2003 = vmatpush1.msra.mxu0 %v2002
    %v2004 = vand.u32 %v152, 4294901760
    %v2005 = vsub.f32 %v152, %v2004
    %v2006 = vand.u32 %v2005, 4294901760
    %2007 = vmatprep.subr.mxu0 %v2006
    %v2008 = vand.u32 %v151, 4294901760
    %v2009 = vsub.f32 %v151, %v2008
    %v2010 = vand.u32 %v2009, 4294901760
    %2011 = vmatpush1.msra.mxu0 %v2010
    %v2012 = vand.u32 %v154, 4294901760
    %v2013 = vsub.f32 %v154, %v2012
    %v2014 = vand.u32 %v2013, 4294901760
    %2015 = vmatprep.subr.mxu0 %v2014
    %v2016 = vand.u32 %v153, 4294901760
    %v2017 = vsub.f32 %v153, %v2016
    %v2018 = vand.u32 %v2017, 4294901760
    %2019 = vmatpush1.msra.mxu0 %v2018
    %v2020 = vand.u32 %v156, 4294901760
    %v2021 = vsub.f32 %v156, %v2020
    %v2022 = vand.u32 %v2021, 4294901760
    %2023 = vmatprep.subr.mxu0 %v2022
    %v2024 = vand.u32 %v155, 4294901760
    %v2025 = vsub.f32 %v155, %v2024
    %v2026 = vand.u32 %v2025, 4294901760
    %2027 = vmatpush1.msra.mxu0 %v2026
    %v2028 = vand.u32 %v158, 4294901760
    %v2029 = vsub.f32 %v158, %v2028
    %v2030 = vand.u32 %v2029, 4294901760
    %2031 = vmatprep.subr.mxu0 %v2030
    %v2032 = vand.u32 %v157, 4294901760
    %v2033 = vsub.f32 %v157, %v2032
    %v2034 = vand.u32 %v2033, 4294901760
    %2035 = vmatpush1.msra.mxu0 %v2034
    %v2036 = vand.u32 %v160, 4294901760
    %v2037 = vsub.f32 %v160, %v2036
    %v2038 = vand.u32 %v2037, 4294901760
    %2039 = vmatprep.subr.mxu0 %v2038
    %v2040 = vand.u32 %v159, 4294901760
    %v2041 = vsub.f32 %v159, %v2040
    %v2042 = vand.u32 %v2041, 4294901760
    %2043 = vmatpush1.msra.mxu0 %v2042
    %2044 = vmatprep.subr.mxu0 0.0
    %2045 = vmatpush1.msra.mxu0 0.0
    %2046 = vmatprep.subr.mxu0 0.0
    %2047 = vmatpush1.msra.mxu0 0.0
    %2048 = vmatprep.subr.mxu0 0.0
    %2049 = vmatpush1.msra.mxu0 0.0
    %2050 = vmatprep.subr.mxu0 0.0
    %2051 = vmatpush1.msra.mxu0 0.0
    %2052 = vmatprep.subr.mxu0 0.0
    %2053 = vmatpush1.msra.mxu0 0.0
    %2054 = vmatprep.subr.mxu0 0.0
    %2055 = vmatpush1.msra.mxu0 0.0
    %2056 = vmatprep.subr.mxu0 0.0
    %2057 = vmatpush1.msra.mxu0 0.0
    %2058 = vmatprep.subr.mxu0 0.0
    %2059 = vmatpush1.msra.mxu0 0.0
    %2060 = vmatprep.subr.mxu0 0.0
    %2061 = vmatpush1.msra.mxu0 0.0
    %2062 = vmatprep.subr.mxu0 0.0
    %2063 = vmatpush1.msra.mxu0 0.0
    %2064 = vmatprep.subr.mxu0 0.0
    %2065 = vmatpush1.msra.mxu0 0.0
    %2066 = vmatprep.subr.mxu0 0.0
    %2067 = vmatpush1.msra.mxu0 0.0
    %2068 = vmatprep.subr.mxu0 0.0
    %2069 = vmatpush1.msra.mxu0 0.0
    %2070 = vmatprep.subr.mxu0 0.0
    %2071 = vmatpush1.msra.mxu0 0.0
    %2072 = vmatprep.subr.mxu0 0.0
    %2073 = vmatpush1.msra.mxu0 0.0
    %2074 = vmatprep.subr.mxu0 0.0
    %2075 = vmatpush1.msra.mxu0 0.0
    %2076 = vmatprep.subr.mxu0 0.0
    %2077 = vmatpush1.msra.mxu0 0.0
    %2078 = vmatprep.subr.mxu0 0.0
    %2079 = vmatpush1.msra.mxu0 0.0
    %2080 = vmatprep.subr.mxu0 0.0
    %2081 = vmatpush1.msra.mxu0 0.0
    %2082 = vmatprep.subr.mxu0 0.0
    %2083 = vmatpush1.msra.mxu0 0.0
    %2084 = vmatprep.subr.mxu0 0.0
    %2085 = vmatpush1.msra.mxu0 0.0
    %2086 = vmatprep.subr.mxu0 0.0
    %2087 = vmatpush1.msra.mxu0 0.0
    %2088 = vmatprep.subr.mxu0 0.0
    %2089 = vmatpush1.msra.mxu0 0.0
    %2090 = vmatprep.subr.mxu0 0.0
    %2091 = vmatpush1.msra.mxu0 0.0
    %2092 = vmatprep.mubr.f32.mxu0 0.0
    %v2093 = vand.u32 %v1539, 4294901760
    %2094 = vmatmul.mubr.f32.gmra.mrb[0].mxu0 %v2093
    %v2095 = vpop.f32.mrb[0].mxu0
    %v2096 = vadd.f32 %v1976, %v2095
    %v2097 = vpop.f32.mrb[0].mxu0
    %v2098 = vadd.f32 %v1978, %v2097
    %2099 = vdwg.mxu0
    %v2100 = vand.u32 %v146, 4294901760
    %2101 = vmatprep.subr.mxu0 %v2100
    %v2102 = vand.u32 %v145, 4294901760
    %2103 = vmatpush1.msra.mxu0 %v2102
    %v2104 = vand.u32 %v148, 4294901760
    %2105 = vmatprep.subr.mxu0 %v2104
    %v2106 = vand.u32 %v147, 4294901760
    %2107 = vmatpush1.msra.mxu0 %v2106
    %v2108 = vand.u32 %v150, 4294901760
    %2109 = vmatprep.subr.mxu0 %v2108
    %v2110 = vand.u32 %v149, 4294901760
    %2111 = vmatpush1.msra.mxu0 %v2110
    %v2112 = vand.u32 %v152, 4294901760
    %2113 = vmatprep.subr.mxu0 %v2112
    %v2114 = vand.u32 %v151, 4294901760
    %2115 = vmatpush1.msra.mxu0 %v2114
    %v2116 = vand.u32 %v154, 4294901760
    %2117 = vmatprep.subr.mxu0 %v2116
    %v2118 = vand.u32 %v153, 4294901760
    %2119 = vmatpush1.msra.mxu0 %v2118
    %v2120 = vand.u32 %v156, 4294901760
    %2121 = vmatprep.subr.mxu0 %v2120
    %v2122 = vand.u32 %v155, 4294901760
    %2123 = vmatpush1.msra.mxu0 %v2122
    %v2124 = vand.u32 %v158, 4294901760
    %2125 = vmatprep.subr.mxu0 %v2124
    %v2126 = vand.u32 %v157, 4294901760
    %2127 = vmatpush1.msra.mxu0 %v2126
    %v2128 = vand.u32 %v160, 4294901760
    %2129 = vmatprep.subr.mxu0 %v2128
    %v2130 = vand.u32 %v159, 4294901760
    %2131 = vmatpush1.msra.mxu0 %v2130
    %2132 = vmatprep.subr.mxu0 0.0
    %2133 = vmatpush1.msra.mxu0 0.0
    %2134 = vmatprep.subr.mxu0 0.0
    %2135 = vmatpush1.msra.mxu0 0.0
    %2136 = vmatprep.subr.mxu0 0.0
    %2137 = vmatpush1.msra.mxu0 0.0
    %2138 = vmatprep.subr.mxu0 0.0
    %2139 = vmatpush1.msra.mxu0 0.0
    %2140 = vmatprep.subr.mxu0 0.0
    %2141 = vmatpush1.msra.mxu0 0.0
    %2142 = vmatprep.subr.mxu0 0.0
    %2143 = vmatpush1.msra.mxu0 0.0
    %2144 = vmatprep.subr.mxu0 0.0
    %2145 = vmatpush1.msra.mxu0 0.0
    %2146 = vmatprep.subr.mxu0 0.0
    %2147 = vmatpush1.msra.mxu0 0.0
    %2148 = vmatprep.subr.mxu0 0.0
    %2149 = vmatpush1.msra.mxu0 0.0
    %2150 = vmatprep.subr.mxu0 0.0
    %2151 = vmatpush1.msra.mxu0 0.0
    %2152 = vmatprep.subr.mxu0 0.0
    %2153 = vmatpush1.msra.mxu0 0.0
    %2154 = vmatprep.subr.mxu0 0.0
    %2155 = vmatpush1.msra.mxu0 0.0
    %2156 = vmatprep.subr.mxu0 0.0
    %2157 = vmatpush1.msra.mxu0 0.0
    %2158 = vmatprep.subr.mxu0 0.0
    %2159 = vmatpush1.msra.mxu0 0.0
    %2160 = vmatprep.subr.mxu0 0.0
    %2161 = vmatpush1.msra.mxu0 0.0
    %2162 = vmatprep.subr.mxu0 0.0
    %2163 = vmatpush1.msra.mxu0 0.0
    %2164 = vmatprep.subr.mxu0 0.0
    %2165 = vmatpush1.msra.mxu0 0.0
    %2166 = vmatprep.subr.mxu0 0.0
    %2167 = vmatpush1.msra.mxu0 0.0
    %2168 = vmatprep.subr.mxu0 0.0
    %2169 = vmatpush1.msra.mxu0 0.0
    %2170 = vmatprep.subr.mxu0 0.0
    %2171 = vmatpush1.msra.mxu0 0.0
    %2172 = vmatprep.subr.mxu0 0.0
    %2173 = vmatpush1.msra.mxu0 0.0
    %2174 = vmatprep.subr.mxu0 0.0
    %2175 = vmatpush1.msra.mxu0 0.0
    %2176 = vmatprep.subr.mxu0 0.0
    %2177 = vmatpush1.msra.mxu0 0.0
    %2178 = vmatprep.subr.mxu0 0.0
    %2179 = vmatpush1.msra.mxu0 0.0
    %2180 = vmatprep.mubr.f32.mxu0 0.0
    %v2181 = vand.u32 %v1539, 4294901760
    %2182 = vmatmul.mubr.f32.gmra.mrb[0].mxu0 %v2181
    %v2183 = vpop.f32.mrb[0].mxu0
    %v2184 = vadd.f32 %v2096, %v2183
    %v2185 = vpop.f32.mrb[0].mxu0
    %v2186 = vadd.f32 %v2098, %v2185
    %2187 = vdwg.mxu0
    %v2188 = vadd.f32 %v1538, %v2184
    %v2189 = vxor.u32 %v2188, 2147483648
    %v2190 = vmul.f32 %v2189, 1.442695
    %v2191 = vpow.pop %v2190
    %v2192 = vadd.f32 %v2191, 1.0
    %v2193 = vrcp.pop %v2192
    %v2194 = vmul.f32 1.0, %v2193
    %v2195 = vadd.f32 %v2186, %v825
    %v2196 = vmul.f32 %v2194, %v2195
    %v2198 = vrot.slane %v1538, 1
    %v2200 = vadd.f32 %v2198, %v2196
    %v2201 = vtanh.pop %v2200
    %v2202 = vsub.f32 1.0, %v2194
    %2204 = vrot.lane.b32.xlu0 %v2201, 64
    %v2205 = vpop.permute.xlu0 %2204
    %v2207 = vmul.f32 %v2202, %v2205
    %v2208 = vmul.f32 %v2194, %v1526
    %v2209 = vadd.f32 %v2207, %v2208
    %v2211 = vlaneseq
    %v2212 = vshrl.u32 %v2211, 7
    %v2213 = vsub.s32 0, %v2212
    %v2214 = vrot.slane %v2209, %v2213
    %2215 = vrot.lane.b32.xlu0 %v2214, 64
    %v2216 = vpop.permute.xlu0 %2215
    %2218 = vst.msk [vmem:[#allocation3 + $0x2] sm:$0x1] %vm850, %v2216
    %2219 = vst.msk [vmem:[#allocation3 + $0x5] sm:$0x1] %vm852, %v2216
    %s2220 = scalar_lea.vmem [#allocation2], 3
    %v2221 = vld [vmem:[%s2220] ss:$8 sm:$0x3]
    %v2222 = vsel %vm143, %v2216, 0
    %v2224 = vand.u32 %v146, 4294901760
    %2225 = vmatprep.subr.mxu0 %v2224
    %v2226 = vand.u32 %v145, 4294901760
    %2227 = vmatpush1.msra.mxu0 %v2226
    %v2228 = vand.u32 %v148, 4294901760
    %2229 = vmatprep.subr.mxu0 %v2228
    %v2230 = vand.u32 %v147, 4294901760
    %2231 = vmatpush1.msra.mxu0 %v2230
    %v2232 = vand.u32 %v150, 4294901760
    %2233 = vmatprep.subr.mxu0 %v2232
    %v2234 = vand.u32 %v149, 4294901760
    %2235 = vmatpush1.msra.mxu0 %v2234
    %v2236 = vand.u32 %v152, 4294901760
    %2237 = vmatprep.subr.mxu0 %v2236
    %v2238 = vand.u32 %v151, 4294901760
    %2239 = vmatpush1.msra.mxu0 %v2238
    %v2240 = vand.u32 %v154, 4294901760
    %2241 = vmatprep.subr.mxu0 %v2240
    %v2242 = vand.u32 %v153, 4294901760
    %2243 = vmatpush1.msra.mxu0 %v2242
    %v2244 = vand.u32 %v156, 4294901760
    %2245 = vmatprep.subr.mxu0 %v2244
    %v2246 = vand.u32 %v155, 4294901760
    %2247 = vmatpush1.msra.mxu0 %v2246
    %v2248 = vand.u32 %v158, 4294901760
    %2249 = vmatprep.subr.mxu0 %v2248
    %v2250 = vand.u32 %v157, 4294901760
    %2251 = vmatpush1.msra.mxu0 %v2250
    %v2252 = vand.u32 %v160, 4294901760
    %2253 = vmatprep.subr.mxu0 %v2252
    %v2254 = vand.u32 %v159, 4294901760
    %2255 = vmatpush1.msra.mxu0 %v2254
    %2256 = vmatprep.subr.mxu0 0.0
    %2257 = vmatpush1.msra.mxu0 0.0
    %2258 = vmatprep.subr.mxu0 0.0
    %2259 = vmatpush1.msra.mxu0 0.0
    %2260 = vmatprep.subr.mxu0 0.0
    %2261 = vmatpush1.msra.mxu0 0.0
    %2262 = vmatprep.subr.mxu0 0.0
    %2263 = vmatpush1.msra.mxu0 0.0
    %2264 = vmatprep.subr.mxu0 0.0
    %2265 = vmatpush1.msra.mxu0 0.0
    %2266 = vmatprep.subr.mxu0 0.0
    %2267 = vmatpush1.msra.mxu0 0.0
    %2268 = vmatprep.subr.mxu0 0.0
    %2269 = vmatpush1.msra.mxu0 0.0
    %2270 = vmatprep.subr.mxu0 0.0
    %2271 = vmatpush1.msra.mxu0 0.0
    %2272 = vmatprep.subr.mxu0 0.0
    %2273 = vmatpush1.msra.mxu0 0.0
    %2274 = vmatprep.subr.mxu0 0.0
    %2275 = vmatpush1.msra.mxu0 0.0
    %2276 = vmatprep.subr.mxu0 0.0
    %2277 = vmatpush1.msra.mxu0 0.0
    %2278 = vmatprep.subr.mxu0 0.0
    %2279 = vmatpush1.msra.mxu0 0.0
    %2280 = vmatprep.subr.mxu0 0.0
    %2281 = vmatpush1.msra.mxu0 0.0
    %2282 = vmatprep.subr.mxu0 0.0
    %2283 = vmatpush1.msra.mxu0 0.0
    %2284 = vmatprep.subr.mxu0 0.0
    %2285 = vmatpush1.msra.mxu0 0.0
    %2286 = vmatprep.subr.mxu0 0.0
    %2287 = vmatpush1.msra.mxu0 0.0
    %2288 = vmatprep.subr.mxu0 0.0
    %2289 = vmatpush1.msra.mxu0 0.0
    %2290 = vmatprep.subr.mxu0 0.0
    %2291 = vmatpush1.msra.mxu0 0.0
    %2292 = vmatprep.subr.mxu0 0.0
    %2293 = vmatpush1.msra.mxu0 0.0
    %2294 = vmatprep.subr.mxu0 0.0
    %2295 = vmatpush1.msra.mxu0 0.0
    %2296 = vmatprep.subr.mxu0 0.0
    %2297 = vmatpush1.msra.mxu0 0.0
    %2298 = vmatprep.subr.mxu0 0.0
    %2299 = vmatpush1.msra.mxu0 0.0
    %2300 = vmatprep.subr.mxu0 0.0
    %2301 = vmatpush1.msra.mxu0 0.0
    %2302 = vmatprep.subr.mxu0 0.0
    %2303 = vmatpush1.msra.mxu0 0.0
    %2304 = vmatprep.mubr.f32.mxu0 0.0
    %v2305 = vand.u32 %v2222, 4294901760
    %v2306 = vsub.f32 %v2222, %v2305
    %v2307 = vand.u32 %v2306, 4294901760
    %v2308 = vsub.f32 %v2306, %v2307
    %v2309 = vand.u32 %v2308, 4294901760
    %2310 = vmatmul.mubr.f32.gmra.mrb[0].mxu0 %v2309
    %v2311 = vpop.f32.mrb[0].mxu0
    %v2312 = vadd.f32 0.0, %v2311
    %v2313 = vpop.f32.mrb[0].mxu0
    %v2314 = vadd.f32 0.0, %v2313
    %2315 = vdwg.mxu0
    %v2316 = vand.u32 %v146, 4294901760
    %v2317 = vsub.f32 %v146, %v2316
    %v2318 = vand.u32 %v2317, 4294901760
    %v2319 = vsub.f32 %v2317, %v2318
    %v2320 = vand.u32 %v2319, 4294901760
    %2321 = vmatprep.subr.mxu0 %v2320
    %v2322 = vand.u32 %v145, 4294901760
    %v2323 = vsub.f32 %v145, %v2322
    %v2324 = vand.u32 %v2323, 4294901760
    %v2325 = vsub.f32 %v2323, %v2324
    %v2326 = vand.u32 %v2325, 4294901760
    %2327 = vmatpush1.msra.mxu0 %v2326
    %v2328 = vand.u32 %v148, 4294901760
    %v2329 = vsub.f32 %v148, %v2328
    %v2330 = vand.u32 %v2329, 4294901760
    %v2331 = vsub.f32 %v2329, %v2330
    %v2332 = vand.u32 %v2331, 4294901760
    %2333 = vmatprep.subr.mxu0 %v2332
    %v2334 = vand.u32 %v147, 4294901760
    %v2335 = vsub.f32 %v147, %v2334
    %v2336 = vand.u32 %v2335, 4294901760
    %v2337 = vsub.f32 %v2335, %v2336
    %v2338 = vand.u32 %v2337, 4294901760
    %2339 = vmatpush1.msra.mxu0 %v2338
    %v2340 = vand.u32 %v150, 4294901760
    %v2341 = vsub.f32 %v150, %v2340
    %v2342 = vand.u32 %v2341, 4294901760
    %v2343 = vsub.f32 %v2341, %v2342
    %v2344 = vand.u32 %v2343, 4294901760
    %2345 = vmatprep.subr.mxu0 %v2344
    %v2346 = vand.u32 %v149, 4294901760
    %v2347 = vsub.f32 %v149, %v2346
    %v2348 = vand.u32 %v2347, 4294901760
    %v2349 = vsub.f32 %v2347, %v2348
    %v2350 = vand.u32 %v2349, 4294901760
    %2351 = vmatpush1.msra.mxu0 %v2350
    %v2352 = vand.u32 %v152, 4294901760
    %v2353 = vsub.f32 %v152, %v2352
    %v2354 = vand.u32 %v2353, 4294901760
    %v2355 = vsub.f32 %v2353, %v2354
    %v2356 = vand.u32 %v2355, 4294901760
    %2357 = vmatprep.subr.mxu0 %v2356
    %v2358 = vand.u32 %v151, 4294901760
    %v2359 = vsub.f32 %v151, %v2358
    %v2360 = vand.u32 %v2359, 4294901760
    %v2361 = vsub.f32 %v2359, %v2360
    %v2362 = vand.u32 %v2361, 4294901760
    %2363 = vmatpush1.msra.mxu0 %v2362
    %v2364 = vand.u32 %v154, 4294901760
    %v2365 = vsub.f32 %v154, %v2364
    %v2366 = vand.u32 %v2365, 4294901760
    %v2367 = vsub.f32 %v2365, %v2366
    %v2368 = vand.u32 %v2367, 4294901760
    %2369 = vmatprep.subr.mxu0 %v2368
    %v2370 = vand.u32 %v153, 4294901760
    %v2371 = vsub.f32 %v153, %v2370
    %v2372 = vand.u32 %v2371, 4294901760
    %v2373 = vsub.f32 %v2371, %v2372
    %v2374 = vand.u32 %v2373, 4294901760
    %2375 = vmatpush1.msra.mxu0 %v2374
    %v2376 = vand.u32 %v156, 4294901760
    %v2377 = vsub.f32 %v156, %v2376
    %v2378 = vand.u32 %v2377, 4294901760
    %v2379 = vsub.f32 %v2377, %v2378
    %v2380 = vand.u32 %v2379, 4294901760
    %2381 = vmatprep.subr.mxu0 %v2380
    %v2382 = vand.u32 %v155, 4294901760
    %v2383 = vsub.f32 %v155, %v2382
    %v2384 = vand.u32 %v2383, 4294901760
    %v2385 = vsub.f32 %v2383, %v2384
    %v2386 = vand.u32 %v2385, 4294901760
    %2387 = vmatpush1.msra.mxu0 %v2386
    %v2388 = vand.u32 %v158, 4294901760
    %v2389 = vsub.f32 %v158, %v2388
    %v2390 = vand.u32 %v2389, 4294901760
    %v2391 = vsub.f32 %v2389, %v2390
    %v2392 = vand.u32 %v2391, 4294901760
    %2393 = vmatprep.subr.mxu0 %v2392
    %v2394 = vand.u32 %v157, 4294901760
    %v2395 = vsub.f32 %v157, %v2394
    %v2396 = vand.u32 %v2395, 4294901760
    %v2397 = vsub.f32 %v2395, %v2396
    %v2398 = vand.u32 %v2397, 4294901760
    %2399 = vmatpush1.msra.mxu0 %v2398
    %v2400 = vand.u32 %v160, 4294901760
    %v2401 = vsub.f32 %v160, %v2400
    %v2402 = vand.u32 %v2401, 4294901760
    %v2403 = vsub.f32 %v2401, %v2402
    %v2404 = vand.u32 %v2403, 4294901760
    %2405 = vmatprep.subr.mxu0 %v2404
    %v2406 = vand.u32 %v159, 4294901760
    %v2407 = vsub.f32 %v159, %v2406
    %v2408 = vand.u32 %v2407, 4294901760
    %v2409 = vsub.f32 %v2407, %v2408
    %v2410 = vand.u32 %v2409, 4294901760
    %2411 = vmatpush1.msra.mxu0 %v2410
    %2412 = vmatprep.subr.mxu0 0.0
    %2413 = vmatpush1.msra.mxu0 0.0
    %2414 = vmatprep.subr.mxu0 0.0
    %2415 = vmatpush1.msra.mxu0 0.0
    %2416 = vmatprep.subr.mxu0 0.0
    %2417 = vmatpush1.msra.mxu0 0.0
    %2418 = vmatprep.subr.mxu0 0.0
    %2419 = vmatpush1.msra.mxu0 0.0
    %2420 = vmatprep.subr.mxu0 0.0
    %2421 = vmatpush1.msra.mxu0 0.0
    %2422 = vmatprep.subr.mxu0 0.0
    %2423 = vmatpush1.msra.mxu0 0.0
    %2424 = vmatprep.subr.mxu0 0.0
    %2425 = vmatpush1.msra.mxu0 0.0
    %2426 = vmatprep.subr.mxu0 0.0
    %2427 = vmatpush1.msra.mxu0 0.0
    %2428 = vmatprep.subr.mxu0 0.0
    %2429 = vmatpush1.msra.mxu0 0.0
    %2430 = vmatprep.subr.mxu0 0.0
    %2431 = vmatpush1.msra.mxu0 0.0
    %2432 = vmatprep.subr.mxu0 0.0
    %2433 = vmatpush1.msra.mxu0 0.0
    %2434 = vmatprep.subr.mxu0 0.0
    %2435 = vmatpush1.msra.mxu0 0.0
    %2436 = vmatprep.subr.mxu0 0.0
    %2437 = vmatpush1.msra.mxu0 0.0
    %2438 = vmatprep.subr.mxu0 0.0
    %2439 = vmatpush1.msra.mxu0 0.0
    %2440 = vmatprep.subr.mxu0 0.0
    %2441 = vmatpush1.msra.mxu0 0.0
    %2442 = vmatprep.subr.mxu0 0.0
    %2443 = vmatpush1.msra.mxu0 0.0
    %2444 = vmatprep.subr.mxu0 0.0
    %2445 = vmatpush1.msra.mxu0 0.0
    %2446 = vmatprep.subr.mxu0 0.0
    %2447 = vmatpush1.msra.mxu0 0.0
    %2448 = vmatprep.subr.mxu0 0.0
    %2449 = vmatpush1.msra.mxu0 0.0
    %2450 = vmatprep.subr.mxu0 0.0
    %2451 = vmatpush1.msra.mxu0 0.0
    %2452 = vmatprep.subr.mxu0 0.0
    %2453 = vmatpush1.msra.mxu0 0.0
    %2454 = vmatprep.subr.mxu0 0.0
    %2455 = vmatpush1.msra.mxu0 0.0
    %2456 = vmatprep.subr.mxu0 0.0
    %2457 = vmatpush1.msra.mxu0 0.0
    %2458 = vmatprep.subr.mxu0 0.0
    %2459 = vmatpush1.msra.mxu0 0.0
    %2460 = vmatprep.mubr.f32.mxu0 0.0
    %v2461 = vand.u32 %v2222, 4294901760
    %2462 = vmatmul.mubr.f32.gmra.mrb[0].mxu0 %v2461
    %v2463 = vpop.f32.mrb[0].mxu0
    %v2464 = vadd.f32 %v2312, %v2463
    %v2465 = vpop.f32.mrb[0].mxu0
    %v2466 = vadd.f32 %v2314, %v2465
    %2467 = vdwg.mxu0
    %v2468 = vand.u32 %v146, 4294901760
    %v2469 = vsub.f32 %v146, %v2468
    %2470 = vmatprep.subr.mxu0 %v2469
    %v2471 = vand.u32 %v145, 4294901760
    %v2472 = vsub.f32 %v145, %v2471
    %2473 = vmatpush1.msra.mxu0 %v2472
    %v2474 = vand.u32 %v148, 4294901760
    %v2475 = vsub.f32 %v148, %v2474
    %2476 = vmatprep.subr.mxu0 %v2475
    %v2477 = vand.u32 %v147, 4294901760
    %v2478 = vsub.f32 %v147, %v2477
    %2479 = vmatpush1.msra.mxu0 %v2478
    %v2480 = vand.u32 %v150, 4294901760
    %v2481 = vsub.f32 %v150, %v2480
    %2482 = vmatprep.subr.mxu0 %v2481
    %v2483 = vand.u32 %v149, 4294901760
    %v2484 = vsub.f32 %v149, %v2483
    %2485 = vmatpush1.msra.mxu0 %v2484
    %v2486 = vand.u32 %v152, 4294901760
    %v2487 = vsub.f32 %v152, %v2486
    %2488 = vmatprep.subr.mxu0 %v2487
    %v2489 = vand.u32 %v151, 4294901760
    %v2490 = vsub.f32 %v151, %v2489
    %2491 = vmatpush1.msra.mxu0 %v2490
    %v2492 = vand.u32 %v154, 4294901760
    %v2493 = vsub.f32 %v154, %v2492
    %2494 = vmatprep.subr.mxu0 %v2493
    %v2495 = vand.u32 %v153, 4294901760
    %v2496 = vsub.f32 %v153, %v2495
    %2497 = vmatpush1.msra.mxu0 %v2496
    %v2498 = vand.u32 %v156, 4294901760
    %v2499 = vsub.f32 %v156, %v2498
    %2500 = vmatprep.subr.mxu0 %v2499
    %v2501 = vand.u32 %v155, 4294901760
    %v2502 = vsub.f32 %v155, %v2501
    %2503 = vmatpush1.msra.mxu0 %v2502
    %v2504 = vand.u32 %v158, 4294901760
    %v2505 = vsub.f32 %v158, %v2504
    %2506 = vmatprep.subr.mxu0 %v2505
    %v2507 = vand.u32 %v157, 4294901760
    %v2508 = vsub.f32 %v157, %v2507
    %2509 = vmatpush1.msra.mxu0 %v2508
    %v2510 = vand.u32 %v160, 4294901760
    %v2511 = vsub.f32 %v160, %v2510
    %2512 = vmatprep.subr.mxu0 %v2511
    %v2513 = vand.u32 %v159, 4294901760
    %v2514 = vsub.f32 %v159, %v2513
    %2515 = vmatpush1.msra.mxu0 %v2514
    %2516 = vmatprep.subr.mxu0 0.0
    %2517 = vmatpush1.msra.mxu0 0.0
    %2518 = vmatprep.subr.mxu0 0.0
    %2519 = vmatpush1.msra.mxu0 0.0
    %2520 = vmatprep.subr.mxu0 0.0
    %2521 = vmatpush1.msra.mxu0 0.0
    %2522 = vmatprep.subr.mxu0 0.0
    %2523 = vmatpush1.msra.mxu0 0.0
    %2524 = vmatprep.subr.mxu0 0.0
    %2525 = vmatpush1.msra.mxu0 0.0
    %2526 = vmatprep.subr.mxu0 0.0
    %2527 = vmatpush1.msra.mxu0 0.0
    %2528 = vmatprep.subr.mxu0 0.0
    %2529 = vmatpush1.msra.mxu0 0.0
    %2530 = vmatprep.subr.mxu0 0.0
    %2531 = vmatpush1.msra.mxu0 0.0
    %2532 = vmatprep.subr.mxu0 0.0
    %2533 = vmatpush1.msra.mxu0 0.0
    %2534 = vmatprep.subr.mxu0 0.0
    %2535 = vmatpush1.msra.mxu0 0.0
    %2536 = vmatprep.subr.mxu0 0.0
    %2537 = vmatpush1.msra.mxu0 0.0
    %2538 = vmatprep.subr.mxu0 0.0
    %2539 = vmatpush1.msra.mxu0 0.0
    %2540 = vmatprep.subr.mxu0 0.0
    %2541 = vmatpush1.msra.mxu0 0.0
    %2542 = vmatprep.subr.mxu0 0.0
    %2543 = vmatpush1.msra.mxu0 0.0
    %2544 = vmatprep.subr.mxu0 0.0
    %2545 = vmatpush1.msra.mxu0 0.0
    %2546 = vmatprep.subr.mxu0 0.0
    %2547 = vmatpush1.msra.mxu0 0.0
    %2548 = vmatprep.subr.mxu0 0.0
    %2549 = vmatpush1.msra.mxu0 0.0
    %2550 = vmatprep.subr.mxu0 0.0
    %2551 = vmatpush1.msra.mxu0 0.0
    %2552 = vmatprep.subr.mxu0 0.0
    %2553 = vmatpush1.msra.mxu0 0.0
    %2554 = vmatprep.subr.mxu0 0.0
    %2555 = vmatpush1.msra.mxu0 0.0
    %2556 = vmatprep.subr.mxu0 0.0
    %2557 = vmatpush1.msra.mxu0 0.0
    %2558 = vmatprep.subr.mxu0 0.0
    %2559 = vmatpush1.msra.mxu0 0.0
    %2560 = vmatprep.subr.mxu0 0.0
    %2561 = vmatpush1.msra.mxu0 0.0
    %2562 = vmatprep.subr.mxu0 0.0
    %2563 = vmatpush1.msra.mxu0 0.0
    %2564 = vmatprep.mubr.f32.mxu0 0.0
    %v2565 = vand.u32 %v2222, 4294901760
    %v2566 = vsub.f32 %v2222, %v2565
    %2567 = vmatmul.mubr.f32.gmra.mrb[0].mxu0 %v2566
    %v2568 = vpop.f32.mrb[0].mxu0
    %v2569 = vadd.f32 %v2464, %v2568
    %v2570 = vpop.f32.mrb[0].mxu0
    %v2571 = vadd.f32 %v2466, %v2570
    %2572 = vdwg.mxu0
    %v2573 = vand.u32 %v146, 4294901760
    %2574 = vmatprep.subr.mxu0 %v2573
    %v2575 = vand.u32 %v145, 4294901760
    %2576 = vmatpush1.msra.mxu0 %v2575
    %v2577 = vand.u32 %v148, 4294901760
    %2578 = vmatprep.subr.mxu0 %v2577
    %v2579 = vand.u32 %v147, 4294901760
    %2580 = vmatpush1.msra.mxu0 %v2579
    %v2581 = vand.u32 %v150, 4294901760
    %2582 = vmatprep.subr.mxu0 %v2581
    %v2583 = vand.u32 %v149, 4294901760
    %2584 = vmatpush1.msra.mxu0 %v2583
    %v2585 = vand.u32 %v152, 4294901760
    %2586 = vmatprep.subr.mxu0 %v2585
    %v2587 = vand.u32 %v151, 4294901760
    %2588 = vmatpush1.msra.mxu0 %v2587
    %v2589 = vand.u32 %v154, 4294901760
    %2590 = vmatprep.subr.mxu0 %v2589
    %v2591 = vand.u32 %v153, 4294901760
    %2592 = vmatpush1.msra.mxu0 %v2591
    %v2593 = vand.u32 %v156, 4294901760
    %2594 = vmatprep.subr.mxu0 %v2593
    %v2595 = vand.u32 %v155, 4294901760
    %2596 = vmatpush1.msra.mxu0 %v2595
    %v2597 = vand.u32 %v158, 4294901760
    %2598 = vmatprep.subr.mxu0 %v2597
    %v2599 = vand.u32 %v157, 4294901760
    %2600 = vmatpush1.msra.mxu0 %v2599
    %v2601 = vand.u32 %v160, 4294901760
    %2602 = vmatprep.subr.mxu0 %v2601
    %v2603 = vand.u32 %v159, 4294901760
    %2604 = vmatpush1.msra.mxu0 %v2603
    %2605 = vmatprep.subr.mxu0 0.0
    %2606 = vmatpush1.msra.mxu0 0.0
    %2607 = vmatprep.subr.mxu0 0.0
    %2608 = vmatpush1.msra.mxu0 0.0
    %2609 = vmatprep.subr.mxu0 0.0
    %2610 = vmatpush1.msra.mxu0 0.0
    %2611 = vmatprep.subr.mxu0 0.0
    %2612 = vmatpush1.msra.mxu0 0.0
    %2613 = vmatprep.subr.mxu0 0.0
    %2614 = vmatpush1.msra.mxu0 0.0
    %2615 = vmatprep.subr.mxu0 0.0
    %2616 = vmatpush1.msra.mxu0 0.0
    %2617 = vmatprep.subr.mxu0 0.0
    %2618 = vmatpush1.msra.mxu0 0.0
    %2619 = vmatprep.subr.mxu0 0.0
    %2620 = vmatpush1.msra.mxu0 0.0
    %2621 = vmatprep.subr.mxu0 0.0
    %2622 = vmatpush1.msra.mxu0 0.0
    %2623 = vmatprep.subr.mxu0 0.0
    %2624 = vmatpush1.msra.mxu0 0.0
    %2625 = vmatprep.subr.mxu0 0.0
    %2626 = vmatpush1.msra.mxu0 0.0
    %2627 = vmatprep.subr.mxu0 0.0
    %2628 = vmatpush1.msra.mxu0 0.0
    %2629 = vmatprep.subr.mxu0 0.0
    %2630 = vmatpush1.msra.mxu0 0.0
    %2631 = vmatprep.subr.mxu0 0.0
    %2632 = vmatpush1.msra.mxu0 0.0
    %2633 = vmatprep.subr.mxu0 0.0
    %2634 = vmatpush1.msra.mxu0 0.0
    %2635 = vmatprep.subr.mxu0 0.0
    %2636 = vmatpush1.msra.mxu0 0.0
    %2637 = vmatprep.subr.mxu0 0.0
    %2638 = vmatpush1.msra.mxu0 0.0
    %2639 = vmatprep.subr.mxu0 0.0
    %2640 = vmatpush1.msra.mxu0 0.0
    %2641 = vmatprep.subr.mxu0 0.0
    %2642 = vmatpush1.msra.mxu0 0.0
    %2643 = vmatprep.subr.mxu0 0.0
    %2644 = vmatpush1.msra.mxu0 0.0
    %2645 = vmatprep.subr.mxu0 0.0
    %2646 = vmatpush1.msra.mxu0 0.0
    %2647 = vmatprep.subr.mxu0 0.0
    %2648 = vmatpush1.msra.mxu0 0.0
    %2649 = vmatprep.subr.mxu0 0.0
    %2650 = vmatpush1.msra.mxu0 0.0
    %2651 = vmatprep.subr.mxu0 0.0
    %2652 = vmatpush1.msra.mxu0 0.0
    %2653 = vmatprep.mubr.f32.mxu0 0.0
    %v2654 = vand.u32 %v2222, 4294901760
    %v2655 = vsub.f32 %v2222, %v2654
    %v2656 = vand.u32 %v2655, 4294901760
    %2657 = vmatmul.mubr.f32.gmra.mrb[0].mxu0 %v2656
    %v2658 = vpop.f32.mrb[0].mxu0
    %v2659 = vadd.f32 %v2569, %v2658
    %v2660 = vpop.f32.mrb[0].mxu0
    %v2661 = vadd.f32 %v2571, %v2660
    %2662 = vdwg.mxu0
    %v2663 = vand.u32 %v146, 4294901760
    %v2664 = vsub.f32 %v146, %v2663
    %v2665 = vand.u32 %v2664, 4294901760
    %2666 = vmatprep.subr.mxu0 %v2665
    %v2667 = vand.u32 %v145, 4294901760
    %v2668 = vsub.f32 %v145, %v2667
    %v2669 = vand.u32 %v2668, 4294901760
    %2670 = vmatpush1.msra.mxu0 %v2669
    %v2671 = vand.u32 %v148, 4294901760
    %v2672 = vsub.f32 %v148, %v2671
    %v2673 = vand.u32 %v2672, 4294901760
    %2674 = vmatprep.subr.mxu0 %v2673
    %v2675 = vand.u32 %v147, 4294901760
    %v2676 = vsub.f32 %v147, %v2675
    %v2677 = vand.u32 %v2676, 4294901760
    %2678 = vmatpush1.msra.mxu0 %v2677
    %v2679 = vand.u32 %v150, 4294901760
    %v2680 = vsub.f32 %v150, %v2679
    %v2681 = vand.u32 %v2680, 4294901760
    %2682 = vmatprep.subr.mxu0 %v2681
    %v2683 = vand.u32 %v149, 4294901760
    %v2684 = vsub.f32 %v149, %v2683
    %v2685 = vand.u32 %v2684, 4294901760
    %2686 = vmatpush1.msra.mxu0 %v2685
    %v2687 = vand.u32 %v152, 4294901760
    %v2688 = vsub.f32 %v152, %v2687
    %v2689 = vand.u32 %v2688, 4294901760
    %2690 = vmatprep.subr.mxu0 %v2689
    %v2691 = vand.u32 %v151, 4294901760
    %v2692 = vsub.f32 %v151, %v2691
    %v2693 = vand.u32 %v2692, 4294901760
    %2694 = vmatpush1.msra.mxu0 %v2693
    %v2695 = vand.u32 %v154, 4294901760
    %v2696 = vsub.f32 %v154, %v2695
    %v2697 = vand.u32 %v2696, 4294901760
    %2698 = vmatprep.subr.mxu0 %v2697
    %v2699 = vand.u32 %v153, 4294901760
    %v2700 = vsub.f32 %v153, %v2699
    %v2701 = vand.u32 %v2700, 4294901760
    %2702 = vmatpush1.msra.mxu0 %v2701
    %v2703 = vand.u32 %v156, 4294901760
    %v2704 = vsub.f32 %v156, %v2703
    %v2705 = vand.u32 %v2704, 4294901760
    %2706 = vmatprep.subr.mxu0 %v2705
    %v2707 = vand.u32 %v155, 4294901760
    %v2708 = vsub.f32 %v155, %v2707
    %v2709 = vand.u32 %v2708, 4294901760
    %2710 = vmatpush1.msra.mxu0 %v2709
    %v2711 = vand.u32 %v158, 4294901760
    %v2712 = vsub.f32 %v158, %v2711
    %v2713 = vand.u32 %v2712, 4294901760
    %2714 = vmatprep.subr.mxu0 %v2713
    %v2715 = vand.u32 %v157, 4294901760
    %v2716 = vsub.f32 %v157, %v2715
    %v2717 = vand.u32 %v2716, 4294901760
    %2718 = vmatpush1.msra.mxu0 %v2717
    %v2719 = vand.u32 %v160, 4294901760
    %v2720 = vsub.f32 %v160, %v2719
    %v2721 = vand.u32 %v2720, 4294901760
    %2722 = vmatprep.subr.mxu0 %v2721
    %v2723 = vand.u32 %v159, 4294901760
    %v2724 = vsub.f32 %v159, %v2723
    %v2725 = vand.u32 %v2724, 4294901760
    %2726 = vmatpush1.msra.mxu0 %v2725
    %2727 = vmatprep.subr.mxu0 0.0
    %2728 = vmatpush1.msra.mxu0 0.0
    %2729 = vmatprep.subr.mxu0 0.0
    %2730 = vmatpush1.msra.mxu0 0.0
    %2731 = vmatprep.subr.mxu0 0.0
    %2732 = vmatpush1.msra.mxu0 0.0
    %2733 = vmatprep.subr.mxu0 0.0
    %2734 = vmatpush1.msra.mxu0 0.0
    %2735 = vmatprep.subr.mxu0 0.0
    %2736 = vmatpush1.msra.mxu0 0.0
    %2737 = vmatprep.subr.mxu0 0.0
    %2738 = vmatpush1.msra.mxu0 0.0
    %2739 = vmatprep.subr.mxu0 0.0
    %2740 = vmatpush1.msra.mxu0 0.0
    %2741 = vmatprep.subr.mxu0 0.0
    %2742 = vmatpush1.msra.mxu0 0.0
    %2743 = vmatprep.subr.mxu0 0.0
    %2744 = vmatpush1.msra.mxu0 0.0
    %2745 = vmatprep.subr.mxu0 0.0
    %2746 = vmatpush1.msra.mxu0 0.0
    %2747 = vmatprep.subr.mxu0 0.0
    %2748 = vmatpush1.msra.mxu0 0.0
    %2749 = vmatprep.subr.mxu0 0.0
    %2750 = vmatpush1.msra.mxu0 0.0
    %2751 = vmatprep.subr.mxu0 0.0
    %2752 = vmatpush1.msra.mxu0 0.0
    %2753 = vmatprep.subr.mxu0 0.0
    %2754 = vmatpush1.msra.mxu0 0.0
    %2755 = vmatprep.subr.mxu0 0.0
    %2756 = vmatpush1.msra.mxu0 0.0
    %2757 = vmatprep.subr.mxu0 0.0
    %2758 = vmatpush1.msra.mxu0 0.0
    %2759 = vmatprep.subr.mxu0 0.0
    %2760 = vmatpush1.msra.mxu0 0.0
    %2761 = vmatprep.subr.mxu0 0.0
    %2762 = vmatpush1.msra.mxu0 0.0
    %2763 = vmatprep.subr.mxu0 0.0
    %2764 = vmatpush1.msra.mxu0 0.0
    %2765 = vmatprep.subr.mxu0 0.0
    %2766 = vmatpush1.msra.mxu0 0.0
    %2767 = vmatprep.subr.mxu0 0.0
    %2768 = vmatpush1.msra.mxu0 0.0
    %2769 = vmatprep.subr.mxu0 0.0
    %2770 = vmatpush1.msra.mxu0 0.0
    %2771 = vmatprep.subr.mxu0 0.0
    %2772 = vmatpush1.msra.mxu0 0.0
    %2773 = vmatprep.subr.mxu0 0.0
    %2774 = vmatpush1.msra.mxu0 0.0
    %2775 = vmatprep.mubr.f32.mxu0 0.0
    %v2776 = vand.u32 %v2222, 4294901760
    %2777 = vmatmul.mubr.f32.gmra.mrb[0].mxu0 %v2776
    %v2778 = vpop.f32.mrb[0].mxu0
    %v2779 = vadd.f32 %v2659, %v2778
    %v2780 = vpop.f32.mrb[0].mxu0
    %v2781 = vadd.f32 %v2661, %v2780
    %2782 = vdwg.mxu0
    %v2783 = vand.u32 %v146, 4294901760
    %2784 = vmatprep.subr.mxu0 %v2783
    %v2785 = vand.u32 %v145, 4294901760
    %2786 = vmatpush1.msra.mxu0 %v2785
    %v2787 = vand.u32 %v148, 4294901760
    %2788 = vmatprep.subr.mxu0 %v2787
    %v2789 = vand.u32 %v147, 4294901760
    %2790 = vmatpush1.msra.mxu0 %v2789
    %v2791 = vand.u32 %v150, 4294901760
    %2792 = vmatprep.subr.mxu0 %v2791
    %v2793 = vand.u32 %v149, 4294901760
    %2794 = vmatpush1.msra.mxu0 %v2793
    %v2795 = vand.u32 %v152, 4294901760
    %2796 = vmatprep.subr.mxu0 %v2795
    %v2797 = vand.u32 %v151, 4294901760
    %2798 = vmatpush1.msra.mxu0 %v2797
    %v2799 = vand.u32 %v154, 4294901760
    %2800 = vmatprep.subr.mxu0 %v2799
    %v2801 = vand.u32 %v153, 4294901760
    %2802 = vmatpush1.msra.mxu0 %v2801
    %v2803 = vand.u32 %v156, 4294901760
    %2804 = vmatprep.subr.mxu0 %v2803
    %v2805 = vand.u32 %v155, 4294901760
    %2806 = vmatpush1.msra.mxu0 %v2805
    %v2807 = vand.u32 %v158, 4294901760
    %2808 = vmatprep.subr.mxu0 %v2807
    %v2809 = vand.u32 %v157, 4294901760
    %2810 = vmatpush1.msra.mxu0 %v2809
    %v2811 = vand.u32 %v160, 4294901760
    %2812 = vmatprep.subr.mxu0 %v2811
    %v2813 = vand.u32 %v159, 4294901760
    %2814 = vmatpush1.msra.mxu0 %v2813
    %2815 = vmatprep.subr.mxu0 0.0
    %2816 = vmatpush1.msra.mxu0 0.0
    %2817 = vmatprep.subr.mxu0 0.0
    %2818 = vmatpush1.msra.mxu0 0.0
    %2819 = vmatprep.subr.mxu0 0.0
    %2820 = vmatpush1.msra.mxu0 0.0
    %2821 = vmatprep.subr.mxu0 0.0
    %2822 = vmatpush1.msra.mxu0 0.0
    %2823 = vmatprep.subr.mxu0 0.0
    %2824 = vmatpush1.msra.mxu0 0.0
    %2825 = vmatprep.subr.mxu0 0.0
    %2826 = vmatpush1.msra.mxu0 0.0
    %2827 = vmatprep.subr.mxu0 0.0
    %2828 = vmatpush1.msra.mxu0 0.0
    %2829 = vmatprep.subr.mxu0 0.0
    %2830 = vmatpush1.msra.mxu0 0.0
    %2831 = vmatprep.subr.mxu0 0.0
    %2832 = vmatpush1.msra.mxu0 0.0
    %2833 = vmatprep.subr.mxu0 0.0
    %2834 = vmatpush1.msra.mxu0 0.0
    %2835 = vmatprep.subr.mxu0 0.0
    %2836 = vmatpush1.msra.mxu0 0.0
    %2837 = vmatprep.subr.mxu0 0.0
    %2838 = vmatpush1.msra.mxu0 0.0
    %2839 = vmatprep.subr.mxu0 0.0
    %2840 = vmatpush1.msra.mxu0 0.0
    %2841 = vmatprep.subr.mxu0 0.0
    %2842 = vmatpush1.msra.mxu0 0.0
    %2843 = vmatprep.subr.mxu0 0.0
    %2844 = vmatpush1.msra.mxu0 0.0
    %2845 = vmatprep.subr.mxu0 0.0
    %2846 = vmatpush1.msra.mxu0 0.0
    %2847 = vmatprep.subr.mxu0 0.0
    %2848 = vmatpush1.msra.mxu0 0.0
    %2849 = vmatprep.subr.mxu0 0.0
    %2850 = vmatpush1.msra.mxu0 0.0
    %2851 = vmatprep.subr.mxu0 0.0
    %2852 = vmatpush1.msra.mxu0 0.0
    %2853 = vmatprep.subr.mxu0 0.0
    %2854 = vmatpush1.msra.mxu0 0.0
    %2855 = vmatprep.subr.mxu0 0.0
    %2856 = vmatpush1.msra.mxu0 0.0
    %2857 = vmatprep.subr.mxu0 0.0
    %2858 = vmatpush1.msra.mxu0 0.0
    %2859 = vmatprep.subr.mxu0 0.0
    %2860 = vmatpush1.msra.mxu0 0.0
    %2861 = vmatprep.subr.mxu0 0.0
    %2862 = vmatpush1.msra.mxu0 0.0
    %2863 = vmatprep.mubr.f32.mxu0 0.0
    %v2864 = vand.u32 %v2222, 4294901760
    %2865 = vmatmul.mubr.f32.gmra.mrb[0].mxu0 %v2864
    %v2866 = vpop.f32.mrb[0].mxu0
    %v2867 = vadd.f32 %v2779, %v2866
    %v2868 = vpop.f32.mrb[0].mxu0
    %v2869 = vadd.f32 %v2781, %v2868
    %2870 = vdwg.mxu0
    %v2871 = vadd.f32 %v2221, %v2867
    %v2872 = vxor.u32 %v2871, 2147483648
    %v2873 = vmul.f32 %v2872, 1.442695
    %v2874 = vpow.pop %v2873
    %v2875 = vadd.f32 %v2874, 1.0
    %v2876 = vrcp.pop %v2875
    %v2877 = vmul.f32 1.0, %v2876
    %v2878 = vadd.f32 %v2869, %v825
    %v2879 = vmul.f32 %v2877, %v2878
    %v2881 = vrot.slane %v2221, 1
    %v2883 = vadd.f32 %v2881, %v2879
    %v2884 = vtanh.pop %v2883
    %v2885 = vsub.f32 1.0, %v2877
    %2887 = vrot.lane.b32.xlu0 %v2884, 64
    %v2888 = vpop.permute.xlu0 %2887
    %v2890 = vmul.f32 %v2885, %v2888
    %v2891 = vmul.f32 %v2877, %v2209
    %v2892 = vadd.f32 %v2890, %v2891
    %v2894 = vlaneseq
    %v2895 = vshrl.u32 %v2894, 7
    %v2896 = vsub.s32 0, %v2895
    %v2897 = vrot.slane %v2892, %v2896
    %2898 = vrot.lane.b32.xlu0 %v2897, 64
    %v2899 = vpop.permute.xlu0 %2898
    %2901 = vst.msk [vmem:[#allocation3 + $0x3] sm:$0x1] %vm850, %v2899
    %2902 = vst.msk [vmem:[#allocation3 + $0x4] sm:$0x1] %vm852, %v2899
    %s2903 = scalar_lea.vmem [#allocation2], 4
    %v2904 = vld [vmem:[%s2903] ss:$8 sm:$0x3]
    %v2905 = vsel %vm143, %v2899, 0
    %v2907 = vand.u32 %v146, 4294901760
    %2908 = vmatprep.subr.mxu0 %v2907
    %v2909 = vand.u32 %v145, 4294901760
    %2910 = vmatpush1.msra.mxu0 %v2909
    %v2911 = vand.u32 %v148, 4294901760
    %2912 = vmatprep.subr.mxu0 %v2911
    %v2913 = vand.u32 %v147, 4294901760
    %2914 = vmatpush1.msra.mxu0 %v2913
    %v2915 = vand.u32 %v150, 4294901760
    %2916 = vmatprep.subr.mxu0 %v2915
    %v2917 = vand.u32 %v149, 4294901760
    %2918 = vmatpush1.msra.mxu0 %v2917
    %v2919 = vand.u32 %v152, 4294901760
    %2920 = vmatprep.subr.mxu0 %v2919
    %v2921 = vand.u32 %v151, 4294901760
    %2922 = vmatpush1.msra.mxu0 %v2921
    %v2923 = vand.u32 %v154, 4294901760
    %2924 = vmatprep.subr.mxu0 %v2923
    %v2925 = vand.u32 %v153, 4294901760
    %2926 = vmatpush1.msra.mxu0 %v2925
    %v2927 = vand.u32 %v156, 4294901760
    %2928 = vmatprep.subr.mxu0 %v2927
    %v2929 = vand.u32 %v155, 4294901760
    %2930 = vmatpush1.msra.mxu0 %v2929
    %v2931 = vand.u32 %v158, 4294901760
    %2932 = vmatprep.subr.mxu0 %v2931
    %v2933 = vand.u32 %v157, 4294901760
    %2934 = vmatpush1.msra.mxu0 %v2933
    %v2935 = vand.u32 %v160, 4294901760
    %2936 = vmatprep.subr.mxu0 %v2935
    %v2937 = vand.u32 %v159, 4294901760
    %2938 = vmatpush1.msra.mxu0 %v2937
    %2939 = vmatprep.subr.mxu0 0.0
    %2940 = vmatpush1.msra.mxu0 0.0
    %2941 = vmatprep.subr.mxu0 0.0
    %2942 = vmatpush1.msra.mxu0 0.0
    %2943 = vmatprep.subr.mxu0 0.0
    %2944 = vmatpush1.msra.mxu0 0.0
    %2945 = vmatprep.subr.mxu0 0.0
    %2946 = vmatpush1.msra.mxu0 0.0
    %2947 = vmatprep.subr.mxu0 0.0
    %2948 = vmatpush1.msra.mxu0 0.0
    %2949 = vmatprep.subr.mxu0 0.0
    %2950 = vmatpush1.msra.mxu0 0.0
    %2951 = vmatprep.subr.mxu0 0.0
    %2952 = vmatpush1.msra.mxu0 0.0
    %2953 = vmatprep.subr.mxu0 0.0
    %2954 = vmatpush1.msra.mxu0 0.0
    %2955 = vmatprep.subr.mxu0 0.0
    %2956 = vmatpush1.msra.mxu0 0.0
    %2957 = vmatprep.subr.mxu0 0.0
    %2958 = vmatpush1.msra.mxu0 0.0
    %2959 = vmatprep.subr.mxu0 0.0
    %2960 = vmatpush1.msra.mxu0 0.0
    %2961 = vmatprep.subr.mxu0 0.0
    %2962 = vmatpush1.msra.mxu0 0.0
    %2963 = vmatprep.subr.mxu0 0.0
    %2964 = vmatpush1.msra.mxu0 0.0
    %2965 = vmatprep.subr.mxu0 0.0
    %2966 = vmatpush1.msra.mxu0 0.0
    %2967 = vmatprep.subr.mxu0 0.0
    %2968 = vmatpush1.msra.mxu0 0.0
    %2969 = vmatprep.subr.mxu0 0.0
    %2970 = vmatpush1.msra.mxu0 0.0
    %2971 = vmatprep.subr.mxu0 0.0
    %2972 = vmatpush1.msra.mxu0 0.0
    %2973 = vmatprep.subr.mxu0 0.0
    %2974 = vmatpush1.msra.mxu0 0.0
    %2975 = vmatprep.subr.mxu0 0.0
    %2976 = vmatpush1.msra.mxu0 0.0
    %2977 = vmatprep.subr.mxu0 0.0
    %2978 = vmatpush1.msra.mxu0 0.0
    %2979 = vmatprep.subr.mxu0 0.0
    %2980 = vmatpush1.msra.mxu0 0.0
    %2981 = vmatprep.subr.mxu0 0.0
    %2982 = vmatpush1.msra.mxu0 0.0
    %2983 = vmatprep.subr.mxu0 0.0
    %2984 = vmatpush1.msra.mxu0 0.0
    %2985 = vmatprep.subr.mxu0 0.0
    %2986 = vmatpush1.msra.mxu0 0.0
    %2987 = vmatprep.mubr.f32.mxu0 0.0
    %v2988 = vand.u32 %v2905, 4294901760
    %v2989 = vsub.f32 %v2905, %v2988
    %v2990 = vand.u32 %v2989, 4294901760
    %v2991 = vsub.f32 %v2989, %v2990
    %v2992 = vand.u32 %v2991, 4294901760
    %2993 = vmatmul.mubr.f32.gmra.mrb[0].mxu0 %v2992
    %v2994 = vpop.f32.mrb[0].mxu0
    %v2995 = vadd.f32 0.0, %v2994
    %v2996 = vpop.f32.mrb[0].mxu0
    %v2997 = vadd.f32 0.0, %v2996
    %2998 = vdwg.mxu0
    %v2999 = vand.u32 %v146, 4294901760
    %v3000 = vsub.f32 %v146, %v2999
    %v3001 = vand.u32 %v3000, 4294901760
    %v3002 = vsub.f32 %v3000, %v3001
    %v3003 = vand.u32 %v3002, 4294901760
    %3004 = vmatprep.subr.mxu0 %v3003
    %v3005 = vand.u32 %v145, 4294901760
    %v3006 = vsub.f32 %v145, %v3005
    %v3007 = vand.u32 %v3006, 4294901760
    %v3008 = vsub.f32 %v3006, %v3007
    %v3009 = vand.u32 %v3008, 4294901760
    %3010 = vmatpush1.msra.mxu0 %v3009
    %v3011 = vand.u32 %v148, 4294901760
    %v3012 = vsub.f32 %v148, %v3011
    %v3013 = vand.u32 %v3012, 4294901760
    %v3014 = vsub.f32 %v3012, %v3013
    %v3015 = vand.u32 %v3014, 4294901760
    %3016 = vmatprep.subr.mxu0 %v3015
    %v3017 = vand.u32 %v147, 4294901760
    %v3018 = vsub.f32 %v147, %v3017
    %v3019 = vand.u32 %v3018, 4294901760
    %v3020 = vsub.f32 %v3018, %v3019
    %v3021 = vand.u32 %v3020, 4294901760
    %3022 = vmatpush1.msra.mxu0 %v3021
    %v3023 = vand.u32 %v150, 4294901760
    %v3024 = vsub.f32 %v150, %v3023
    %v3025 = vand.u32 %v3024, 4294901760
    %v3026 = vsub.f32 %v3024, %v3025
    %v3027 = vand.u32 %v3026, 4294901760
    %3028 = vmatprep.subr.mxu0 %v3027
    %v3029 = vand.u32 %v149, 4294901760
    %v3030 = vsub.f32 %v149, %v3029
    %v3031 = vand.u32 %v3030, 4294901760
    %v3032 = vsub.f32 %v3030, %v3031
    %v3033 = vand.u32 %v3032, 4294901760
    %3034 = vmatpush1.msra.mxu0 %v3033
    %v3035 = vand.u32 %v152, 4294901760
    %v3036 = vsub.f32 %v152, %v3035
    %v3037 = vand.u32 %v3036, 4294901760
    %v3038 = vsub.f32 %v3036, %v3037
    %v3039 = vand.u32 %v3038, 4294901760
    %3040 = vmatprep.subr.mxu0 %v3039
    %v3041 = vand.u32 %v151, 4294901760
    %v3042 = vsub.f32 %v151, %v3041
    %v3043 = vand.u32 %v3042, 4294901760
    %v3044 = vsub.f32 %v3042, %v3043
    %v3045 = vand.u32 %v3044, 4294901760
    %3046 = vmatpush1.msra.mxu0 %v3045
    %v3047 = vand.u32 %v154, 4294901760
    %v3048 = vsub.f32 %v154, %v3047
    %v3049 = vand.u32 %v3048, 4294901760
    %v3050 = vsub.f32 %v3048, %v3049
    %v3051 = vand.u32 %v3050, 4294901760
    %3052 = vmatprep.subr.mxu0 %v3051
    %v3053 = vand.u32 %v153, 4294901760
    %v3054 = vsub.f32 %v153, %v3053
    %v3055 = vand.u32 %v3054, 4294901760
    %v3056 = vsub.f32 %v3054, %v3055
    %v3057 = vand.u32 %v3056, 4294901760
    %3058 = vmatpush1.msra.mxu0 %v3057
    %v3059 = vand.u32 %v156, 4294901760
    %v3060 = vsub.f32 %v156, %v3059
    %v3061 = vand.u32 %v3060, 4294901760
    %v3062 = vsub.f32 %v3060, %v3061
    %v3063 = vand.u32 %v3062, 4294901760
    %3064 = vmatprep.subr.mxu0 %v3063
    %v3065 = vand.u32 %v155, 4294901760
    %v3066 = vsub.f32 %v155, %v3065
    %v3067 = vand.u32 %v3066, 4294901760
    %v3068 = vsub.f32 %v3066, %v3067
    %v3069 = vand.u32 %v3068, 4294901760
    %3070 = vmatpush1.msra.mxu0 %v3069
    %v3071 = vand.u32 %v158, 4294901760
    %v3072 = vsub.f32 %v158, %v3071
    %v3073 = vand.u32 %v3072, 4294901760
    %v3074 = vsub.f32 %v3072, %v3073
    %v3075 = vand.u32 %v3074, 4294901760
    %3076 = vmatprep.subr.mxu0 %v3075
    %v3077 = vand.u32 %v157, 4294901760
    %v3078 = vsub.f32 %v157, %v3077
    %v3079 = vand.u32 %v3078, 4294901760
    %v3080 = vsub.f32 %v3078, %v3079
    %v3081 = vand.u32 %v3080, 4294901760
    %3082 = vmatpush1.msra.mxu0 %v3081
    %v3083 = vand.u32 %v160, 4294901760
    %v3084 = vsub.f32 %v160, %v3083
    %v3085 = vand.u32 %v3084, 4294901760
    %v3086 = vsub.f32 %v3084, %v3085
    %v3087 = vand.u32 %v3086, 4294901760
    %3088 = vmatprep.subr.mxu0 %v3087
    %v3089 = vand.u32 %v159, 4294901760
    %v3090 = vsub.f32 %v159, %v3089
    %v3091 = vand.u32 %v3090, 4294901760
    %v3092 = vsub.f32 %v3090, %v3091
    %v3093 = vand.u32 %v3092, 4294901760
    %3094 = vmatpush1.msra.mxu0 %v3093
    %3095 = vmatprep.subr.mxu0 0.0
    %3096 = vmatpush1.msra.mxu0 0.0
    %3097 = vmatprep.subr.mxu0 0.0
    %3098 = vmatpush1.msra.mxu0 0.0
    %3099 = vmatprep.subr.mxu0 0.0
    %3100 = vmatpush1.msra.mxu0 0.0
    %3101 = vmatprep.subr.mxu0 0.0
    %3102 = vmatpush1.msra.mxu0 0.0
    %3103 = vmatprep.subr.mxu0 0.0
    %3104 = vmatpush1.msra.mxu0 0.0
    %3105 = vmatprep.subr.mxu0 0.0
    %3106 = vmatpush1.msra.mxu0 0.0
    %3107 = vmatprep.subr.mxu0 0.0
    %3108 = vmatpush1.msra.mxu0 0.0
    %3109 = vmatprep.subr.mxu0 0.0
    %3110 = vmatpush1.msra.mxu0 0.0
    %3111 = vmatprep.subr.mxu0 0.0
    %3112 = vmatpush1.msra.mxu0 0.0
    %3113 = vmatprep.subr.mxu0 0.0
    %3114 = vmatpush1.msra.mxu0 0.0
    %3115 = vmatprep.subr.mxu0 0.0
    %3116 = vmatpush1.msra.mxu0 0.0
    %3117 = vmatprep.subr.mxu0 0.0
    %3118 = vmatpush1.msra.mxu0 0.0
    %3119 = vmatprep.subr.mxu0 0.0
    %3120 = vmatpush1.msra.mxu0 0.0
    %3121 = vmatprep.subr.mxu0 0.0
    %3122 = vmatpush1.msra.mxu0 0.0
    %3123 = vmatprep.subr.mxu0 0.0
    %3124 = vmatpush1.msra.mxu0 0.0
    %3125 = vmatprep.subr.mxu0 0.0
    %3126 = vmatpush1.msra.mxu0 0.0
    %3127 = vmatprep.subr.mxu0 0.0
    %3128 = vmatpush1.msra.mxu0 0.0
    %3129 = vmatprep.subr.mxu0 0.0
    %3130 = vmatpush1.msra.mxu0 0.0
    %3131 = vmatprep.subr.mxu0 0.0
    %3132 = vmatpush1.msra.mxu0 0.0
    %3133 = vmatprep.subr.mxu0 0.0
    %3134 = vmatpush1.msra.mxu0 0.0
    %3135 = vmatprep.subr.mxu0 0.0
    %3136 = vmatpush1.msra.mxu0 0.0
    %3137 = vmatprep.subr.mxu0 0.0
    %3138 = vmatpush1.msra.mxu0 0.0
    %3139 = vmatprep.subr.mxu0 0.0
    %3140 = vmatpush1.msra.mxu0 0.0
    %3141 = vmatprep.subr.mxu0 0.0
    %3142 = vmatpush1.msra.mxu0 0.0
    %3143 = vmatprep.mubr.f32.mxu0 0.0
    %v3144 = vand.u32 %v2905, 4294901760
    %3145 = vmatmul.mubr.f32.gmra.mrb[0].mxu0 %v3144
    %v3146 = vpop.f32.mrb[0].mxu0
    %v3147 = vadd.f32 %v2995, %v3146
    %v3148 = vpop.f32.mrb[0].mxu0
    %v3149 = vadd.f32 %v2997, %v3148
    %3150 = vdwg.mxu0
    %v3151 = vand.u32 %v146, 4294901760
    %v3152 = vsub.f32 %v146, %v3151
    %3153 = vmatprep.subr.mxu0 %v3152
    %v3154 = vand.u32 %v145, 4294901760
    %v3155 = vsub.f32 %v145, %v3154
    %3156 = vmatpush1.msra.mxu0 %v3155
    %v3157 = vand.u32 %v148, 4294901760
    %v3158 = vsub.f32 %v148, %v3157
    %3159 = vmatprep.subr.mxu0 %v3158
    %v3160 = vand.u32 %v147, 4294901760
    %v3161 = vsub.f32 %v147, %v3160
    %3162 = vmatpush1.msra.mxu0 %v3161
    %v3163 = vand.u32 %v150, 4294901760
    %v3164 = vsub.f32 %v150, %v3163
    %3165 = vmatprep.subr.mxu0 %v3164
    %v3166 = vand.u32 %v149, 4294901760
    %v3167 = vsub.f32 %v149, %v3166
    %3168 = vmatpush1.msra.mxu0 %v3167
    %v3169 = vand.u32 %v152, 4294901760
    %v3170 = vsub.f32 %v152, %v3169
    %3171 = vmatprep.subr.mxu0 %v3170
    %v3172 = vand.u32 %v151, 4294901760
    %v3173 = vsub.f32 %v151, %v3172
    %3174 = vmatpush1.msra.mxu0 %v3173
    %v3175 = vand.u32 %v154, 4294901760
    %v3176 = vsub.f32 %v154, %v3175
    %3177 = vmatprep.subr.mxu0 %v3176
    %v3178 = vand.u32 %v153, 4294901760
    %v3179 = vsub.f32 %v153, %v3178
    %3180 = vmatpush1.msra.mxu0 %v3179
    %v3181 = vand.u32 %v156, 4294901760
    %v3182 = vsub.f32 %v156, %v3181
    %3183 = vmatprep.subr.mxu0 %v3182
    %v3184 = vand.u32 %v155, 4294901760
    %v3185 = vsub.f32 %v155, %v3184
    %3186 = vmatpush1.msra.mxu0 %v3185
    %v3187 = vand.u32 %v158, 4294901760
    %v3188 = vsub.f32 %v158, %v3187
    %3189 = vmatprep.subr.mxu0 %v3188
    %v3190 = vand.u32 %v157, 4294901760
    %v3191 = vsub.f32 %v157, %v3190
    %3192 = vmatpush1.msra.mxu0 %v3191
    %v3193 = vand.u32 %v160, 4294901760
    %v3194 = vsub.f32 %v160, %v3193
    %3195 = vmatprep.subr.mxu0 %v3194
    %v3196 = vand.u32 %v159, 4294901760
    %v3197 = vsub.f32 %v159, %v3196
    %3198 = vmatpush1.msra.mxu0 %v3197
    %3199 = vmatprep.subr.mxu0 0.0
    %3200 = vmatpush1.msra.mxu0 0.0
    %3201 = vmatprep.subr.mxu0 0.0
    %3202 = vmatpush1.msra.mxu0 0.0
    %3203 = vmatprep.subr.mxu0 0.0
    %3204 = vmatpush1.msra.mxu0 0.0
    %3205 = vmatprep.subr.mxu0 0.0
    %3206 = vmatpush1.msra.mxu0 0.0
    %3207 = vmatprep.subr.mxu0 0.0
    %3208 = vmatpush1.msra.mxu0 0.0
    %3209 = vmatprep.subr.mxu0 0.0
    %3210 = vmatpush1.msra.mxu0 0.0
    %3211 = vmatprep.subr.mxu0 0.0
    %3212 = vmatpush1.msra.mxu0 0.0
    %3213 = vmatprep.subr.mxu0 0.0
    %3214 = vmatpush1.msra.mxu0 0.0
    %3215 = vmatprep.subr.mxu0 0.0
    %3216 = vmatpush1.msra.mxu0 0.0
    %3217 = vmatprep.subr.mxu0 0.0
    %3218 = vmatpush1.msra.mxu0 0.0
    %3219 = vmatprep.subr.mxu0 0.0
    %3220 = vmatpush1.msra.mxu0 0.0
    %3221 = vmatprep.subr.mxu0 0.0
    %3222 = vmatpush1.msra.mxu0 0.0
    %3223 = vmatprep.subr.mxu0 0.0
    %3224 = vmatpush1.msra.mxu0 0.0
    %3225 = vmatprep.subr.mxu0 0.0
    %3226 = vmatpush1.msra.mxu0 0.0
    %3227 = vmatprep.subr.mxu0 0.0
    %3228 = vmatpush1.msra.mxu0 0.0
    %3229 = vmatprep.subr.mxu0 0.0
    %3230 = vmatpush1.msra.mxu0 0.0
    %3231 = vmatprep.subr.mxu0 0.0
    %3232 = vmatpush1.msra.mxu0 0.0
    %3233 = vmatprep.subr.mxu0 0.0
    %3234 = vmatpush1.msra.mxu0 0.0
    %3235 = vmatprep.subr.mxu0 0.0
    %3236 = vmatpush1.msra.mxu0 0.0
    %3237 = vmatprep.subr.mxu0 0.0
    %3238 = vmatpush1.msra.mxu0 0.0
    %3239 = vmatprep.subr.mxu0 0.0
    %3240 = vmatpush1.msra.mxu0 0.0
    %3241 = vmatprep.subr.mxu0 0.0
    %3242 = vmatpush1.msra.mxu0 0.0
    %3243 = vmatprep.subr.mxu0 0.0
    %3244 = vmatpush1.msra.mxu0 0.0
    %3245 = vmatprep.subr.mxu0 0.0
    %3246 = vmatpush1.msra.mxu0 0.0
    %3247 = vmatprep.mubr.f32.mxu0 0.0
    %v3248 = vand.u32 %v2905, 4294901760
    %v3249 = vsub.f32 %v2905, %v3248
    %3250 = vmatmul.mubr.f32.gmra.mrb[0].mxu0 %v3249
    %v3251 = vpop.f32.mrb[0].mxu0
    %v3252 = vadd.f32 %v3147, %v3251
    %v3253 = vpop.f32.mrb[0].mxu0
    %v3254 = vadd.f32 %v3149, %v3253
    %3255 = vdwg.mxu0
    %v3256 = vand.u32 %v146, 4294901760
    %3257 = vmatprep.subr.mxu0 %v3256
    %v3258 = vand.u32 %v145, 4294901760
    %3259 = vmatpush1.msra.mxu0 %v3258
    %v3260 = vand.u32 %v148, 4294901760
    %3261 = vmatprep.subr.mxu0 %v3260
    %v3262 = vand.u32 %v147, 4294901760
    %3263 = vmatpush1.msra.mxu0 %v3262
    %v3264 = vand.u32 %v150, 4294901760
    %3265 = vmatprep.subr.mxu0 %v3264
    %v3266 = vand.u32 %v149, 4294901760
    %3267 = vmatpush1.msra.mxu0 %v3266
    %v3268 = vand.u32 %v152, 4294901760
    %3269 = vmatprep.subr.mxu0 %v3268
    %v3270 = vand.u32 %v151, 4294901760
    %3271 = vmatpush1.msra.mxu0 %v3270
    %v3272 = vand.u32 %v154, 4294901760
    %3273 = vmatprep.subr.mxu0 %v3272
    %v3274 = vand.u32 %v153, 4294901760
    %3275 = vmatpush1.msra.mxu0 %v3274
    %v3276 = vand.u32 %v156, 4294901760
    %3277 = vmatprep.subr.mxu0 %v3276
    %v3278 = vand.u32 %v155, 4294901760
    %3279 = vmatpush1.msra.mxu0 %v3278
    %v3280 = vand.u32 %v158, 4294901760
    %3281 = vmatprep.subr.mxu0 %v3280
    %v3282 = vand.u32 %v157, 4294901760
    %3283 = vmatpush1.msra.mxu0 %v3282
    %v3284 = vand.u32 %v160, 4294901760
    %3285 = vmatprep.subr.mxu0 %v3284
    %v3286 = vand.u32 %v159, 4294901760
    %3287 = vmatpush1.msra.mxu0 %v3286
    %3288 = vmatprep.subr.mxu0 0.0
    %3289 = vmatpush1.msra.mxu0 0.0
    %3290 = vmatprep.subr.mxu0 0.0
    %3291 = vmatpush1.msra.mxu0 0.0
    %3292 = vmatprep.subr.mxu0 0.0
    %3293 = vmatpush1.msra.mxu0 0.0
    %3294 = vmatprep.subr.mxu0 0.0
    %3295 = vmatpush1.msra.mxu0 0.0
    %3296 = vmatprep.subr.mxu0 0.0
    %3297 = vmatpush1.msra.mxu0 0.0
    %3298 = vmatprep.subr.mxu0 0.0
    %3299 = vmatpush1.msra.mxu0 0.0
    %3300 = vmatprep.subr.mxu0 0.0
    %3301 = vmatpush1.msra.mxu0 0.0
    %3302 = vmatprep.subr.mxu0 0.0
    %3303 = vmatpush1.msra.mxu0 0.0
    %3304 = vmatprep.subr.mxu0 0.0
    %3305 = vmatpush1.msra.mxu0 0.0
    %3306 = vmatprep.subr.mxu0 0.0
    %3307 = vmatpush1.msra.mxu0 0.0
    %3308 = vmatprep.subr.mxu0 0.0
    %3309 = vmatpush1.msra.mxu0 0.0
    %3310 = vmatprep.subr.mxu0 0.0
    %3311 = vmatpush1.msra.mxu0 0.0
    %3312 = vmatprep.subr.mxu0 0.0
    %3313 = vmatpush1.msra.mxu0 0.0
    %3314 = vmatprep.subr.mxu0 0.0
    %3315 = vmatpush1.msra.mxu0 0.0
    %3316 = vmatprep.subr.mxu0 0.0
    %3317 = vmatpush1.msra.mxu0 0.0
    %3318 = vmatprep.subr.mxu0 0.0
    %3319 = vmatpush1.msra.mxu0 0.0
    %3320 = vmatprep.subr.mxu0 0.0
    %3321 = vmatpush1.msra.mxu0 0.0
    %3322 = vmatprep.subr.mxu0 0.0
    %3323 = vmatpush1.msra.mxu0 0.0
    %3324 = vmatprep.subr.mxu0 0.0
    %3325 = vmatpush1.msra.mxu0 0.0
    %3326 = vmatprep.subr.mxu0 0.0
    %3327 = vmatpush1.msra.mxu0 0.0
    %3328 = vmatprep.subr.mxu0 0.0
    %3329 = vmatpush1.msra.mxu0 0.0
    %3330 = vmatprep.subr.mxu0 0.0
    %3331 = vmatpush1.msra.mxu0 0.0
    %3332 = vmatprep.subr.mxu0 0.0
    %3333 = vmatpush1.msra.mxu0 0.0
    %3334 = vmatprep.subr.mxu0 0.0
    %3335 = vmatpush1.msra.mxu0 0.0
    %3336 = vmatprep.mubr.f32.mxu0 0.0
    %v3337 = vand.u32 %v2905, 4294901760
    %v3338 = vsub.f32 %v2905, %v3337
    %v3339 = vand.u32 %v3338, 4294901760
    %3340 = vmatmul.mubr.f32.gmra.mrb[0].mxu0 %v3339
    %v3341 = vpop.f32.mrb[0].mxu0
    %v3342 = vadd.f32 %v3252, %v3341
    %v3343 = vpop.f32.mrb[0].mxu0
    %v3344 = vadd.f32 %v3254, %v3343
    %3345 = vdwg.mxu0
    %v3346 = vand.u32 %v146, 4294901760
    %v3347 = vsub.f32 %v146, %v3346
    %v3348 = vand.u32 %v3347, 4294901760
    %3349 = vmatprep.subr.mxu0 %v3348
    %v3350 = vand.u32 %v145, 4294901760
    %v3351 = vsub.f32 %v145, %v3350
    %v3352 = vand.u32 %v3351, 4294901760
    %3353 = vmatpush1.msra.mxu0 %v3352
    %v3354 = vand.u32 %v148, 4294901760
    %v3355 = vsub.f32 %v148, %v3354
    %v3356 = vand.u32 %v3355, 4294901760
    %3357 = vmatprep.subr.mxu0 %v3356
    %v3358 = vand.u32 %v147, 4294901760
    %v3359 = vsub.f32 %v147, %v3358
    %v3360 = vand.u32 %v3359, 4294901760
    %3361 = vmatpush1.msra.mxu0 %v3360
    %v3362 = vand.u32 %v150, 4294901760
    %v3363 = vsub.f32 %v150, %v3362
    %v3364 = vand.u32 %v3363, 4294901760
    %3365 = vmatprep.subr.mxu0 %v3364
    %v3366 = vand.u32 %v149, 4294901760
    %v3367 = vsub.f32 %v149, %v3366
    %v3368 = vand.u32 %v3367, 4294901760
    %3369 = vmatpush1.msra.mxu0 %v3368
    %v3370 = vand.u32 %v152, 4294901760
    %v3371 = vsub.f32 %v152, %v3370
    %v3372 = vand.u32 %v3371, 4294901760
    %3373 = vmatprep.subr.mxu0 %v3372
    %v3374 = vand.u32 %v151, 4294901760
    %v3375 = vsub.f32 %v151, %v3374
    %v3376 = vand.u32 %v3375, 4294901760
    %3377 = vmatpush1.msra.mxu0 %v3376
    %v3378 = vand.u32 %v154, 4294901760
    %v3379 = vsub.f32 %v154, %v3378
    %v3380 = vand.u32 %v3379, 4294901760
    %3381 = vmatprep.subr.mxu0 %v3380
    %v3382 = vand.u32 %v153, 4294901760
    %v3383 = vsub.f32 %v153, %v3382
    %v3384 = vand.u32 %v3383, 4294901760
    %3385 = vmatpush1.msra.mxu0 %v3384
    %v3386 = vand.u32 %v156, 4294901760
    %v3387 = vsub.f32 %v156, %v3386
    %v3388 = vand.u32 %v3387, 4294901760
    %3389 = vmatprep.subr.mxu0 %v3388
    %v3390 = vand.u32 %v155, 4294901760
    %v3391 = vsub.f32 %v155, %v3390
    %v3392 = vand.u32 %v3391, 4294901760
    %3393 = vmatpush1.msra.mxu0 %v3392
    %v3394 = vand.u32 %v158, 4294901760
    %v3395 = vsub.f32 %v158, %v3394
    %v3396 = vand.u32 %v3395, 4294901760
    %3397 = vmatprep.subr.mxu0 %v3396
    %v3398 = vand.u32 %v157, 4294901760
    %v3399 = vsub.f32 %v157, %v3398
    %v3400 = vand.u32 %v3399, 4294901760
    %3401 = vmatpush1.msra.mxu0 %v3400
    %v3402 = vand.u32 %v160, 4294901760
    %v3403 = vsub.f32 %v160, %v3402
    %v3404 = vand.u32 %v3403, 4294901760
    %3405 = vmatprep.subr.mxu0 %v3404
    %v3406 = vand.u32 %v159, 4294901760
    %v3407 = vsub.f32 %v159, %v3406
    %v3408 = vand.u32 %v3407, 4294901760
    %3409 = vmatpush1.msra.mxu0 %v3408
    %3410 = vmatprep.subr.mxu0 0.0
    %3411 = vmatpush1.msra.mxu0 0.0
    %3412 = vmatprep.subr.mxu0 0.0
    %3413 = vmatpush1.msra.mxu0 0.0
    %3414 = vmatprep.subr.mxu0 0.0
    %3415 = vmatpush1.msra.mxu0 0.0
    %3416 = vmatprep.subr.mxu0 0.0
    %3417 = vmatpush1.msra.mxu0 0.0
    %3418 = vmatprep.subr.mxu0 0.0
    %3419 = vmatpush1.msra.mxu0 0.0
    %3420 = vmatprep.subr.mxu0 0.0
    %3421 = vmatpush1.msra.mxu0 0.0
    %3422 = vmatprep.subr.mxu0 0.0
    %3423 = vmatpush1.msra.mxu0 0.0
    %3424 = vmatprep.subr.mxu0 0.0
    %3425 = vmatpush1.msra.mxu0 0.0
    %3426 = vmatprep.subr.mxu0 0.0
    %3427 = vmatpush1.msra.mxu0 0.0
    %3428 = vmatprep.subr.mxu0 0.0
    %3429 = vmatpush1.msra.mxu0 0.0
    %3430 = vmatprep.subr.mxu0 0.0
    %3431 = vmatpush1.msra.mxu0 0.0
    %3432 = vmatprep.subr.mxu0 0.0
    %3433 = vmatpush1.msra.mxu0 0.0
    %3434 = vmatprep.subr.mxu0 0.0
    %3435 = vmatpush1.msra.mxu0 0.0
    %3436 = vmatprep.subr.mxu0 0.0
    %3437 = vmatpush1.msra.mxu0 0.0
    %3438 = vmatprep.subr.mxu0 0.0
    %3439 = vmatpush1.msra.mxu0 0.0
    %3440 = vmatprep.subr.mxu0 0.0
    %3441 = vmatpush1.msra.mxu0 0.0
    %3442 = vmatprep.subr.mxu0 0.0
    %3443 = vmatpush1.msra.mxu0 0.0
    %3444 = vmatprep.subr.mxu0 0.0
    %3445 = vmatpush1.msra.mxu0 0.0
    %3446 = vmatprep.subr.mxu0 0.0
    %3447 = vmatpush1.msra.mxu0 0.0
    %3448 = vmatprep.subr.mxu0 0.0
    %3449 = vmatpush1.msra.mxu0 0.0
    %3450 = vmatprep.subr.mxu0 0.0
    %3451 = vmatpush1.msra.mxu0 0.0
    %3452 = vmatprep.subr.mxu0 0.0
    %3453 = vmatpush1.msra.mxu0 0.0
    %3454 = vmatprep.subr.mxu0 0.0
    %3455 = vmatpush1.msra.mxu0 0.0
    %3456 = vmatprep.subr.mxu0 0.0
    %3457 = vmatpush1.msra.mxu0 0.0
    %3458 = vmatprep.mubr.f32.mxu0 0.0
    %v3459 = vand.u32 %v2905, 4294901760
    %3460 = vmatmul.mubr.f32.gmra.mrb[0].mxu0 %v3459
    %v3461 = vpop.f32.mrb[0].mxu0
    %v3462 = vadd.f32 %v3342, %v3461
    %v3463 = vpop.f32.mrb[0].mxu0
    %v3464 = vadd.f32 %v3344, %v3463
    %3465 = vdwg.mxu0
    %v3466 = vand.u32 %v146, 4294901760
    %3467 = vmatprep.subr.mxu0 %v3466
    %v3468 = vand.u32 %v145, 4294901760
    %3469 = vmatpush1.msra.mxu0 %v3468
    %v3470 = vand.u32 %v148, 4294901760
    %3471 = vmatprep.subr.mxu0 %v3470
    %v3472 = vand.u32 %v147, 4294901760
    %3473 = vmatpush1.msra.mxu0 %v3472
    %v3474 = vand.u32 %v150, 4294901760
    %3475 = vmatprep.subr.mxu0 %v3474
    %v3476 = vand.u32 %v149, 4294901760
    %3477 = vmatpush1.msra.mxu0 %v3476
    %v3478 = vand.u32 %v152, 4294901760
    %3479 = vmatprep.subr.mxu0 %v3478
    %v3480 = vand.u32 %v151, 4294901760
    %3481 = vmatpush1.msra.mxu0 %v3480
    %v3482 = vand.u32 %v154, 4294901760
    %3483 = vmatprep.subr.mxu0 %v3482
    %v3484 = vand.u32 %v153, 4294901760
    %3485 = vmatpush1.msra.mxu0 %v3484
    %v3486 = vand.u32 %v156, 4294901760
    %3487 = vmatprep.subr.mxu0 %v3486
    %v3488 = vand.u32 %v155, 4294901760
    %3489 = vmatpush1.msra.mxu0 %v3488
    %v3490 = vand.u32 %v158, 4294901760
    %3491 = vmatprep.subr.mxu0 %v3490
    %v3492 = vand.u32 %v157, 4294901760
    %3493 = vmatpush1.msra.mxu0 %v3492
    %v3494 = vand.u32 %v160, 4294901760
    %3495 = vmatprep.subr.mxu0 %v3494
    %v3496 = vand.u32 %v159, 4294901760
    %3497 = vmatpush1.msra.mxu0 %v3496
    %3498 = vmatprep.subr.mxu0 0.0
    %3499 = vmatpush1.msra.mxu0 0.0
    %3500 = vmatprep.subr.mxu0 0.0
    %3501 = vmatpush1.msra.mxu0 0.0
    %3502 = vmatprep.subr.mxu0 0.0
    %3503 = vmatpush1.msra.mxu0 0.0
    %3504 = vmatprep.subr.mxu0 0.0
    %3505 = vmatpush1.msra.mxu0 0.0
    %3506 = vmatprep.subr.mxu0 0.0
    %3507 = vmatpush1.msra.mxu0 0.0
    %3508 = vmatprep.subr.mxu0 0.0
    %3509 = vmatpush1.msra.mxu0 0.0
    %3510 = vmatprep.subr.mxu0 0.0
    %3511 = vmatpush1.msra.mxu0 0.0
    %3512 = vmatprep.subr.mxu0 0.0
    %3513 = vmatpush1.msra.mxu0 0.0
    %3514 = vmatprep.subr.mxu0 0.0
    %3515 = vmatpush1.msra.mxu0 0.0
    %3516 = vmatprep.subr.mxu0 0.0
    %3517 = vmatpush1.msra.mxu0 0.0
    %3518 = vmatprep.subr.mxu0 0.0
    %3519 = vmatpush1.msra.mxu0 0.0
    %3520 = vmatprep.subr.mxu0 0.0
    %3521 = vmatpush1.msra.mxu0 0.0
    %3522 = vmatprep.subr.mxu0 0.0
    %3523 = vmatpush1.msra.mxu0 0.0
    %3524 = vmatprep.subr.mxu0 0.0
    %3525 = vmatpush1.msra.mxu0 0.0
    %3526 = vmatprep.subr.mxu0 0.0
    %3527 = vmatpush1.msra.mxu0 0.0
    %3528 = vmatprep.subr.mxu0 0.0
    %3529 = vmatpush1.msra.mxu0 0.0
    %3530 = vmatprep.subr.mxu0 0.0
    %3531 = vmatpush1.msra.mxu0 0.0
    %3532 = vmatprep.subr.mxu0 0.0
    %3533 = vmatpush1.msra.mxu0 0.0
    %3534 = vmatprep.subr.mxu0 0.0
    %3535 = vmatpush1.msra.mxu0 0.0
    %3536 = vmatprep.subr.mxu0 0.0
    %3537 = vmatpush1.msra.mxu0 0.0
    %3538 = vmatprep.subr.mxu0 0.0
    %3539 = vmatpush1.msra.mxu0 0.0
    %3540 = vmatprep.subr.mxu0 0.0
    %3541 = vmatpush1.msra.mxu0 0.0
    %3542 = vmatprep.subr.mxu0 0.0
    %3543 = vmatpush1.msra.mxu0 0.0
    %3544 = vmatprep.subr.mxu0 0.0
    %3545 = vmatpush1.msra.mxu0 0.0
    %3546 = vmatprep.mubr.f32.mxu0 0.0
    %v3547 = vand.u32 %v2905, 4294901760
    %3548 = vmatmul.mubr.f32.gmra.mrb[0].mxu0 %v3547
    %v3549 = vpop.f32.mrb[0].mxu0
    %v3550 = vadd.f32 %v3462, %v3549
    %v3551 = vpop.f32.mrb[0].mxu0
    %v3552 = vadd.f32 %v3464, %v3551
    %3553 = vdwg.mxu0
    %v3554 = vadd.f32 %v2904, %v3550
    %v3555 = vxor.u32 %v3554, 2147483648
    %v3556 = vmul.f32 %v3555, 1.442695
    %v3557 = vpow.pop %v3556
    %v3558 = vadd.f32 %v3557, 1.0
    %v3559 = vrcp.pop %v3558
    %v3560 = vmul.f32 1.0, %v3559
    %v3561 = vadd.f32 %v3552, %v825
    %v3562 = vmul.f32 %v3560, %v3561
    %v3564 = vrot.slane %v2904, 1
    %v3566 = vadd.f32 %v3564, %v3562
    %v3567 = vtanh.pop %v3566
    %v3568 = vsub.f32 1.0, %v3560
    %3570 = vrot.lane.b32.xlu0 %v3567, 64
    %v3571 = vpop.permute.xlu0 %3570
    %v3573 = vmul.f32 %v3568, %v3571
    %v3574 = vmul.f32 %v3560, %v2892
    %v3575 = vadd.f32 %v3573, %v3574
    %v3577 = vlaneseq
    %v3578 = vshrl.u32 %v3577, 7
    %v3579 = vsub.s32 0, %v3578
    %v3580 = vrot.slane %v3575, %v3579
    %3581 = vrot.lane.b32.xlu0 %v3580, 64
    %v3582 = vpop.permute.xlu0 %3581
    %3584 = vst.msk [vmem:[#allocation3 + $0x4] sm:$0x1] %vm850, %v3582
    %3585 = vst.msk [vmem:[#allocation3 + $0x3] sm:$0x1] %vm852, %v3582
    %s3586 = scalar_lea.vmem [#allocation2], 5
    %v3587 = vld [vmem:[%s3586] ss:$8 sm:$0x3]
    %v3588 = vsel %vm143, %v3582, 0
    %v3590 = vand.u32 %v146, 4294901760
    %3591 = vmatprep.subr.mxu0 %v3590
    %v3592 = vand.u32 %v145, 4294901760
    %3593 = vmatpush1.msra.mxu0 %v3592
    %v3594 = vand.u32 %v148, 4294901760
    %3595 = vmatprep.subr.mxu0 %v3594
    %v3596 = vand.u32 %v147, 4294901760
    %3597 = vmatpush1.msra.mxu0 %v3596
    %v3598 = vand.u32 %v150, 4294901760
    %3599 = vmatprep.subr.mxu0 %v3598
    %v3600 = vand.u32 %v149, 4294901760
    %3601 = vmatpush1.msra.mxu0 %v3600
    %v3602 = vand.u32 %v152, 4294901760
    %3603 = vmatprep.subr.mxu0 %v3602
    %v3604 = vand.u32 %v151, 4294901760
    %3605 = vmatpush1.msra.mxu0 %v3604
    %v3606 = vand.u32 %v154, 4294901760
    %3607 = vmatprep.subr.mxu0 %v3606
    %v3608 = vand.u32 %v153, 4294901760
    %3609 = vmatpush1.msra.mxu0 %v3608
    %v3610 = vand.u32 %v156, 4294901760
    %3611 = vmatprep.subr.mxu0 %v3610
    %v3612 = vand.u32 %v155, 4294901760
    %3613 = vmatpush1.msra.mxu0 %v3612
    %v3614 = vand.u32 %v158, 4294901760
    %3615 = vmatprep.subr.mxu0 %v3614
    %v3616 = vand.u32 %v157, 4294901760
    %3617 = vmatpush1.msra.mxu0 %v3616
    %v3618 = vand.u32 %v160, 4294901760
    %3619 = vmatprep.subr.mxu0 %v3618
    %v3620 = vand.u32 %v159, 4294901760
    %3621 = vmatpush1.msra.mxu0 %v3620
    %3622 = vmatprep.subr.mxu0 0.0
    %3623 = vmatpush1.msra.mxu0 0.0
    %3624 = vmatprep.subr.mxu0 0.0
    %3625 = vmatpush1.msra.mxu0 0.0
    %3626 = vmatprep.subr.mxu0 0.0
    %3627 = vmatpush1.msra.mxu0 0.0
    %3628 = vmatprep.subr.mxu0 0.0
    %3629 = vmatpush1.msra.mxu0 0.0
    %3630 = vmatprep.subr.mxu0 0.0
    %3631 = vmatpush1.msra.mxu0 0.0
    %3632 = vmatprep.subr.mxu0 0.0
    %3633 = vmatpush1.msra.mxu0 0.0
    %3634 = vmatprep.subr.mxu0 0.0
    %3635 = vmatpush1.msra.mxu0 0.0
    %3636 = vmatprep.subr.mxu0 0.0
    %3637 = vmatpush1.msra.mxu0 0.0
    %3638 = vmatprep.subr.mxu0 0.0
    %3639 = vmatpush1.msra.mxu0 0.0
    %3640 = vmatprep.subr.mxu0 0.0
    %3641 = vmatpush1.msra.mxu0 0.0
    %3642 = vmatprep.subr.mxu0 0.0
    %3643 = vmatpush1.msra.mxu0 0.0
    %3644 = vmatprep.subr.mxu0 0.0
    %3645 = vmatpush1.msra.mxu0 0.0
    %3646 = vmatprep.subr.mxu0 0.0
    %3647 = vmatpush1.msra.mxu0 0.0
    %3648 = vmatprep.subr.mxu0 0.0
    %3649 = vmatpush1.msra.mxu0 0.0
    %3650 = vmatprep.subr.mxu0 0.0
    %3651 = vmatpush1.msra.mxu0 0.0
    %3652 = vmatprep.subr.mxu0 0.0
    %3653 = vmatpush1.msra.mxu0 0.0
    %3654 = vmatprep.subr.mxu0 0.0
    %3655 = vmatpush1.msra.mxu0 0.0
    %3656 = vmatprep.subr.mxu0 0.0
    %3657 = vmatpush1.msra.mxu0 0.0
    %3658 = vmatprep.subr.mxu0 0.0
    %3659 = vmatpush1.msra.mxu0 0.0
    %3660 = vmatprep.subr.mxu0 0.0
    %3661 = vmatpush1.msra.mxu0 0.0
    %3662 = vmatprep.subr.mxu0 0.0
    %3663 = vmatpush1.msra.mxu0 0.0
    %3664 = vmatprep.subr.mxu0 0.0
    %3665 = vmatpush1.msra.mxu0 0.0
    %3666 = vmatprep.subr.mxu0 0.0
    %3667 = vmatpush1.msra.mxu0 0.0
    %3668 = vmatprep.subr.mxu0 0.0
    %3669 = vmatpush1.msra.mxu0 0.0
    %3670 = vmatprep.mubr.f32.mxu0 0.0
    %v3671 = vand.u32 %v3588, 4294901760
    %v3672 = vsub.f32 %v3588, %v3671
    %v3673 = vand.u32 %v3672, 4294901760
    %v3674 = vsub.f32 %v3672, %v3673
    %v3675 = vand.u32 %v3674, 4294901760
    %3676 = vmatmul.mubr.f32.gmra.mrb[0].mxu0 %v3675
    %v3677 = vpop.f32.mrb[0].mxu0
    %v3678 = vadd.f32 0.0, %v3677
    %v3679 = vpop.f32.mrb[0].mxu0
    %v3680 = vadd.f32 0.0, %v3679
    %3681 = vdwg.mxu0
    %v3682 = vand.u32 %v146, 4294901760
    %v3683 = vsub.f32 %v146, %v3682
    %v3684 = vand.u32 %v3683, 4294901760
    %v3685 = vsub.f32 %v3683, %v3684
    %v3686 = vand.u32 %v3685, 4294901760
    %3687 = vmatprep.subr.mxu0 %v3686
    %v3688 = vand.u32 %v145, 4294901760
    %v3689 = vsub.f32 %v145, %v3688
    %v3690 = vand.u32 %v3689, 4294901760
    %v3691 = vsub.f32 %v3689, %v3690
    %v3692 = vand.u32 %v3691, 4294901760
    %3693 = vmatpush1.msra.mxu0 %v3692
    %v3694 = vand.u32 %v148, 4294901760
    %v3695 = vsub.f32 %v148, %v3694
    %v3696 = vand.u32 %v3695, 4294901760
    %v3697 = vsub.f32 %v3695, %v3696
    %v3698 = vand.u32 %v3697, 4294901760
    %3699 = vmatprep.subr.mxu0 %v3698
    %v3700 = vand.u32 %v147, 4294901760
    %v3701 = vsub.f32 %v147, %v3700
    %v3702 = vand.u32 %v3701, 4294901760
    %v3703 = vsub.f32 %v3701, %v3702
    %v3704 = vand.u32 %v3703, 4294901760
    %3705 = vmatpush1.msra.mxu0 %v3704
    %v3706 = vand.u32 %v150, 4294901760
    %v3707 = vsub.f32 %v150, %v3706
    %v3708 = vand.u32 %v3707, 4294901760
    %v3709 = vsub.f32 %v3707, %v3708
    %v3710 = vand.u32 %v3709, 4294901760
    %3711 = vmatprep.subr.mxu0 %v3710
    %v3712 = vand.u32 %v149, 4294901760
    %v3713 = vsub.f32 %v149, %v3712
    %v3714 = vand.u32 %v3713, 4294901760
    %v3715 = vsub.f32 %v3713, %v3714
    %v3716 = vand.u32 %v3715, 4294901760
    %3717 = vmatpush1.msra.mxu0 %v3716
    %v3718 = vand.u32 %v152, 4294901760
    %v3719 = vsub.f32 %v152, %v3718
    %v3720 = vand.u32 %v3719, 4294901760
    %v3721 = vsub.f32 %v3719, %v3720
    %v3722 = vand.u32 %v3721, 4294901760
    %3723 = vmatprep.subr.mxu0 %v3722
    %v3724 = vand.u32 %v151, 4294901760
    %v3725 = vsub.f32 %v151, %v3724
    %v3726 = vand.u32 %v3725, 4294901760
    %v3727 = vsub.f32 %v3725, %v3726
    %v3728 = vand.u32 %v3727, 4294901760
    %3729 = vmatpush1.msra.mxu0 %v3728
    %v3730 = vand.u32 %v154, 4294901760
    %v3731 = vsub.f32 %v154, %v3730
    %v3732 = vand.u32 %v3731, 4294901760
    %v3733 = vsub.f32 %v3731, %v3732
    %v3734 = vand.u32 %v3733, 4294901760
    %3735 = vmatprep.subr.mxu0 %v3734
    %v3736 = vand.u32 %v153, 4294901760
    %v3737 = vsub.f32 %v153, %v3736
    %v3738 = vand.u32 %v3737, 4294901760
    %v3739 = vsub.f32 %v3737, %v3738
    %v3740 = vand.u32 %v3739, 4294901760
    %3741 = vmatpush1.msra.mxu0 %v3740
    %v3742 = vand.u32 %v156, 4294901760
    %v3743 = vsub.f32 %v156, %v3742
    %v3744 = vand.u32 %v3743, 4294901760
    %v3745 = vsub.f32 %v3743, %v3744
    %v3746 = vand.u32 %v3745, 4294901760
    %3747 = vmatprep.subr.mxu0 %v3746
    %v3748 = vand.u32 %v155, 4294901760
    %v3749 = vsub.f32 %v155, %v3748
    %v3750 = vand.u32 %v3749, 4294901760
    %v3751 = vsub.f32 %v3749, %v3750
    %v3752 = vand.u32 %v3751, 4294901760
    %3753 = vmatpush1.msra.mxu0 %v3752
    %v3754 = vand.u32 %v158, 4294901760
    %v3755 = vsub.f32 %v158, %v3754
    %v3756 = vand.u32 %v3755, 4294901760
    %v3757 = vsub.f32 %v3755, %v3756
    %v3758 = vand.u32 %v3757, 4294901760
    %3759 = vmatprep.subr.mxu0 %v3758
    %v3760 = vand.u32 %v157, 4294901760
    %v3761 = vsub.f32 %v157, %v3760
    %v3762 = vand.u32 %v3761, 4294901760
    %v3763 = vsub.f32 %v3761, %v3762
    %v3764 = vand.u32 %v3763, 4294901760
    %3765 = vmatpush1.msra.mxu0 %v3764
    %v3766 = vand.u32 %v160, 4294901760
    %v3767 = vsub.f32 %v160, %v3766
    %v3768 = vand.u32 %v3767, 4294901760
    %v3769 = vsub.f32 %v3767, %v3768
    %v3770 = vand.u32 %v3769, 4294901760
    %3771 = vmatprep.subr.mxu0 %v3770
    %v3772 = vand.u32 %v159, 4294901760
    %v3773 = vsub.f32 %v159, %v3772
    %v3774 = vand.u32 %v3773, 4294901760
    %v3775 = vsub.f32 %v3773, %v3774
    %v3776 = vand.u32 %v3775, 4294901760
    %3777 = vmatpush1.msra.mxu0 %v3776
    %3778 = vmatprep.subr.mxu0 0.0
    %3779 = vmatpush1.msra.mxu0 0.0
    %3780 = vmatprep.subr.mxu0 0.0
    %3781 = vmatpush1.msra.mxu0 0.0
    %3782 = vmatprep.subr.mxu0 0.0
    %3783 = vmatpush1.msra.mxu0 0.0
    %3784 = vmatprep.subr.mxu0 0.0
    %3785 = vmatpush1.msra.mxu0 0.0
    %3786 = vmatprep.subr.mxu0 0.0
    %3787 = vmatpush1.msra.mxu0 0.0
    %3788 = vmatprep.subr.mxu0 0.0
    %3789 = vmatpush1.msra.mxu0 0.0
    %3790 = vmatprep.subr.mxu0 0.0
    %3791 = vmatpush1.msra.mxu0 0.0
    %3792 = vmatprep.subr.mxu0 0.0
    %3793 = vmatpush1.msra.mxu0 0.0
    %3794 = vmatprep.subr.mxu0 0.0
    %3795 = vmatpush1.msra.mxu0 0.0
    %3796 = vmatprep.subr.mxu0 0.0
    %3797 = vmatpush1.msra.mxu0 0.0
    %3798 = vmatprep.subr.mxu0 0.0
    %3799 = vmatpush1.msra.mxu0 0.0
    %3800 = vmatprep.subr.mxu0 0.0
    %3801 = vmatpush1.msra.mxu0 0.0
    %3802 = vmatprep.subr.mxu0 0.0
    %3803 = vmatpush1.msra.mxu0 0.0
    %3804 = vmatprep.subr.mxu0 0.0
    %3805 = vmatpush1.msra.mxu0 0.0
    %3806 = vmatprep.subr.mxu0 0.0
    %3807 = vmatpush1.msra.mxu0 0.0
    %3808 = vmatprep.subr.mxu0 0.0
    %3809 = vmatpush1.msra.mxu0 0.0
    %3810 = vmatprep.subr.mxu0 0.0
    %3811 = vmatpush1.msra.mxu0 0.0
    %3812 = vmatprep.subr.mxu0 0.0
    %3813 = vmatpush1.msra.mxu0 0.0
    %3814 = vmatprep.subr.mxu0 0.0
    %3815 = vmatpush1.msra.mxu0 0.0
    %3816 = vmatprep.subr.mxu0 0.0
    %3817 = vmatpush1.msra.mxu0 0.0
    %3818 = vmatprep.subr.mxu0 0.0
    %3819 = vmatpush1.msra.mxu0 0.0
    %3820 = vmatprep.subr.mxu0 0.0
    %3821 = vmatpush1.msra.mxu0 0.0
    %3822 = vmatprep.subr.mxu0 0.0
    %3823 = vmatpush1.msra.mxu0 0.0
    %3824 = vmatprep.subr.mxu0 0.0
    %3825 = vmatpush1.msra.mxu0 0.0
    %3826 = vmatprep.mubr.f32.mxu0 0.0
    %v3827 = vand.u32 %v3588, 4294901760
    %3828 = vmatmul.mubr.f32.gmra.mrb[0].mxu0 %v3827
    %v3829 = vpop.f32.mrb[0].mxu0
    %v3830 = vadd.f32 %v3678, %v3829
    %v3831 = vpop.f32.mrb[0].mxu0
    %v3832 = vadd.f32 %v3680, %v3831
    %3833 = vdwg.mxu0
    %v3834 = vand.u32 %v146, 4294901760
    %v3835 = vsub.f32 %v146, %v3834
    %3836 = vmatprep.subr.mxu0 %v3835
    %v3837 = vand.u32 %v145, 4294901760
    %v3838 = vsub.f32 %v145, %v3837
    %3839 = vmatpush1.msra.mxu0 %v3838
    %v3840 = vand.u32 %v148, 4294901760
    %v3841 = vsub.f32 %v148, %v3840
    %3842 = vmatprep.subr.mxu0 %v3841
    %v3843 = vand.u32 %v147, 4294901760
    %v3844 = vsub.f32 %v147, %v3843
    %3845 = vmatpush1.msra.mxu0 %v3844
    %v3846 = vand.u32 %v150, 4294901760
    %v3847 = vsub.f32 %v150, %v3846
    %3848 = vmatprep.subr.mxu0 %v3847
    %v3849 = vand.u32 %v149, 4294901760
    %v3850 = vsub.f32 %v149, %v3849
    %3851 = vmatpush1.msra.mxu0 %v3850
    %v3852 = vand.u32 %v152, 4294901760
    %v3853 = vsub.f32 %v152, %v3852
    %3854 = vmatprep.subr.mxu0 %v3853
    %v3855 = vand.u32 %v151, 4294901760
    %v3856 = vsub.f32 %v151, %v3855
    %3857 = vmatpush1.msra.mxu0 %v3856
    %v3858 = vand.u32 %v154, 4294901760
    %v3859 = vsub.f32 %v154, %v3858
    %3860 = vmatprep.subr.mxu0 %v3859
    %v3861 = vand.u32 %v153, 4294901760
    %v3862 = vsub.f32 %v153, %v3861
    %3863 = vmatpush1.msra.mxu0 %v3862
    %v3864 = vand.u32 %v156, 4294901760
    %v3865 = vsub.f32 %v156, %v3864
    %3866 = vmatprep.subr.mxu0 %v3865
    %v3867 = vand.u32 %v155, 4294901760
    %v3868 = vsub.f32 %v155, %v3867
    %3869 = vmatpush1.msra.mxu0 %v3868
    %v3870 = vand.u32 %v158, 4294901760
    %v3871 = vsub.f32 %v158, %v3870
    %3872 = vmatprep.subr.mxu0 %v3871
    %v3873 = vand.u32 %v157, 4294901760
    %v3874 = vsub.f32 %v157, %v3873
    %3875 = vmatpush1.msra.mxu0 %v3874
    %v3876 = vand.u32 %v160, 4294901760
    %v3877 = vsub.f32 %v160, %v3876
    %3878 = vmatprep.subr.mxu0 %v3877
    %v3879 = vand.u32 %v159, 4294901760
    %v3880 = vsub.f32 %v159, %v3879
    %3881 = vmatpush1.msra.mxu0 %v3880
    %3882 = vmatprep.subr.mxu0 0.0
    %3883 = vmatpush1.msra.mxu0 0.0
    %3884 = vmatprep.subr.mxu0 0.0
    %3885 = vmatpush1.msra.mxu0 0.0
    %3886 = vmatprep.subr.mxu0 0.0
    %3887 = vmatpush1.msra.mxu0 0.0
    %3888 = vmatprep.subr.mxu0 0.0
    %3889 = vmatpush1.msra.mxu0 0.0
    %3890 = vmatprep.subr.mxu0 0.0
    %3891 = vmatpush1.msra.mxu0 0.0
    %3892 = vmatprep.subr.mxu0 0.0
    %3893 = vmatpush1.msra.mxu0 0.0
    %3894 = vmatprep.subr.mxu0 0.0
    %3895 = vmatpush1.msra.mxu0 0.0
    %3896 = vmatprep.subr.mxu0 0.0
    %3897 = vmatpush1.msra.mxu0 0.0
    %3898 = vmatprep.subr.mxu0 0.0
    %3899 = vmatpush1.msra.mxu0 0.0
    %3900 = vmatprep.subr.mxu0 0.0
    %3901 = vmatpush1.msra.mxu0 0.0
    %3902 = vmatprep.subr.mxu0 0.0
    %3903 = vmatpush1.msra.mxu0 0.0
    %3904 = vmatprep.subr.mxu0 0.0
    %3905 = vmatpush1.msra.mxu0 0.0
    %3906 = vmatprep.subr.mxu0 0.0
    %3907 = vmatpush1.msra.mxu0 0.0
    %3908 = vmatprep.subr.mxu0 0.0
    %3909 = vmatpush1.msra.mxu0 0.0
    %3910 = vmatprep.subr.mxu0 0.0
    %3911 = vmatpush1.msra.mxu0 0.0
    %3912 = vmatprep.subr.mxu0 0.0
    %3913 = vmatpush1.msra.mxu0 0.0
    %3914 = vmatprep.subr.mxu0 0.0
    %3915 = vmatpush1.msra.mxu0 0.0
    %3916 = vmatprep.subr.mxu0 0.0
    %3917 = vmatpush1.msra.mxu0 0.0
    %3918 = vmatprep.subr.mxu0 0.0
    %3919 = vmatpush1.msra.mxu0 0.0
    %3920 = vmatprep.subr.mxu0 0.0
    %3921 = vmatpush1.msra.mxu0 0.0
    %3922 = vmatprep.subr.mxu0 0.0
    %3923 = vmatpush1.msra.mxu0 0.0
    %3924 = vmatprep.subr.mxu0 0.0
    %3925 = vmatpush1.msra.mxu0 0.0
    %3926 = vmatprep.subr.mxu0 0.0
    %3927 = vmatpush1.msra.mxu0 0.0
    %3928 = vmatprep.subr.mxu0 0.0
    %3929 = vmatpush1.msra.mxu0 0.0
    %3930 = vmatprep.mubr.f32.mxu0 0.0
    %v3931 = vand.u32 %v3588, 4294901760
    %v3932 = vsub.f32 %v3588, %v3931
    %3933 = vmatmul.mubr.f32.gmra.mrb[0].mxu0 %v3932
    %v3934 = vpop.f32.mrb[0].mxu0
    %v3935 = vadd.f32 %v3830, %v3934
    %v3936 = vpop.f32.mrb[0].mxu0
    %v3937 = vadd.f32 %v3832, %v3936
    %3938 = vdwg.mxu0
    %v3939 = vand.u32 %v146, 4294901760
    %3940 = vmatprep.subr.mxu0 %v3939
    %v3941 = vand.u32 %v145, 4294901760
    %3942 = vmatpush1.msra.mxu0 %v3941
    %v3943 = vand.u32 %v148, 4294901760
    %3944 = vmatprep.subr.mxu0 %v3943
    %v3945 = vand.u32 %v147, 4294901760
    %3946 = vmatpush1.msra.mxu0 %v3945
    %v3947 = vand.u32 %v150, 4294901760
    %3948 = vmatprep.subr.mxu0 %v3947
    %v3949 = vand.u32 %v149, 4294901760
    %3950 = vmatpush1.msra.mxu0 %v3949
    %v3951 = vand.u32 %v152, 4294901760
    %3952 = vmatprep.subr.mxu0 %v3951
    %v3953 = vand.u32 %v151, 4294901760
    %3954 = vmatpush1.msra.mxu0 %v3953
    %v3955 = vand.u32 %v154, 4294901760
    %3956 = vmatprep.subr.mxu0 %v3955
    %v3957 = vand.u32 %v153, 4294901760
    %3958 = vmatpush1.msra.mxu0 %v3957
    %v3959 = vand.u32 %v156, 4294901760
    %3960 = vmatprep.subr.mxu0 %v3959
    %v3961 = vand.u32 %v155, 4294901760
    %3962 = vmatpush1.msra.mxu0 %v3961
    %v3963 = vand.u32 %v158, 4294901760
    %3964 = vmatprep.subr.mxu0 %v3963
    %v3965 = vand.u32 %v157, 4294901760
    %3966 = vmatpush1.msra.mxu0 %v3965
    %v3967 = vand.u32 %v160, 4294901760
    %3968 = vmatprep.subr.mxu0 %v3967
    %v3969 = vand.u32 %v159, 4294901760
    %3970 = vmatpush1.msra.mxu0 %v3969
    %3971 = vmatprep.subr.mxu0 0.0
    %3972 = vmatpush1.msra.mxu0 0.0
    %3973 = vmatprep.subr.mxu0 0.0
    %3974 = vmatpush1.msra.mxu0 0.0
    %3975 = vmatprep.subr.mxu0 0.0
    %3976 = vmatpush1.msra.mxu0 0.0
    %3977 = vmatprep.subr.mxu0 0.0
    %3978 = vmatpush1.msra.mxu0 0.0
    %3979 = vmatprep.subr.mxu0 0.0
    %3980 = vmatpush1.msra.mxu0 0.0
    %3981 = vmatprep.subr.mxu0 0.0
    %3982 = vmatpush1.msra.mxu0 0.0
    %3983 = vmatprep.subr.mxu0 0.0
    %3984 = vmatpush1.msra.mxu0 0.0
    %3985 = vmatprep.subr.mxu0 0.0
    %3986 = vmatpush1.msra.mxu0 0.0
    %3987 = vmatprep.subr.mxu0 0.0
    %3988 = vmatpush1.msra.mxu0 0.0
    %3989 = vmatprep.subr.mxu0 0.0
    %3990 = vmatpush1.msra.mxu0 0.0
    %3991 = vmatprep.subr.mxu0 0.0
    %3992 = vmatpush1.msra.mxu0 0.0
    %3993 = vmatprep.subr.mxu0 0.0
    %3994 = vmatpush1.msra.mxu0 0.0
    %3995 = vmatprep.subr.mxu0 0.0
    %3996 = vmatpush1.msra.mxu0 0.0
    %3997 = vmatprep.subr.mxu0 0.0
    %3998 = vmatpush1.msra.mxu0 0.0
    %3999 = vmatprep.subr.mxu0 0.0
    %4000 = vmatpush1.msra.mxu0 0.0
    %4001 = vmatprep.subr.mxu0 0.0
    %4002 = vmatpush1.msra.mxu0 0.0
    %4003 = vmatprep.subr.mxu0 0.0
    %4004 = vmatpush1.msra.mxu0 0.0
    %4005 = vmatprep.subr.mxu0 0.0
    %4006 = vmatpush1.msra.mxu0 0.0
    %4007 = vmatprep.subr.mxu0 0.0
    %4008 = vmatpush1.msra.mxu0 0.0
    %4009 = vmatprep.subr.mxu0 0.0
    %4010 = vmatpush1.msra.mxu0 0.0
    %4011 = vmatprep.subr.mxu0 0.0
    %4012 = vmatpush1.msra.mxu0 0.0
    %4013 = vmatprep.subr.mxu0 0.0
    %4014 = vmatpush1.msra.mxu0 0.0
    %4015 = vmatprep.subr.mxu0 0.0
    %4016 = vmatpush1.msra.mxu0 0.0
    %4017 = vmatprep.subr.mxu0 0.0
    %4018 = vmatpush1.msra.mxu0 0.0
    %4019 = vmatprep.mubr.f32.mxu0 0.0
    %v4020 = vand.u32 %v3588, 4294901760
    %v4021 = vsub.f32 %v3588, %v4020
    %v4022 = vand.u32 %v4021, 4294901760
    %4023 = vmatmul.mubr.f32.gmra.mrb[0].mxu0 %v4022
    %v4024 = vpop.f32.mrb[0].mxu0
    %v4025 = vadd.f32 %v3935, %v4024
    %v4026 = vpop.f32.mrb[0].mxu0
    %v4027 = vadd.f32 %v3937, %v4026
    %4028 = vdwg.mxu0
    %v4029 = vand.u32 %v146, 4294901760
    %v4030 = vsub.f32 %v146, %v4029
    %v4031 = vand.u32 %v4030, 4294901760
    %4032 = vmatprep.subr.mxu0 %v4031
    %v4033 = vand.u32 %v145, 4294901760
    %v4034 = vsub.f32 %v145, %v4033
    %v4035 = vand.u32 %v4034, 4294901760
    %4036 = vmatpush1.msra.mxu0 %v4035
    %v4037 = vand.u32 %v148, 4294901760
    %v4038 = vsub.f32 %v148, %v4037
    %v4039 = vand.u32 %v4038, 4294901760
    %4040 = vmatprep.subr.mxu0 %v4039
    %v4041 = vand.u32 %v147, 4294901760
    %v4042 = vsub.f32 %v147, %v4041
    %v4043 = vand.u32 %v4042, 4294901760
    %4044 = vmatpush1.msra.mxu0 %v4043
    %v4045 = vand.u32 %v150, 4294901760
    %v4046 = vsub.f32 %v150, %v4045
    %v4047 = vand.u32 %v4046, 4294901760
    %4048 = vmatprep.subr.mxu0 %v4047
    %v4049 = vand.u32 %v149, 4294901760
    %v4050 = vsub.f32 %v149, %v4049
    %v4051 = vand.u32 %v4050, 4294901760
    %4052 = vmatpush1.msra.mxu0 %v4051
    %v4053 = vand.u32 %v152, 4294901760
    %v4054 = vsub.f32 %v152, %v4053
    %v4055 = vand.u32 %v4054, 4294901760
    %4056 = vmatprep.subr.mxu0 %v4055
    %v4057 = vand.u32 %v151, 4294901760
    %v4058 = vsub.f32 %v151, %v4057
    %v4059 = vand.u32 %v4058, 4294901760
    %4060 = vmatpush1.msra.mxu0 %v4059
    %v4061 = vand.u32 %v154, 4294901760
    %v4062 = vsub.f32 %v154, %v4061
    %v4063 = vand.u32 %v4062, 4294901760
    %4064 = vmatprep.subr.mxu0 %v4063
    %v4065 = vand.u32 %v153, 4294901760
    %v4066 = vsub.f32 %v153, %v4065
    %v4067 = vand.u32 %v4066, 4294901760
    %4068 = vmatpush1.msra.mxu0 %v4067
    %v4069 = vand.u32 %v156, 4294901760
    %v4070 = vsub.f32 %v156, %v4069
    %v4071 = vand.u32 %v4070, 4294901760
    %4072 = vmatprep.subr.mxu0 %v4071
    %v4073 = vand.u32 %v155, 4294901760
    %v4074 = vsub.f32 %v155, %v4073
    %v4075 = vand.u32 %v4074, 4294901760
    %4076 = vmatpush1.msra.mxu0 %v4075
    %v4077 = vand.u32 %v158, 4294901760
    %v4078 = vsub.f32 %v158, %v4077
    %v4079 = vand.u32 %v4078, 4294901760
    %4080 = vmatprep.subr.mxu0 %v4079
    %v4081 = vand.u32 %v157, 4294901760
    %v4082 = vsub.f32 %v157, %v4081
    %v4083 = vand.u32 %v4082, 4294901760
    %4084 = vmatpush1.msra.mxu0 %v4083
    %v4085 = vand.u32 %v160, 4294901760
    %v4086 = vsub.f32 %v160, %v4085
    %v4087 = vand.u32 %v4086, 4294901760
    %4088 = vmatprep.subr.mxu0 %v4087
    %v4089 = vand.u32 %v159, 4294901760
    %v4090 = vsub.f32 %v159, %v4089
    %v4091 = vand.u32 %v4090, 4294901760
    %4092 = vmatpush1.msra.mxu0 %v4091
    %4093 = vmatprep.subr.mxu0 0.0
    %4094 = vmatpush1.msra.mxu0 0.0
    %4095 = vmatprep.subr.mxu0 0.0
    %4096 = vmatpush1.msra.mxu0 0.0
    %4097 = vmatprep.subr.mxu0 0.0
    %4098 = vmatpush1.msra.mxu0 0.0
    %4099 = vmatprep.subr.mxu0 0.0
    %4100 = vmatpush1.msra.mxu0 0.0
    %4101 = vmatprep.subr.mxu0 0.0
    %4102 = vmatpush1.msra.mxu0 0.0
    %4103 = vmatprep.subr.mxu0 0.0
    %4104 = vmatpush1.msra.mxu0 0.0
    %4105 = vmatprep.subr.mxu0 0.0
    %4106 = vmatpush1.msra.mxu0 0.0
    %4107 = vmatprep.subr.mxu0 0.0
    %4108 = vmatpush1.msra.mxu0 0.0
    %4109 = vmatprep.subr.mxu0 0.0
    %4110 = vmatpush1.msra.mxu0 0.0
    %4111 = vmatprep.subr.mxu0 0.0
    %4112 = vmatpush1.msra.mxu0 0.0
    %4113 = vmatprep.subr.mxu0 0.0
    %4114 = vmatpush1.msra.mxu0 0.0
    %4115 = vmatprep.subr.mxu0 0.0
    %4116 = vmatpush1.msra.mxu0 0.0
    %4117 = vmatprep.subr.mxu0 0.0
    %4118 = vmatpush1.msra.mxu0 0.0
    %4119 = vmatprep.subr.mxu0 0.0
    %4120 = vmatpush1.msra.mxu0 0.0
    %4121 = vmatprep.subr.mxu0 0.0
    %4122 = vmatpush1.msra.mxu0 0.0
    %4123 = vmatprep.subr.mxu0 0.0
    %4124 = vmatpush1.msra.mxu0 0.0
    %4125 = vmatprep.subr.mxu0 0.0
    %4126 = vmatpush1.msra.mxu0 0.0
    %4127 = vmatprep.subr.mxu0 0.0
    %4128 = vmatpush1.msra.mxu0 0.0
    %4129 = vmatprep.subr.mxu0 0.0
    %4130 = vmatpush1.msra.mxu0 0.0
    %4131 = vmatprep.subr.mxu0 0.0
    %4132 = vmatpush1.msra.mxu0 0.0
    %4133 = vmatprep.subr.mxu0 0.0
    %4134 = vmatpush1.msra.mxu0 0.0
    %4135 = vmatprep.subr.mxu0 0.0
    %4136 = vmatpush1.msra.mxu0 0.0
    %4137 = vmatprep.subr.mxu0 0.0
    %4138 = vmatpush1.msra.mxu0 0.0
    %4139 = vmatprep.subr.mxu0 0.0
    %4140 = vmatpush1.msra.mxu0 0.0
    %4141 = vmatprep.mubr.f32.mxu0 0.0
    %v4142 = vand.u32 %v3588, 4294901760
    %4143 = vmatmul.mubr.f32.gmra.mrb[0].mxu0 %v4142
    %v4144 = vpop.f32.mrb[0].mxu0
    %v4145 = vadd.f32 %v4025, %v4144
    %v4146 = vpop.f32.mrb[0].mxu0
    %v4147 = vadd.f32 %v4027, %v4146
    %4148 = vdwg.mxu0
    %v4149 = vand.u32 %v146, 4294901760
    %4150 = vmatprep.subr.mxu0 %v4149
    %v4151 = vand.u32 %v145, 4294901760
    %4152 = vmatpush1.msra.mxu0 %v4151
    %v4153 = vand.u32 %v148, 4294901760
    %4154 = vmatprep.subr.mxu0 %v4153
    %v4155 = vand.u32 %v147, 4294901760
    %4156 = vmatpush1.msra.mxu0 %v4155
    %v4157 = vand.u32 %v150, 4294901760
    %4158 = vmatprep.subr.mxu0 %v4157
    %v4159 = vand.u32 %v149, 4294901760
    %4160 = vmatpush1.msra.mxu0 %v4159
    %v4161 = vand.u32 %v152, 4294901760
    %4162 = vmatprep.subr.mxu0 %v4161
    %v4163 = vand.u32 %v151, 4294901760
    %4164 = vmatpush1.msra.mxu0 %v4163
    %v4165 = vand.u32 %v154, 4294901760
    %4166 = vmatprep.subr.mxu0 %v4165
    %v4167 = vand.u32 %v153, 4294901760
    %4168 = vmatpush1.msra.mxu0 %v4167
    %v4169 = vand.u32 %v156, 4294901760
    %4170 = vmatprep.subr.mxu0 %v4169
    %v4171 = vand.u32 %v155, 4294901760
    %4172 = vmatpush1.msra.mxu0 %v4171
    %v4173 = vand.u32 %v158, 4294901760
    %4174 = vmatprep.subr.mxu0 %v4173
    %v4175 = vand.u32 %v157, 4294901760
    %4176 = vmatpush1.msra.mxu0 %v4175
    %v4177 = vand.u32 %v160, 4294901760
    %4178 = vmatprep.subr.mxu0 %v4177
    %v4179 = vand.u32 %v159, 4294901760
    %4180 = vmatpush1.msra.mxu0 %v4179
    %4181 = vmatprep.subr.mxu0 0.0
    %4182 = vmatpush1.msra.mxu0 0.0
    %4183 = vmatprep.subr.mxu0 0.0
    %4184 = vmatpush1.msra.mxu0 0.0
    %4185 = vmatprep.subr.mxu0 0.0
    %4186 = vmatpush1.msra.mxu0 0.0
    %4187 = vmatprep.subr.mxu0 0.0
    %4188 = vmatpush1.msra.mxu0 0.0
    %4189 = vmatprep.subr.mxu0 0.0
    %4190 = vmatpush1.msra.mxu0 0.0
    %4191 = vmatprep.subr.mxu0 0.0
    %4192 = vmatpush1.msra.mxu0 0.0
    %4193 = vmatprep.subr.mxu0 0.0
    %4194 = vmatpush1.msra.mxu0 0.0
    %4195 = vmatprep.subr.mxu0 0.0
    %4196 = vmatpush1.msra.mxu0 0.0
    %4197 = vmatprep.subr.mxu0 0.0
    %4198 = vmatpush1.msra.mxu0 0.0
    %4199 = vmatprep.subr.mxu0 0.0
    %4200 = vmatpush1.msra.mxu0 0.0
    %4201 = vmatprep.subr.mxu0 0.0
    %4202 = vmatpush1.msra.mxu0 0.0
    %4203 = vmatprep.subr.mxu0 0.0
    %4204 = vmatpush1.msra.mxu0 0.0
    %4205 = vmatprep.subr.mxu0 0.0
    %4206 = vmatpush1.msra.mxu0 0.0
    %4207 = vmatprep.subr.mxu0 0.0
    %4208 = vmatpush1.msra.mxu0 0.0
    %4209 = vmatprep.subr.mxu0 0.0
    %4210 = vmatpush1.msra.mxu0 0.0
    %4211 = vmatprep.subr.mxu0 0.0
    %4212 = vmatpush1.msra.mxu0 0.0
    %4213 = vmatprep.subr.mxu0 0.0
    %4214 = vmatpush1.msra.mxu0 0.0
    %4215 = vmatprep.subr.mxu0 0.0
    %4216 = vmatpush1.msra.mxu0 0.0
    %4217 = vmatprep.subr.mxu0 0.0
    %4218 = vmatpush1.msra.mxu0 0.0
    %4219 = vmatprep.subr.mxu0 0.0
    %4220 = vmatpush1.msra.mxu0 0.0
    %4221 = vmatprep.subr.mxu0 0.0
    %4222 = vmatpush1.msra.mxu0 0.0
    %4223 = vmatprep.subr.mxu0 0.0
    %4224 = vmatpush1.msra.mxu0 0.0
    %4225 = vmatprep.subr.mxu0 0.0
    %4226 = vmatpush1.msra.mxu0 0.0
    %4227 = vmatprep.subr.mxu0 0.0
    %4228 = vmatpush1.msra.mxu0 0.0
    %4229 = vmatprep.mubr.f32.mxu0 0.0
    %v4230 = vand.u32 %v3588, 4294901760
    %4231 = vmatmul.mubr.f32.gmra.mrb[0].mxu0 %v4230
    %v4232 = vpop.f32.mrb[0].mxu0
    %v4233 = vadd.f32 %v4145, %v4232
    %v4234 = vpop.f32.mrb[0].mxu0
    %v4235 = vadd.f32 %v4147, %v4234
    %4236 = vdwg.mxu0
    %v4237 = vadd.f32 %v3587, %v4233
    %v4238 = vxor.u32 %v4237, 2147483648
    %v4239 = vmul.f32 %v4238, 1.442695
    %v4240 = vpow.pop %v4239
    %v4241 = vadd.f32 %v4240, 1.0
    %v4242 = vrcp.pop %v4241
    %v4243 = vmul.f32 1.0, %v4242
    %v4244 = vadd.f32 %v4235, %v825
    %v4245 = vmul.f32 %v4243, %v4244
    %v4247 = vrot.slane %v3587, 1
    %v4249 = vadd.f32 %v4247, %v4245
    %v4250 = vtanh.pop %v4249
    %v4251 = vsub.f32 1.0, %v4243
    %4253 = vrot.lane.b32.xlu0 %v4250, 64
    %v4254 = vpop.permute.xlu0 %4253
    %v4256 = vmul.f32 %v4251, %v4254
    %v4257 = vmul.f32 %v4243, %v3575
    %v4258 = vadd.f32 %v4256, %v4257
    %v4260 = vlaneseq
    %v4261 = vshrl.u32 %v4260, 7
    %v4262 = vsub.s32 0, %v4261
    %v4263 = vrot.slane %v4258, %v4262
    %4264 = vrot.lane.b32.xlu0 %v4263, 64
    %v4265 = vpop.permute.xlu0 %4264
    %4267 = vst.msk [vmem:[#allocation3 + $0x5] sm:$0x1] %vm850, %v4265
    %4268 = vst.msk [vmem:[#allocation3 + $0x2] sm:$0x1] %vm852, %v4265
    %s4269 = scalar_lea.vmem [#allocation2], 6
    %v4270 = vld [vmem:[%s4269] ss:$8 sm:$0x3]
    %v4271 = vsel %vm143, %v4265, 0
    %v4273 = vand.u32 %v146, 4294901760
    %4274 = vmatprep.subr.mxu0 %v4273
    %v4275 = vand.u32 %v145, 4294901760
    %4276 = vmatpush1.msra.mxu0 %v4275
    %v4277 = vand.u32 %v148, 4294901760
    %4278 = vmatprep.subr.mxu0 %v4277
    %v4279 = vand.u32 %v147, 4294901760
    %4280 = vmatpush1.msra.mxu0 %v4279
    %v4281 = vand.u32 %v150, 4294901760
    %4282 = vmatprep.subr.mxu0 %v4281
    %v4283 = vand.u32 %v149, 4294901760
    %4284 = vmatpush1.msra.mxu0 %v4283
    %v4285 = vand.u32 %v152, 4294901760
    %4286 = vmatprep.subr.mxu0 %v4285
    %v4287 = vand.u32 %v151, 4294901760
    %4288 = vmatpush1.msra.mxu0 %v4287
    %v4289 = vand.u32 %v154, 4294901760
    %4290 = vmatprep.subr.mxu0 %v4289
    %v4291 = vand.u32 %v153, 4294901760
    %4292 = vmatpush1.msra.mxu0 %v4291
    %v4293 = vand.u32 %v156, 4294901760
    %4294 = vmatprep.subr.mxu0 %v4293
    %v4295 = vand.u32 %v155, 4294901760
    %4296 = vmatpush1.msra.mxu0 %v4295
    %v4297 = vand.u32 %v158, 4294901760
    %4298 = vmatprep.subr.mxu0 %v4297
    %v4299 = vand.u32 %v157, 4294901760
    %4300 = vmatpush1.msra.mxu0 %v4299
    %v4301 = vand.u32 %v160, 4294901760
    %4302 = vmatprep.subr.mxu0 %v4301
    %v4303 = vand.u32 %v159, 4294901760
    %4304 = vmatpush1.msra.mxu0 %v4303
    %4305 = vmatprep.subr.mxu0 0.0
    %4306 = vmatpush1.msra.mxu0 0.0
    %4307 = vmatprep.subr.mxu0 0.0
    %4308 = vmatpush1.msra.mxu0 0.0
    %4309 = vmatprep.subr.mxu0 0.0
    %4310 = vmatpush1.msra.mxu0 0.0
    %4311 = vmatprep.subr.mxu0 0.0
    %4312 = vmatpush1.msra.mxu0 0.0
    %4313 = vmatprep.subr.mxu0 0.0
    %4314 = vmatpush1.msra.mxu0 0.0
    %4315 = vmatprep.subr.mxu0 0.0
    %4316 = vmatpush1.msra.mxu0 0.0
    %4317 = vmatprep.subr.mxu0 0.0
    %4318 = vmatpush1.msra.mxu0 0.0
    %4319 = vmatprep.subr.mxu0 0.0
    %4320 = vmatpush1.msra.mxu0 0.0
    %4321 = vmatprep.subr.mxu0 0.0
    %4322 = vmatpush1.msra.mxu0 0.0
    %4323 = vmatprep.subr.mxu0 0.0
    %4324 = vmatpush1.msra.mxu0 0.0
    %4325 = vmatprep.subr.mxu0 0.0
    %4326 = vmatpush1.msra.mxu0 0.0
    %4327 = vmatprep.subr.mxu0 0.0
    %4328 = vmatpush1.msra.mxu0 0.0
    %4329 = vmatprep.subr.mxu0 0.0
    %4330 = vmatpush1.msra.mxu0 0.0
    %4331 = vmatprep.subr.mxu0 0.0
    %4332 = vmatpush1.msra.mxu0 0.0
    %4333 = vmatprep.subr.mxu0 0.0
    %4334 = vmatpush1.msra.mxu0 0.0
    %4335 = vmatprep.subr.mxu0 0.0
    %4336 = vmatpush1.msra.mxu0 0.0
    %4337 = vmatprep.subr.mxu0 0.0
    %4338 = vmatpush1.msra.mxu0 0.0
    %4339 = vmatprep.subr.mxu0 0.0
    %4340 = vmatpush1.msra.mxu0 0.0
    %4341 = vmatprep.subr.mxu0 0.0
    %4342 = vmatpush1.msra.mxu0 0.0
    %4343 = vmatprep.subr.mxu0 0.0
    %4344 = vmatpush1.msra.mxu0 0.0
    %4345 = vmatprep.subr.mxu0 0.0
    %4346 = vmatpush1.msra.mxu0 0.0
    %4347 = vmatprep.subr.mxu0 0.0
    %4348 = vmatpush1.msra.mxu0 0.0
    %4349 = vmatprep.subr.mxu0 0.0
    %4350 = vmatpush1.msra.mxu0 0.0
    %4351 = vmatprep.subr.mxu0 0.0
    %4352 = vmatpush1.msra.mxu0 0.0
    %4353 = vmatprep.mubr.f32.mxu0 0.0
    %v4354 = vand.u32 %v4271, 4294901760
    %v4355 = vsub.f32 %v4271, %v4354
    %v4356 = vand.u32 %v4355, 4294901760
    %v4357 = vsub.f32 %v4355, %v4356
    %v4358 = vand.u32 %v4357, 4294901760
    %4359 = vmatmul.mubr.f32.gmra.mrb[0].mxu0 %v4358
    %v4360 = vpop.f32.mrb[0].mxu0
    %v4361 = vadd.f32 0.0, %v4360
    %v4362 = vpop.f32.mrb[0].mxu0
    %v4363 = vadd.f32 0.0, %v4362
    %4364 = vdwg.mxu0
    %v4365 = vand.u32 %v146, 4294901760
    %v4366 = vsub.f32 %v146, %v4365
    %v4367 = vand.u32 %v4366, 4294901760
    %v4368 = vsub.f32 %v4366, %v4367
    %v4369 = vand.u32 %v4368, 4294901760
    %4370 = vmatprep.subr.mxu0 %v4369
    %v4371 = vand.u32 %v145, 4294901760
    %v4372 = vsub.f32 %v145, %v4371
    %v4373 = vand.u32 %v4372, 4294901760
    %v4374 = vsub.f32 %v4372, %v4373
    %v4375 = vand.u32 %v4374, 4294901760
    %4376 = vmatpush1.msra.mxu0 %v4375
    %v4377 = vand.u32 %v148, 4294901760
    %v4378 = vsub.f32 %v148, %v4377
    %v4379 = vand.u32 %v4378, 4294901760
    %v4380 = vsub.f32 %v4378, %v4379
    %v4381 = vand.u32 %v4380, 4294901760
    %4382 = vmatprep.subr.mxu0 %v4381
    %v4383 = vand.u32 %v147, 4294901760
    %v4384 = vsub.f32 %v147, %v4383
    %v4385 = vand.u32 %v4384, 4294901760
    %v4386 = vsub.f32 %v4384, %v4385
    %v4387 = vand.u32 %v4386, 4294901760
    %4388 = vmatpush1.msra.mxu0 %v4387
    %v4389 = vand.u32 %v150, 4294901760
    %v4390 = vsub.f32 %v150, %v4389
    %v4391 = vand.u32 %v4390, 4294901760
    %v4392 = vsub.f32 %v4390, %v4391
    %v4393 = vand.u32 %v4392, 4294901760
    %4394 = vmatprep.subr.mxu0 %v4393
    %v4395 = vand.u32 %v149, 4294901760
    %v4396 = vsub.f32 %v149, %v4395
    %v4397 = vand.u32 %v4396, 4294901760
    %v4398 = vsub.f32 %v4396, %v4397
    %v4399 = vand.u32 %v4398, 4294901760
    %4400 = vmatpush1.msra.mxu0 %v4399
    %v4401 = vand.u32 %v152, 4294901760
    %v4402 = vsub.f32 %v152, %v4401
    %v4403 = vand.u32 %v4402, 4294901760
    %v4404 = vsub.f32 %v4402, %v4403
    %v4405 = vand.u32 %v4404, 4294901760
    %4406 = vmatprep.subr.mxu0 %v4405
    %v4407 = vand.u32 %v151, 4294901760
    %v4408 = vsub.f32 %v151, %v4407
    %v4409 = vand.u32 %v4408, 4294901760
    %v4410 = vsub.f32 %v4408, %v4409
    %v4411 = vand.u32 %v4410, 4294901760
    %4412 = vmatpush1.msra.mxu0 %v4411
    %v4413 = vand.u32 %v154, 4294901760
    %v4414 = vsub.f32 %v154, %v4413
    %v4415 = vand.u32 %v4414, 4294901760
    %v4416 = vsub.f32 %v4414, %v4415
    %v4417 = vand.u32 %v4416, 4294901760
    %4418 = vmatprep.subr.mxu0 %v4417
    %v4419 = vand.u32 %v153, 4294901760
    %v4420 = vsub.f32 %v153, %v4419
    %v4421 = vand.u32 %v4420, 4294901760
    %v4422 = vsub.f32 %v4420, %v4421
    %v4423 = vand.u32 %v4422, 4294901760
    %4424 = vmatpush1.msra.mxu0 %v4423
    %v4425 = vand.u32 %v156, 4294901760
    %v4426 = vsub.f32 %v156, %v4425
    %v4427 = vand.u32 %v4426, 4294901760
    %v4428 = vsub.f32 %v4426, %v4427
    %v4429 = vand.u32 %v4428, 4294901760
    %4430 = vmatprep.subr.mxu0 %v4429
    %v4431 = vand.u32 %v155, 4294901760
    %v4432 = vsub.f32 %v155, %v4431
    %v4433 = vand.u32 %v4432, 4294901760
    %v4434 = vsub.f32 %v4432, %v4433
    %v4435 = vand.u32 %v4434, 4294901760
    %4436 = vmatpush1.msra.mxu0 %v4435
    %v4437 = vand.u32 %v158, 4294901760
    %v4438 = vsub.f32 %v158, %v4437
    %v4439 = vand.u32 %v4438, 4294901760
    %v4440 = vsub.f32 %v4438, %v4439
    %v4441 = vand.u32 %v4440, 4294901760
    %4442 = vmatprep.subr.mxu0 %v4441
    %v4443 = vand.u32 %v157, 4294901760
    %v4444 = vsub.f32 %v157, %v4443
    %v4445 = vand.u32 %v4444, 4294901760
    %v4446 = vsub.f32 %v4444, %v4445
    %v4447 = vand.u32 %v4446, 4294901760
    %4448 = vmatpush1.msra.mxu0 %v4447
    %v4449 = vand.u32 %v160, 4294901760
    %v4450 = vsub.f32 %v160, %v4449
    %v4451 = vand.u32 %v4450, 4294901760
    %v4452 = vsub.f32 %v4450, %v4451
    %v4453 = vand.u32 %v4452, 4294901760
    %4454 = vmatprep.subr.mxu0 %v4453
    %v4455 = vand.u32 %v159, 4294901760
    %v4456 = vsub.f32 %v159, %v4455
    %v4457 = vand.u32 %v4456, 4294901760
    %v4458 = vsub.f32 %v4456, %v4457
    %v4459 = vand.u32 %v4458, 4294901760
    %4460 = vmatpush1.msra.mxu0 %v4459
    %4461 = vmatprep.subr.mxu0 0.0
    %4462 = vmatpush1.msra.mxu0 0.0
    %4463 = vmatprep.subr.mxu0 0.0
    %4464 = vmatpush1.msra.mxu0 0.0
    %4465 = vmatprep.subr.mxu0 0.0
    %4466 = vmatpush1.msra.mxu0 0.0
    %4467 = vmatprep.subr.mxu0 0.0
    %4468 = vmatpush1.msra.mxu0 0.0
    %4469 = vmatprep.subr.mxu0 0.0
    %4470 = vmatpush1.msra.mxu0 0.0
    %4471 = vmatprep.subr.mxu0 0.0
    %4472 = vmatpush1.msra.mxu0 0.0
    %4473 = vmatprep.subr.mxu0 0.0
    %4474 = vmatpush1.msra.mxu0 0.0
    %4475 = vmatprep.subr.mxu0 0.0
    %4476 = vmatpush1.msra.mxu0 0.0
    %4477 = vmatprep.subr.mxu0 0.0
    %4478 = vmatpush1.msra.mxu0 0.0
    %4479 = vmatprep.subr.mxu0 0.0
    %4480 = vmatpush1.msra.mxu0 0.0
    %4481 = vmatprep.subr.mxu0 0.0
    %4482 = vmatpush1.msra.mxu0 0.0
    %4483 = vmatprep.subr.mxu0 0.0
    %4484 = vmatpush1.msra.mxu0 0.0
    %4485 = vmatprep.subr.mxu0 0.0
    %4486 = vmatpush1.msra.mxu0 0.0
    %4487 = vmatprep.subr.mxu0 0.0
    %4488 = vmatpush1.msra.mxu0 0.0
    %4489 = vmatprep.subr.mxu0 0.0
    %4490 = vmatpush1.msra.mxu0 0.0
    %4491 = vmatprep.subr.mxu0 0.0
    %4492 = vmatpush1.msra.mxu0 0.0
    %4493 = vmatprep.subr.mxu0 0.0
    %4494 = vmatpush1.msra.mxu0 0.0
    %4495 = vmatprep.subr.mxu0 0.0
    %4496 = vmatpush1.msra.mxu0 0.0
    %4497 = vmatprep.subr.mxu0 0.0
    %4498 = vmatpush1.msra.mxu0 0.0
    %4499 = vmatprep.subr.mxu0 0.0
    %4500 = vmatpush1.msra.mxu0 0.0
    %4501 = vmatprep.subr.mxu0 0.0
    %4502 = vmatpush1.msra.mxu0 0.0
    %4503 = vmatprep.subr.mxu0 0.0
    %4504 = vmatpush1.msra.mxu0 0.0
    %4505 = vmatprep.subr.mxu0 0.0
    %4506 = vmatpush1.msra.mxu0 0.0
    %4507 = vmatprep.subr.mxu0 0.0
    %4508 = vmatpush1.msra.mxu0 0.0
    %4509 = vmatprep.mubr.f32.mxu0 0.0
    %v4510 = vand.u32 %v4271, 4294901760
    %4511 = vmatmul.mubr.f32.gmra.mrb[0].mxu0 %v4510
    %v4512 = vpop.f32.mrb[0].mxu0
    %v4513 = vadd.f32 %v4361, %v4512
    %v4514 = vpop.f32.mrb[0].mxu0
    %v4515 = vadd.f32 %v4363, %v4514
    %4516 = vdwg.mxu0
    %v4517 = vand.u32 %v146, 4294901760
    %v4518 = vsub.f32 %v146, %v4517
    %4519 = vmatprep.subr.mxu0 %v4518
    %v4520 = vand.u32 %v145, 4294901760
    %v4521 = vsub.f32 %v145, %v4520
    %4522 = vmatpush1.msra.mxu0 %v4521
    %v4523 = vand.u32 %v148, 4294901760
    %v4524 = vsub.f32 %v148, %v4523
    %4525 = vmatprep.subr.mxu0 %v4524
    %v4526 = vand.u32 %v147, 4294901760
    %v4527 = vsub.f32 %v147, %v4526
    %4528 = vmatpush1.msra.mxu0 %v4527
    %v4529 = vand.u32 %v150, 4294901760
    %v4530 = vsub.f32 %v150, %v4529
    %4531 = vmatprep.subr.mxu0 %v4530
    %v4532 = vand.u32 %v149, 4294901760
    %v4533 = vsub.f32 %v149, %v4532
    %4534 = vmatpush1.msra.mxu0 %v4533
    %v4535 = vand.u32 %v152, 4294901760
    %v4536 = vsub.f32 %v152, %v4535
    %4537 = vmatprep.subr.mxu0 %v4536
    %v4538 = vand.u32 %v151, 4294901760
    %v4539 = vsub.f32 %v151, %v4538
    %4540 = vmatpush1.msra.mxu0 %v4539
    %v4541 = vand.u32 %v154, 4294901760
    %v4542 = vsub.f32 %v154, %v4541
    %4543 = vmatprep.subr.mxu0 %v4542
    %v4544 = vand.u32 %v153, 4294901760
    %v4545 = vsub.f32 %v153, %v4544
    %4546 = vmatpush1.msra.mxu0 %v4545
    %v4547 = vand.u32 %v156, 4294901760
    %v4548 = vsub.f32 %v156, %v4547
    %4549 = vmatprep.subr.mxu0 %v4548
    %v4550 = vand.u32 %v155, 4294901760
    %v4551 = vsub.f32 %v155, %v4550
    %4552 = vmatpush1.msra.mxu0 %v4551
    %v4553 = vand.u32 %v158, 4294901760
    %v4554 = vsub.f32 %v158, %v4553
    %4555 = vmatprep.subr.mxu0 %v4554
    %v4556 = vand.u32 %v157, 4294901760
    %v4557 = vsub.f32 %v157, %v4556
    %4558 = vmatpush1.msra.mxu0 %v4557
    %v4559 = vand.u32 %v160, 4294901760
    %v4560 = vsub.f32 %v160, %v4559
    %4561 = vmatprep.subr.mxu0 %v4560
    %v4562 = vand.u32 %v159, 4294901760
    %v4563 = vsub.f32 %v159, %v4562
    %4564 = vmatpush1.msra.mxu0 %v4563
    %4565 = vmatprep.subr.mxu0 0.0
    %4566 = vmatpush1.msra.mxu0 0.0
    %4567 = vmatprep.subr.mxu0 0.0
    %4568 = vmatpush1.msra.mxu0 0.0
    %4569 = vmatprep.subr.mxu0 0.0
    %4570 = vmatpush1.msra.mxu0 0.0
    %4571 = vmatprep.subr.mxu0 0.0
    %4572 = vmatpush1.msra.mxu0 0.0
    %4573 = vmatprep.subr.mxu0 0.0
    %4574 = vmatpush1.msra.mxu0 0.0
    %4575 = vmatprep.subr.mxu0 0.0
    %4576 = vmatpush1.msra.mxu0 0.0
    %4577 = vmatprep.subr.mxu0 0.0
    %4578 = vmatpush1.msra.mxu0 0.0
    %4579 = vmatprep.subr.mxu0 0.0
    %4580 = vmatpush1.msra.mxu0 0.0
    %4581 = vmatprep.subr.mxu0 0.0
    %4582 = vmatpush1.msra.mxu0 0.0
    %4583 = vmatprep.subr.mxu0 0.0
    %4584 = vmatpush1.msra.mxu0 0.0
    %4585 = vmatprep.subr.mxu0 0.0
    %4586 = vmatpush1.msra.mxu0 0.0
    %4587 = vmatprep.subr.mxu0 0.0
    %4588 = vmatpush1.msra.mxu0 0.0
    %4589 = vmatprep.subr.mxu0 0.0
    %4590 = vmatpush1.msra.mxu0 0.0
    %4591 = vmatprep.subr.mxu0 0.0
    %4592 = vmatpush1.msra.mxu0 0.0
    %4593 = vmatprep.subr.mxu0 0.0
    %4594 = vmatpush1.msra.mxu0 0.0
    %4595 = vmatprep.subr.mxu0 0.0
    %4596 = vmatpush1.msra.mxu0 0.0
    %4597 = vmatprep.subr.mxu0 0.0
    %4598 = vmatpush1.msra.mxu0 0.0
    %4599 = vmatprep.subr.mxu0 0.0
    %4600 = vmatpush1.msra.mxu0 0.0
    %4601 = vmatprep.subr.mxu0 0.0
    %4602 = vmatpush1.msra.mxu0 0.0
    %4603 = vmatprep.subr.mxu0 0.0
    %4604 = vmatpush1.msra.mxu0 0.0
    %4605 = vmatprep.subr.mxu0 0.0
    %4606 = vmatpush1.msra.mxu0 0.0
    %4607 = vmatprep.subr.mxu0 0.0
    %4608 = vmatpush1.msra.mxu0 0.0
    %4609 = vmatprep.subr.mxu0 0.0
    %4610 = vmatpush1.msra.mxu0 0.0
    %4611 = vmatprep.subr.mxu0 0.0
    %4612 = vmatpush1.msra.mxu0 0.0
    %4613 = vmatprep.mubr.f32.mxu0 0.0
    %v4614 = vand.u32 %v4271, 4294901760
    %v4615 = vsub.f32 %v4271, %v4614
    %4616 = vmatmul.mubr.f32.gmra.mrb[0].mxu0 %v4615
    %v4617 = vpop.f32.mrb[0].mxu0
    %v4618 = vadd.f32 %v4513, %v4617
    %v4619 = vpop.f32.mrb[0].mxu0
    %v4620 = vadd.f32 %v4515, %v4619
    %4621 = vdwg.mxu0
    %v4622 = vand.u32 %v146, 4294901760
    %4623 = vmatprep.subr.mxu0 %v4622
    %v4624 = vand.u32 %v145, 4294901760
    %4625 = vmatpush1.msra.mxu0 %v4624
    %v4626 = vand.u32 %v148, 4294901760
    %4627 = vmatprep.subr.mxu0 %v4626
    %v4628 = vand.u32 %v147, 4294901760
    %4629 = vmatpush1.msra.mxu0 %v4628
    %v4630 = vand.u32 %v150, 4294901760
    %4631 = vmatprep.subr.mxu0 %v4630
    %v4632 = vand.u32 %v149, 4294901760
    %4633 = vmatpush1.msra.mxu0 %v4632
    %v4634 = vand.u32 %v152, 4294901760
    %4635 = vmatprep.subr.mxu0 %v4634
    %v4636 = vand.u32 %v151, 4294901760
    %4637 = vmatpush1.msra.mxu0 %v4636
    %v4638 = vand.u32 %v154, 4294901760
    %4639 = vmatprep.subr.mxu0 %v4638
    %v4640 = vand.u32 %v153, 4294901760
    %4641 = vmatpush1.msra.mxu0 %v4640
    %v4642 = vand.u32 %v156, 4294901760
    %4643 = vmatprep.subr.mxu0 %v4642
    %v4644 = vand.u32 %v155, 4294901760
    %4645 = vmatpush1.msra.mxu0 %v4644
    %v4646 = vand.u32 %v158, 4294901760
    %4647 = vmatprep.subr.mxu0 %v4646
    %v4648 = vand.u32 %v157, 4294901760
    %4649 = vmatpush1.msra.mxu0 %v4648
    %v4650 = vand.u32 %v160, 4294901760
    %4651 = vmatprep.subr.mxu0 %v4650
    %v4652 = vand.u32 %v159, 4294901760
    %4653 = vmatpush1.msra.mxu0 %v4652
    %4654 = vmatprep.subr.mxu0 0.0
    %4655 = vmatpush1.msra.mxu0 0.0
    %4656 = vmatprep.subr.mxu0 0.0
    %4657 = vmatpush1.msra.mxu0 0.0
    %4658 = vmatprep.subr.mxu0 0.0
    %4659 = vmatpush1.msra.mxu0 0.0
    %4660 = vmatprep.subr.mxu0 0.0
    %4661 = vmatpush1.msra.mxu0 0.0
    %4662 = vmatprep.subr.mxu0 0.0
    %4663 = vmatpush1.msra.mxu0 0.0
    %4664 = vmatprep.subr.mxu0 0.0
    %4665 = vmatpush1.msra.mxu0 0.0
    %4666 = vmatprep.subr.mxu0 0.0
    %4667 = vmatpush1.msra.mxu0 0.0
    %4668 = vmatprep.subr.mxu0 0.0
    %4669 = vmatpush1.msra.mxu0 0.0
    %4670 = vmatprep.subr.mxu0 0.0
    %4671 = vmatpush1.msra.mxu0 0.0
    %4672 = vmatprep.subr.mxu0 0.0
    %4673 = vmatpush1.msra.mxu0 0.0
    %4674 = vmatprep.subr.mxu0 0.0
    %4675 = vmatpush1.msra.mxu0 0.0
    %4676 = vmatprep.subr.mxu0 0.0
    %4677 = vmatpush1.msra.mxu0 0.0
    %4678 = vmatprep.subr.mxu0 0.0
    %4679 = vmatpush1.msra.mxu0 0.0
    %4680 = vmatprep.subr.mxu0 0.0
    %4681 = vmatpush1.msra.mxu0 0.0
    %4682 = vmatprep.subr.mxu0 0.0
    %4683 = vmatpush1.msra.mxu0 0.0
    %4684 = vmatprep.subr.mxu0 0.0
    %4685 = vmatpush1.msra.mxu0 0.0
    %4686 = vmatprep.subr.mxu0 0.0
    %4687 = vmatpush1.msra.mxu0 0.0
    %4688 = vmatprep.subr.mxu0 0.0
    %4689 = vmatpush1.msra.mxu0 0.0
    %4690 = vmatprep.subr.mxu0 0.0
    %4691 = vmatpush1.msra.mxu0 0.0
    %4692 = vmatprep.subr.mxu0 0.0
    %4693 = vmatpush1.msra.mxu0 0.0
    %4694 = vmatprep.subr.mxu0 0.0
    %4695 = vmatpush1.msra.mxu0 0.0
    %4696 = vmatprep.subr.mxu0 0.0
    %4697 = vmatpush1.msra.mxu0 0.0
    %4698 = vmatprep.subr.mxu0 0.0
    %4699 = vmatpush1.msra.mxu0 0.0
    %4700 = vmatprep.subr.mxu0 0.0
    %4701 = vmatpush1.msra.mxu0 0.0
    %4702 = vmatprep.mubr.f32.mxu0 0.0
    %v4703 = vand.u32 %v4271, 4294901760
    %v4704 = vsub.f32 %v4271, %v4703
    %v4705 = vand.u32 %v4704, 4294901760
    %4706 = vmatmul.mubr.f32.gmra.mrb[0].mxu0 %v4705
    %v4707 = vpop.f32.mrb[0].mxu0
    %v4708 = vadd.f32 %v4618, %v4707
    %v4709 = vpop.f32.mrb[0].mxu0
    %v4710 = vadd.f32 %v4620, %v4709
    %4711 = vdwg.mxu0
    %v4712 = vand.u32 %v146, 4294901760
    %v4713 = vsub.f32 %v146, %v4712
    %v4714 = vand.u32 %v4713, 4294901760
    %4715 = vmatprep.subr.mxu0 %v4714
    %v4716 = vand.u32 %v145, 4294901760
    %v4717 = vsub.f32 %v145, %v4716
    %v4718 = vand.u32 %v4717, 4294901760
    %4719 = vmatpush1.msra.mxu0 %v4718
    %v4720 = vand.u32 %v148, 4294901760
    %v4721 = vsub.f32 %v148, %v4720
    %v4722 = vand.u32 %v4721, 4294901760
    %4723 = vmatprep.subr.mxu0 %v4722
    %v4724 = vand.u32 %v147, 4294901760
    %v4725 = vsub.f32 %v147, %v4724
    %v4726 = vand.u32 %v4725, 4294901760
    %4727 = vmatpush1.msra.mxu0 %v4726
    %v4728 = vand.u32 %v150, 4294901760
    %v4729 = vsub.f32 %v150, %v4728
    %v4730 = vand.u32 %v4729, 4294901760
    %4731 = vmatprep.subr.mxu0 %v4730
    %v4732 = vand.u32 %v149, 4294901760
    %v4733 = vsub.f32 %v149, %v4732
    %v4734 = vand.u32 %v4733, 4294901760
    %4735 = vmatpush1.msra.mxu0 %v4734
    %v4736 = vand.u32 %v152, 4294901760
    %v4737 = vsub.f32 %v152, %v4736
    %v4738 = vand.u32 %v4737, 4294901760
    %4739 = vmatprep.subr.mxu0 %v4738
    %v4740 = vand.u32 %v151, 4294901760
    %v4741 = vsub.f32 %v151, %v4740
    %v4742 = vand.u32 %v4741, 4294901760
    %4743 = vmatpush1.msra.mxu0 %v4742
    %v4744 = vand.u32 %v154, 4294901760
    %v4745 = vsub.f32 %v154, %v4744
    %v4746 = vand.u32 %v4745, 4294901760
    %4747 = vmatprep.subr.mxu0 %v4746
    %v4748 = vand.u32 %v153, 4294901760
    %v4749 = vsub.f32 %v153, %v4748
    %v4750 = vand.u32 %v4749, 4294901760
    %4751 = vmatpush1.msra.mxu0 %v4750
    %v4752 = vand.u32 %v156, 4294901760
    %v4753 = vsub.f32 %v156, %v4752
    %v4754 = vand.u32 %v4753, 4294901760
    %4755 = vmatprep.subr.mxu0 %v4754
    %v4756 = vand.u32 %v155, 4294901760
    %v4757 = vsub.f32 %v155, %v4756
    %v4758 = vand.u32 %v4757, 4294901760
    %4759 = vmatpush1.msra.mxu0 %v4758
    %v4760 = vand.u32 %v158, 4294901760
    %v4761 = vsub.f32 %v158, %v4760
    %v4762 = vand.u32 %v4761, 4294901760
    %4763 = vmatprep.subr.mxu0 %v4762
    %v4764 = vand.u32 %v157, 4294901760
    %v4765 = vsub.f32 %v157, %v4764
    %v4766 = vand.u32 %v4765, 4294901760
    %4767 = vmatpush1.msra.mxu0 %v4766
    %v4768 = vand.u32 %v160, 4294901760
    %v4769 = vsub.f32 %v160, %v4768
    %v4770 = vand.u32 %v4769, 4294901760
    %4771 = vmatprep.subr.mxu0 %v4770
    %v4772 = vand.u32 %v159, 4294901760
    %v4773 = vsub.f32 %v159, %v4772
    %v4774 = vand.u32 %v4773, 4294901760
    %4775 = vmatpush1.msra.mxu0 %v4774
    %4776 = vmatprep.subr.mxu0 0.0
    %4777 = vmatpush1.msra.mxu0 0.0
    %4778 = vmatprep.subr.mxu0 0.0
    %4779 = vmatpush1.msra.mxu0 0.0
    %4780 = vmatprep.subr.mxu0 0.0
    %4781 = vmatpush1.msra.mxu0 0.0
    %4782 = vmatprep.subr.mxu0 0.0
    %4783 = vmatpush1.msra.mxu0 0.0
    %4784 = vmatprep.subr.mxu0 0.0
    %4785 = vmatpush1.msra.mxu0 0.0
    %4786 = vmatprep.subr.mxu0 0.0
    %4787 = vmatpush1.msra.mxu0 0.0
    %4788 = vmatprep.subr.mxu0 0.0
    %4789 = vmatpush1.msra.mxu0 0.0
    %4790 = vmatprep.subr.mxu0 0.0
    %4791 = vmatpush1.msra.mxu0 0.0
    %4792 = vmatprep.subr.mxu0 0.0
    %4793 = vmatpush1.msra.mxu0 0.0
    %4794 = vmatprep.subr.mxu0 0.0
    %4795 = vmatpush1.msra.mxu0 0.0
    %4796 = vmatprep.subr.mxu0 0.0
    %4797 = vmatpush1.msra.mxu0 0.0
    %4798 = vmatprep.subr.mxu0 0.0
    %4799 = vmatpush1.msra.mxu0 0.0
    %4800 = vmatprep.subr.mxu0 0.0
    %4801 = vmatpush1.msra.mxu0 0.0
    %4802 = vmatprep.subr.mxu0 0.0
    %4803 = vmatpush1.msra.mxu0 0.0
    %4804 = vmatprep.subr.mxu0 0.0
    %4805 = vmatpush1.msra.mxu0 0.0
    %4806 = vmatprep.subr.mxu0 0.0
    %4807 = vmatpush1.msra.mxu0 0.0
    %4808 = vmatprep.subr.mxu0 0.0
    %4809 = vmatpush1.msra.mxu0 0.0
    %4810 = vmatprep.subr.mxu0 0.0
    %4811 = vmatpush1.msra.mxu0 0.0
    %4812 = vmatprep.subr.mxu0 0.0
    %4813 = vmatpush1.msra.mxu0 0.0
    %4814 = vmatprep.subr.mxu0 0.0
    %4815 = vmatpush1.msra.mxu0 0.0
    %4816 = vmatprep.subr.mxu0 0.0
    %4817 = vmatpush1.msra.mxu0 0.0
    %4818 = vmatprep.subr.mxu0 0.0
    %4819 = vmatpush1.msra.mxu0 0.0
    %4820 = vmatprep.subr.mxu0 0.0
    %4821 = vmatpush1.msra.mxu0 0.0
    %4822 = vmatprep.subr.mxu0 0.0
    %4823 = vmatpush1.msra.mxu0 0.0
    %4824 = vmatprep.mubr.f32.mxu0 0.0
    %v4825 = vand.u32 %v4271, 4294901760
    %4826 = vmatmul.mubr.f32.gmra.mrb[0].mxu0 %v4825
    %v4827 = vpop.f32.mrb[0].mxu0
    %v4828 = vadd.f32 %v4708, %v4827
    %v4829 = vpop.f32.mrb[0].mxu0
    %v4830 = vadd.f32 %v4710, %v4829
    %4831 = vdwg.mxu0
    %v4832 = vand.u32 %v146, 4294901760
    %4833 = vmatprep.subr.mxu0 %v4832
    %v4834 = vand.u32 %v145, 4294901760
    %4835 = vmatpush1.msra.mxu0 %v4834
    %v4836 = vand.u32 %v148, 4294901760
    %4837 = vmatprep.subr.mxu0 %v4836
    %v4838 = vand.u32 %v147, 4294901760
    %4839 = vmatpush1.msra.mxu0 %v4838
    %v4840 = vand.u32 %v150, 4294901760
    %4841 = vmatprep.subr.mxu0 %v4840
    %v4842 = vand.u32 %v149, 4294901760
    %4843 = vmatpush1.msra.mxu0 %v4842
    %v4844 = vand.u32 %v152, 4294901760
    %4845 = vmatprep.subr.mxu0 %v4844
    %v4846 = vand.u32 %v151, 4294901760
    %4847 = vmatpush1.msra.mxu0 %v4846
    %v4848 = vand.u32 %v154, 4294901760
    %4849 = vmatprep.subr.mxu0 %v4848
    %v4850 = vand.u32 %v153, 4294901760
    %4851 = vmatpush1.msra.mxu0 %v4850
    %v4852 = vand.u32 %v156, 4294901760
    %4853 = vmatprep.subr.mxu0 %v4852
    %v4854 = vand.u32 %v155, 4294901760
    %4855 = vmatpush1.msra.mxu0 %v4854
    %v4856 = vand.u32 %v158, 4294901760
    %4857 = vmatprep.subr.mxu0 %v4856
    %v4858 = vand.u32 %v157, 4294901760
    %4859 = vmatpush1.msra.mxu0 %v4858
    %v4860 = vand.u32 %v160, 4294901760
    %4861 = vmatprep.subr.mxu0 %v4860
    %v4862 = vand.u32 %v159, 4294901760
    %4863 = vmatpush1.msra.mxu0 %v4862
    %4864 = vmatprep.subr.mxu0 0.0
    %4865 = vmatpush1.msra.mxu0 0.0
    %4866 = vmatprep.subr.mxu0 0.0
    %4867 = vmatpush1.msra.mxu0 0.0
    %4868 = vmatprep.subr.mxu0 0.0
    %4869 = vmatpush1.msra.mxu0 0.0
    %4870 = vmatprep.subr.mxu0 0.0
    %4871 = vmatpush1.msra.mxu0 0.0
    %4872 = vmatprep.subr.mxu0 0.0
    %4873 = vmatpush1.msra.mxu0 0.0
    %4874 = vmatprep.subr.mxu0 0.0
    %4875 = vmatpush1.msra.mxu0 0.0
    %4876 = vmatprep.subr.mxu0 0.0
    %4877 = vmatpush1.msra.mxu0 0.0
    %4878 = vmatprep.subr.mxu0 0.0
    %4879 = vmatpush1.msra.mxu0 0.0
    %4880 = vmatprep.subr.mxu0 0.0
    %4881 = vmatpush1.msra.mxu0 0.0
    %4882 = vmatprep.subr.mxu0 0.0
    %4883 = vmatpush1.msra.mxu0 0.0
    %4884 = vmatprep.subr.mxu0 0.0
    %4885 = vmatpush1.msra.mxu0 0.0
    %4886 = vmatprep.subr.mxu0 0.0
    %4887 = vmatpush1.msra.mxu0 0.0
    %4888 = vmatprep.subr.mxu0 0.0
    %4889 = vmatpush1.msra.mxu0 0.0
    %4890 = vmatprep.subr.mxu0 0.0
    %4891 = vmatpush1.msra.mxu0 0.0
    %4892 = vmatprep.subr.mxu0 0.0
    %4893 = vmatpush1.msra.mxu0 0.0
    %4894 = vmatprep.subr.mxu0 0.0
    %4895 = vmatpush1.msra.mxu0 0.0
    %4896 = vmatprep.subr.mxu0 0.0
    %4897 = vmatpush1.msra.mxu0 0.0
    %4898 = vmatprep.subr.mxu0 0.0
    %4899 = vmatpush1.msra.mxu0 0.0
    %4900 = vmatprep.subr.mxu0 0.0
    %4901 = vmatpush1.msra.mxu0 0.0
    %4902 = vmatprep.subr.mxu0 0.0
    %4903 = vmatpush1.msra.mxu0 0.0
    %4904 = vmatprep.subr.mxu0 0.0
    %4905 = vmatpush1.msra.mxu0 0.0
    %4906 = vmatprep.subr.mxu0 0.0
    %4907 = vmatpush1.msra.mxu0 0.0
    %4908 = vmatprep.subr.mxu0 0.0
    %4909 = vmatpush1.msra.mxu0 0.0
    %4910 = vmatprep.subr.mxu0 0.0
    %4911 = vmatpush1.msra.mxu0 0.0
    %4912 = vmatprep.mubr.f32.mxu0 0.0
    %v4913 = vand.u32 %v4271, 4294901760
    %4914 = vmatmul.mubr.f32.gmra.mrb[0].mxu0 %v4913
    %v4915 = vpop.f32.mrb[0].mxu0
    %v4916 = vadd.f32 %v4828, %v4915
    %v4917 = vpop.f32.mrb[0].mxu0
    %v4918 = vadd.f32 %v4830, %v4917
    %4919 = vdwg.mxu0
    %v4920 = vadd.f32 %v4270, %v4916
    %v4921 = vxor.u32 %v4920, 2147483648
    %v4922 = vmul.f32 %v4921, 1.442695
    %v4923 = vpow.pop %v4922
    %v4924 = vadd.f32 %v4923, 1.0
    %v4925 = vrcp.pop %v4924
    %v4926 = vmul.f32 1.0, %v4925
    %v4927 = vadd.f32 %v4918, %v825
    %v4928 = vmul.f32 %v4926, %v4927
    %v4930 = vrot.slane %v4270, 1
    %v4932 = vadd.f32 %v4930, %v4928
    %v4933 = vtanh.pop %v4932
    %v4934 = vsub.f32 1.0, %v4926
    %4936 = vrot.lane.b32.xlu0 %v4933, 64
    %v4937 = vpop.permute.xlu0 %4936
    %v4939 = vmul.f32 %v4934, %v4937
    %v4940 = vmul.f32 %v4926, %v4258
    %v4941 = vadd.f32 %v4939, %v4940
    %v4943 = vlaneseq
    %v4944 = vshrl.u32 %v4943, 7
    %v4945 = vsub.s32 0, %v4944
    %v4946 = vrot.slane %v4941, %v4945
    %4947 = vrot.lane.b32.xlu0 %v4946, 64
    %v4948 = vpop.permute.xlu0 %4947
    %4950 = vst.msk [vmem:[#allocation3 + $0x6] sm:$0x1] %vm850, %v4948
    %4951 = vst.msk [vmem:[#allocation3 + $0x1] sm:$0x1] %vm852, %v4948
    %s4952 = scalar_lea.vmem [#allocation2], 7
    %v4953 = vld [vmem:[%s4952] ss:$8 sm:$0x3]
    %v4954 = vsel %vm143, %v4948, 0
    %v4956 = vand.u32 %v146, 4294901760
    %4957 = vmatprep.subr.mxu0 %v4956
    %v4958 = vand.u32 %v145, 4294901760
    %4959 = vmatpush1.msra.mxu0 %v4958
    %v4960 = vand.u32 %v148, 4294901760
    %4961 = vmatprep.subr.mxu0 %v4960
    %v4962 = vand.u32 %v147, 4294901760
    %4963 = vmatpush1.msra.mxu0 %v4962
    %v4964 = vand.u32 %v150, 4294901760
    %4965 = vmatprep.subr.mxu0 %v4964
    %v4966 = vand.u32 %v149, 4294901760
    %4967 = vmatpush1.msra.mxu0 %v4966
    %v4968 = vand.u32 %v152, 4294901760
    %4969 = vmatprep.subr.mxu0 %v4968
    %v4970 = vand.u32 %v151, 4294901760
    %4971 = vmatpush1.msra.mxu0 %v4970
    %v4972 = vand.u32 %v154, 4294901760
    %4973 = vmatprep.subr.mxu0 %v4972
    %v4974 = vand.u32 %v153, 4294901760
    %4975 = vmatpush1.msra.mxu0 %v4974
    %v4976 = vand.u32 %v156, 4294901760
    %4977 = vmatprep.subr.mxu0 %v4976
    %v4978 = vand.u32 %v155, 4294901760
    %4979 = vmatpush1.msra.mxu0 %v4978
    %v4980 = vand.u32 %v158, 4294901760
    %4981 = vmatprep.subr.mxu0 %v4980
    %v4982 = vand.u32 %v157, 4294901760
    %4983 = vmatpush1.msra.mxu0 %v4982
    %v4984 = vand.u32 %v160, 4294901760
    %4985 = vmatprep.subr.mxu0 %v4984
    %v4986 = vand.u32 %v159, 4294901760
    %4987 = vmatpush1.msra.mxu0 %v4986
    %4988 = vmatprep.subr.mxu0 0.0
    %4989 = vmatpush1.msra.mxu0 0.0
    %4990 = vmatprep.subr.mxu0 0.0
    %4991 = vmatpush1.msra.mxu0 0.0
    %4992 = vmatprep.subr.mxu0 0.0
    %4993 = vmatpush1.msra.mxu0 0.0
    %4994 = vmatprep.subr.mxu0 0.0
    %4995 = vmatpush1.msra.mxu0 0.0
    %4996 = vmatprep.subr.mxu0 0.0
    %4997 = vmatpush1.msra.mxu0 0.0
    %4998 = vmatprep.subr.mxu0 0.0
    %4999 = vmatpush1.msra.mxu0 0.0
    %5000 = vmatprep.subr.mxu0 0.0
    %5001 = vmatpush1.msra.mxu0 0.0
    %5002 = vmatprep.subr.mxu0 0.0
    %5003 = vmatpush1.msra.mxu0 0.0
    %5004 = vmatprep.subr.mxu0 0.0
    %5005 = vmatpush1.msra.mxu0 0.0
    %5006 = vmatprep.subr.mxu0 0.0
    %5007 = vmatpush1.msra.mxu0 0.0
    %5008 = vmatprep.subr.mxu0 0.0
    %5009 = vmatpush1.msra.mxu0 0.0
    %5010 = vmatprep.subr.mxu0 0.0
    %5011 = vmatpush1.msra.mxu0 0.0
    %5012 = vmatprep.subr.mxu0 0.0
    %5013 = vmatpush1.msra.mxu0 0.0
    %5014 = vmatprep.subr.mxu0 0.0
    %5015 = vmatpush1.msra.mxu0 0.0
    %5016 = vmatprep.subr.mxu0 0.0
    %5017 = vmatpush1.msra.mxu0 0.0
    %5018 = vmatprep.subr.mxu0 0.0
    %5019 = vmatpush1.msra.mxu0 0.0
    %5020 = vmatprep.subr.mxu0 0.0
    %5021 = vmatpush1.msra.mxu0 0.0
    %5022 = vmatprep.subr.mxu0 0.0
    %5023 = vmatpush1.msra.mxu0 0.0
    %5024 = vmatprep.subr.mxu0 0.0
    %5025 = vmatpush1.msra.mxu0 0.0
    %5026 = vmatprep.subr.mxu0 0.0
    %5027 = vmatpush1.msra.mxu0 0.0
    %5028 = vmatprep.subr.mxu0 0.0
    %5029 = vmatpush1.msra.mxu0 0.0
    %5030 = vmatprep.subr.mxu0 0.0
    %5031 = vmatpush1.msra.mxu0 0.0
    %5032 = vmatprep.subr.mxu0 0.0
    %5033 = vmatpush1.msra.mxu0 0.0
    %5034 = vmatprep.subr.mxu0 0.0
    %5035 = vmatpush1.msra.mxu0 0.0
    %5036 = vmatprep.mubr.f32.mxu0 0.0
    %v5037 = vand.u32 %v4954, 4294901760
    %v5038 = vsub.f32 %v4954, %v5037
    %v5039 = vand.u32 %v5038, 4294901760
    %v5040 = vsub.f32 %v5038, %v5039
    %v5041 = vand.u32 %v5040, 4294901760
    %5042 = vmatmul.mubr.f32.gmra.mrb[0].mxu0 %v5041
    %v5043 = vpop.f32.mrb[0].mxu0
    %v5044 = vadd.f32 0.0, %v5043
    %v5045 = vpop.f32.mrb[0].mxu0
    %v5046 = vadd.f32 0.0, %v5045
    %5047 = vdwg.mxu0
    %v5048 = vand.u32 %v146, 4294901760
    %v5049 = vsub.f32 %v146, %v5048
    %v5050 = vand.u32 %v5049, 4294901760
    %v5051 = vsub.f32 %v5049, %v5050
    %v5052 = vand.u32 %v5051, 4294901760
    %5053 = vmatprep.subr.mxu0 %v5052
    %v5054 = vand.u32 %v145, 4294901760
    %v5055 = vsub.f32 %v145, %v5054
    %v5056 = vand.u32 %v5055, 4294901760
    %v5057 = vsub.f32 %v5055, %v5056
    %v5058 = vand.u32 %v5057, 4294901760
    %5059 = vmatpush1.msra.mxu0 %v5058
    %v5060 = vand.u32 %v148, 4294901760
    %v5061 = vsub.f32 %v148, %v5060
    %v5062 = vand.u32 %v5061, 4294901760
    %v5063 = vsub.f32 %v5061, %v5062
    %v5064 = vand.u32 %v5063, 4294901760
    %5065 = vmatprep.subr.mxu0 %v5064
    %v5066 = vand.u32 %v147, 4294901760
    %v5067 = vsub.f32 %v147, %v5066
    %v5068 = vand.u32 %v5067, 4294901760
    %v5069 = vsub.f32 %v5067, %v5068
    %v5070 = vand.u32 %v5069, 4294901760
    %5071 = vmatpush1.msra.mxu0 %v5070
    %v5072 = vand.u32 %v150, 4294901760
    %v5073 = vsub.f32 %v150, %v5072
    %v5074 = vand.u32 %v5073, 4294901760
    %v5075 = vsub.f32 %v5073, %v5074
    %v5076 = vand.u32 %v5075, 4294901760
    %5077 = vmatprep.subr.mxu0 %v5076
    %v5078 = vand.u32 %v149, 4294901760
    %v5079 = vsub.f32 %v149, %v5078
    %v5080 = vand.u32 %v5079, 4294901760
    %v5081 = vsub.f32 %v5079, %v5080
    %v5082 = vand.u32 %v5081, 4294901760
    %5083 = vmatpush1.msra.mxu0 %v5082
    %v5084 = vand.u32 %v152, 4294901760
    %v5085 = vsub.f32 %v152, %v5084
    %v5086 = vand.u32 %v5085, 4294901760
    %v5087 = vsub.f32 %v5085, %v5086
    %v5088 = vand.u32 %v5087, 4294901760
    %5089 = vmatprep.subr.mxu0 %v5088
    %v5090 = vand.u32 %v151, 4294901760
    %v5091 = vsub.f32 %v151, %v5090
    %v5092 = vand.u32 %v5091, 4294901760
    %v5093 = vsub.f32 %v5091, %v5092
    %v5094 = vand.u32 %v5093, 4294901760
    %5095 = vmatpush1.msra.mxu0 %v5094
    %v5096 = vand.u32 %v154, 4294901760
    %v5097 = vsub.f32 %v154, %v5096
    %v5098 = vand.u32 %v5097, 4294901760
    %v5099 = vsub.f32 %v5097, %v5098
    %v5100 = vand.u32 %v5099, 4294901760
    %5101 = vmatprep.subr.mxu0 %v5100
    %v5102 = vand.u32 %v153, 4294901760
    %v5103 = vsub.f32 %v153, %v5102
    %v5104 = vand.u32 %v5103, 4294901760
    %v5105 = vsub.f32 %v5103, %v5104
    %v5106 = vand.u32 %v5105, 4294901760
    %5107 = vmatpush1.msra.mxu0 %v5106
    %v5108 = vand.u32 %v156, 4294901760
    %v5109 = vsub.f32 %v156, %v5108
    %v5110 = vand.u32 %v5109, 4294901760
    %v5111 = vsub.f32 %v5109, %v5110
    %v5112 = vand.u32 %v5111, 4294901760
    %5113 = vmatprep.subr.mxu0 %v5112
    %v5114 = vand.u32 %v155, 4294901760
    %v5115 = vsub.f32 %v155, %v5114
    %v5116 = vand.u32 %v5115, 4294901760
    %v5117 = vsub.f32 %v5115, %v5116
    %v5118 = vand.u32 %v5117, 4294901760
    %5119 = vmatpush1.msra.mxu0 %v5118
    %v5120 = vand.u32 %v158, 4294901760
    %v5121 = vsub.f32 %v158, %v5120
    %v5122 = vand.u32 %v5121, 4294901760
    %v5123 = vsub.f32 %v5121, %v5122
    %v5124 = vand.u32 %v5123, 4294901760
    %5125 = vmatprep.subr.mxu0 %v5124
    %v5126 = vand.u32 %v157, 4294901760
    %v5127 = vsub.f32 %v157, %v5126
    %v5128 = vand.u32 %v5127, 4294901760
    %v5129 = vsub.f32 %v5127, %v5128
    %v5130 = vand.u32 %v5129, 4294901760
    %5131 = vmatpush1.msra.mxu0 %v5130
    %v5132 = vand.u32 %v160, 4294901760
    %v5133 = vsub.f32 %v160, %v5132
    %v5134 = vand.u32 %v5133, 4294901760
    %v5135 = vsub.f32 %v5133, %v5134
    %v5136 = vand.u32 %v5135, 4294901760
    %5137 = vmatprep.subr.mxu0 %v5136
    %v5138 = vand.u32 %v159, 4294901760
    %v5139 = vsub.f32 %v159, %v5138
    %v5140 = vand.u32 %v5139, 4294901760
    %v5141 = vsub.f32 %v5139, %v5140
    %v5142 = vand.u32 %v5141, 4294901760
    %5143 = vmatpush1.msra.mxu0 %v5142
    %5144 = vmatprep.subr.mxu0 0.0
    %5145 = vmatpush1.msra.mxu0 0.0
    %5146 = vmatprep.subr.mxu0 0.0
    %5147 = vmatpush1.msra.mxu0 0.0
    %5148 = vmatprep.subr.mxu0 0.0
    %5149 = vmatpush1.msra.mxu0 0.0
    %5150 = vmatprep.subr.mxu0 0.0
    %5151 = vmatpush1.msra.mxu0 0.0
    %5152 = vmatprep.subr.mxu0 0.0
    %5153 = vmatpush1.msra.mxu0 0.0
    %5154 = vmatprep.subr.mxu0 0.0
    %5155 = vmatpush1.msra.mxu0 0.0
    %5156 = vmatprep.subr.mxu0 0.0
    %5157 = vmatpush1.msra.mxu0 0.0
    %5158 = vmatprep.subr.mxu0 0.0
    %5159 = vmatpush1.msra.mxu0 0.0
    %5160 = vmatprep.subr.mxu0 0.0
    %5161 = vmatpush1.msra.mxu0 0.0
    %5162 = vmatprep.subr.mxu0 0.0
    %5163 = vmatpush1.msra.mxu0 0.0
    %5164 = vmatprep.subr.mxu0 0.0
    %5165 = vmatpush1.msra.mxu0 0.0
    %5166 = vmatprep.subr.mxu0 0.0
    %5167 = vmatpush1.msra.mxu0 0.0
    %5168 = vmatprep.subr.mxu0 0.0
    %5169 = vmatpush1.msra.mxu0 0.0
    %5170 = vmatprep.subr.mxu0 0.0
    %5171 = vmatpush1.msra.mxu0 0.0
    %5172 = vmatprep.subr.mxu0 0.0
    %5173 = vmatpush1.msra.mxu0 0.0
    %5174 = vmatprep.subr.mxu0 0.0
    %5175 = vmatpush1.msra.mxu0 0.0
    %5176 = vmatprep.subr.mxu0 0.0
    %5177 = vmatpush1.msra.mxu0 0.0
    %5178 = vmatprep.subr.mxu0 0.0
    %5179 = vmatpush1.msra.mxu0 0.0
    %5180 = vmatprep.subr.mxu0 0.0
    %5181 = vmatpush1.msra.mxu0 0.0
    %5182 = vmatprep.subr.mxu0 0.0
    %5183 = vmatpush1.msra.mxu0 0.0
    %5184 = vmatprep.subr.mxu0 0.0
    %5185 = vmatpush1.msra.mxu0 0.0
    %5186 = vmatprep.subr.mxu0 0.0
    %5187 = vmatpush1.msra.mxu0 0.0
    %5188 = vmatprep.subr.mxu0 0.0
    %5189 = vmatpush1.msra.mxu0 0.0
    %5190 = vmatprep.subr.mxu0 0.0
    %5191 = vmatpush1.msra.mxu0 0.0
    %5192 = vmatprep.mubr.f32.mxu0 0.0
    %v5193 = vand.u32 %v4954, 4294901760
    %5194 = vmatmul.mubr.f32.gmra.mrb[0].mxu0 %v5193
    %v5195 = vpop.f32.mrb[0].mxu0
    %v5196 = vadd.f32 %v5044, %v5195
    %v5197 = vpop.f32.mrb[0].mxu0
    %v5198 = vadd.f32 %v5046, %v5197
    %5199 = vdwg.mxu0
    %v5200 = vand.u32 %v146, 4294901760
    %v5201 = vsub.f32 %v146, %v5200
    %5202 = vmatprep.subr.mxu0 %v5201
    %v5203 = vand.u32 %v145, 4294901760
    %v5204 = vsub.f32 %v145, %v5203
    %5205 = vmatpush1.msra.mxu0 %v5204
    %v5206 = vand.u32 %v148, 4294901760
    %v5207 = vsub.f32 %v148, %v5206
    %5208 = vmatprep.subr.mxu0 %v5207
    %v5209 = vand.u32 %v147, 4294901760
    %v5210 = vsub.f32 %v147, %v5209
    %5211 = vmatpush1.msra.mxu0 %v5210
    %v5212 = vand.u32 %v150, 4294901760
    %v5213 = vsub.f32 %v150, %v5212
    %5214 = vmatprep.subr.mxu0 %v5213
    %v5215 = vand.u32 %v149, 4294901760
    %v5216 = vsub.f32 %v149, %v5215
    %5217 = vmatpush1.msra.mxu0 %v5216
    %v5218 = vand.u32 %v152, 4294901760
    %v5219 = vsub.f32 %v152, %v5218
    %5220 = vmatprep.subr.mxu0 %v5219
    %v5221 = vand.u32 %v151, 4294901760
    %v5222 = vsub.f32 %v151, %v5221
    %5223 = vmatpush1.msra.mxu0 %v5222
    %v5224 = vand.u32 %v154, 4294901760
    %v5225 = vsub.f32 %v154, %v5224
    %5226 = vmatprep.subr.mxu0 %v5225
    %v5227 = vand.u32 %v153, 4294901760
    %v5228 = vsub.f32 %v153, %v5227
    %5229 = vmatpush1.msra.mxu0 %v5228
    %v5230 = vand.u32 %v156, 4294901760
    %v5231 = vsub.f32 %v156, %v5230
    %5232 = vmatprep.subr.mxu0 %v5231
    %v5233 = vand.u32 %v155, 4294901760
    %v5234 = vsub.f32 %v155, %v5233
    %5235 = vmatpush1.msra.mxu0 %v5234
    %v5236 = vand.u32 %v158, 4294901760
    %v5237 = vsub.f32 %v158, %v5236
    %5238 = vmatprep.subr.mxu0 %v5237
    %v5239 = vand.u32 %v157, 4294901760
    %v5240 = vsub.f32 %v157, %v5239
    %5241 = vmatpush1.msra.mxu0 %v5240
    %v5242 = vand.u32 %v160, 4294901760
    %v5243 = vsub.f32 %v160, %v5242
    %5244 = vmatprep.subr.mxu0 %v5243
    %v5245 = vand.u32 %v159, 4294901760
    %v5246 = vsub.f32 %v159, %v5245
    %5247 = vmatpush1.msra.mxu0 %v5246
    %5248 = vmatprep.subr.mxu0 0.0
    %5249 = vmatpush1.msra.mxu0 0.0
    %5250 = vmatprep.subr.mxu0 0.0
    %5251 = vmatpush1.msra.mxu0 0.0
    %5252 = vmatprep.subr.mxu0 0.0
    %5253 = vmatpush1.msra.mxu0 0.0
    %5254 = vmatprep.subr.mxu0 0.0
    %5255 = vmatpush1.msra.mxu0 0.0
    %5256 = vmatprep.subr.mxu0 0.0
    %5257 = vmatpush1.msra.mxu0 0.0
    %5258 = vmatprep.subr.mxu0 0.0
    %5259 = vmatpush1.msra.mxu0 0.0
    %5260 = vmatprep.subr.mxu0 0.0
    %5261 = vmatpush1.msra.mxu0 0.0
    %5262 = vmatprep.subr.mxu0 0.0
    %5263 = vmatpush1.msra.mxu0 0.0
    %5264 = vmatprep.subr.mxu0 0.0
    %5265 = vmatpush1.msra.mxu0 0.0
    %5266 = vmatprep.subr.mxu0 0.0
    %5267 = vmatpush1.msra.mxu0 0.0
    %5268 = vmatprep.subr.mxu0 0.0
    %5269 = vmatpush1.msra.mxu0 0.0
    %5270 = vmatprep.subr.mxu0 0.0
    %5271 = vmatpush1.msra.mxu0 0.0
    %5272 = vmatprep.subr.mxu0 0.0
    %5273 = vmatpush1.msra.mxu0 0.0
    %5274 = vmatprep.subr.mxu0 0.0
    %5275 = vmatpush1.msra.mxu0 0.0
    %5276 = vmatprep.subr.mxu0 0.0
    %5277 = vmatpush1.msra.mxu0 0.0
    %5278 = vmatprep.subr.mxu0 0.0
    %5279 = vmatpush1.msra.mxu0 0.0
    %5280 = vmatprep.subr.mxu0 0.0
    %5281 = vmatpush1.msra.mxu0 0.0
    %5282 = vmatprep.subr.mxu0 0.0
    %5283 = vmatpush1.msra.mxu0 0.0
    %5284 = vmatprep.subr.mxu0 0.0
    %5285 = vmatpush1.msra.mxu0 0.0
    %5286 = vmatprep.subr.mxu0 0.0
    %5287 = vmatpush1.msra.mxu0 0.0
    %5288 = vmatprep.subr.mxu0 0.0
    %5289 = vmatpush1.msra.mxu0 0.0
    %5290 = vmatprep.subr.mxu0 0.0
    %5291 = vmatpush1.msra.mxu0 0.0
    %5292 = vmatprep.subr.mxu0 0.0
    %5293 = vmatpush1.msra.mxu0 0.0
    %5294 = vmatprep.subr.mxu0 0.0
    %5295 = vmatpush1.msra.mxu0 0.0
    %5296 = vmatprep.mubr.f32.mxu0 0.0
    %v5297 = vand.u32 %v4954, 4294901760
    %v5298 = vsub.f32 %v4954, %v5297
    %5299 = vmatmul.mubr.f32.gmra.mrb[0].mxu0 %v5298
    %v5300 = vpop.f32.mrb[0].mxu0
    %v5301 = vadd.f32 %v5196, %v5300
    %v5302 = vpop.f32.mrb[0].mxu0
    %v5303 = vadd.f32 %v5198, %v5302
    %5304 = vdwg.mxu0
    %v5305 = vand.u32 %v146, 4294901760
    %5306 = vmatprep.subr.mxu0 %v5305
    %v5307 = vand.u32 %v145, 4294901760
    %5308 = vmatpush1.msra.mxu0 %v5307
    %v5309 = vand.u32 %v148, 4294901760
    %5310 = vmatprep.subr.mxu0 %v5309
    %v5311 = vand.u32 %v147, 4294901760
    %5312 = vmatpush1.msra.mxu0 %v5311
    %v5313 = vand.u32 %v150, 4294901760
    %5314 = vmatprep.subr.mxu0 %v5313
    %v5315 = vand.u32 %v149, 4294901760
    %5316 = vmatpush1.msra.mxu0 %v5315
    %v5317 = vand.u32 %v152, 4294901760
    %5318 = vmatprep.subr.mxu0 %v5317
    %v5319 = vand.u32 %v151, 4294901760
    %5320 = vmatpush1.msra.mxu0 %v5319
    %v5321 = vand.u32 %v154, 4294901760
    %5322 = vmatprep.subr.mxu0 %v5321
    %v5323 = vand.u32 %v153, 4294901760
    %5324 = vmatpush1.msra.mxu0 %v5323
    %v5325 = vand.u32 %v156, 4294901760
    %5326 = vmatprep.subr.mxu0 %v5325
    %v5327 = vand.u32 %v155, 4294901760
    %5328 = vmatpush1.msra.mxu0 %v5327
    %v5329 = vand.u32 %v158, 4294901760
    %5330 = vmatprep.subr.mxu0 %v5329
    %v5331 = vand.u32 %v157, 4294901760
    %5332 = vmatpush1.msra.mxu0 %v5331
    %v5333 = vand.u32 %v160, 4294901760
    %5334 = vmatprep.subr.mxu0 %v5333
    %v5335 = vand.u32 %v159, 4294901760
    %5336 = vmatpush1.msra.mxu0 %v5335
    %5337 = vmatprep.subr.mxu0 0.0
    %5338 = vmatpush1.msra.mxu0 0.0
    %5339 = vmatprep.subr.mxu0 0.0
    %5340 = vmatpush1.msra.mxu0 0.0
    %5341 = vmatprep.subr.mxu0 0.0
    %5342 = vmatpush1.msra.mxu0 0.0
    %5343 = vmatprep.subr.mxu0 0.0
    %5344 = vmatpush1.msra.mxu0 0.0
    %5345 = vmatprep.subr.mxu0 0.0
    %5346 = vmatpush1.msra.mxu0 0.0
    %5347 = vmatprep.subr.mxu0 0.0
    %5348 = vmatpush1.msra.mxu0 0.0
    %5349 = vmatprep.subr.mxu0 0.0
    %5350 = vmatpush1.msra.mxu0 0.0
    %5351 = vmatprep.subr.mxu0 0.0
    %5352 = vmatpush1.msra.mxu0 0.0
    %5353 = vmatprep.subr.mxu0 0.0
    %5354 = vmatpush1.msra.mxu0 0.0
    %5355 = vmatprep.subr.mxu0 0.0
    %5356 = vmatpush1.msra.mxu0 0.0
    %5357 = vmatprep.subr.mxu0 0.0
    %5358 = vmatpush1.msra.mxu0 0.0
    %5359 = vmatprep.subr.mxu0 0.0
    %5360 = vmatpush1.msra.mxu0 0.0
    %5361 = vmatprep.subr.mxu0 0.0
    %5362 = vmatpush1.msra.mxu0 0.0
    %5363 = vmatprep.subr.mxu0 0.0
    %5364 = vmatpush1.msra.mxu0 0.0
    %5365 = vmatprep.subr.mxu0 0.0
    %5366 = vmatpush1.msra.mxu0 0.0
    %5367 = vmatprep.subr.mxu0 0.0
    %5368 = vmatpush1.msra.mxu0 0.0
    %5369 = vmatprep.subr.mxu0 0.0
    %5370 = vmatpush1.msra.mxu0 0.0
    %5371 = vmatprep.subr.mxu0 0.0
    %5372 = vmatpush1.msra.mxu0 0.0
    %5373 = vmatprep.subr.mxu0 0.0
    %5374 = vmatpush1.msra.mxu0 0.0
    %5375 = vmatprep.subr.mxu0 0.0
    %5376 = vmatpush1.msra.mxu0 0.0
    %5377 = vmatprep.subr.mxu0 0.0
    %5378 = vmatpush1.msra.mxu0 0.0
    %5379 = vmatprep.subr.mxu0 0.0
    %5380 = vmatpush1.msra.mxu0 0.0
    %5381 = vmatprep.subr.mxu0 0.0
    %5382 = vmatpush1.msra.mxu0 0.0
    %5383 = vmatprep.subr.mxu0 0.0
    %5384 = vmatpush1.msra.mxu0 0.0
    %5385 = vmatprep.mubr.f32.mxu0 0.0
    %v5386 = vand.u32 %v4954, 4294901760
    %v5387 = vsub.f32 %v4954, %v5386
    %v5388 = vand.u32 %v5387, 4294901760
    %5389 = vmatmul.mubr.f32.gmra.mrb[0].mxu0 %v5388
    %v5390 = vpop.f32.mrb[0].mxu0
    %v5391 = vadd.f32 %v5301, %v5390
    %v5392 = vpop.f32.mrb[0].mxu0
    %v5393 = vadd.f32 %v5303, %v5392
    %5394 = vdwg.mxu0
    %v5395 = vand.u32 %v146, 4294901760
    %v5396 = vsub.f32 %v146, %v5395
    %v5397 = vand.u32 %v5396, 4294901760
    %5398 = vmatprep.subr.mxu0 %v5397
    %v5399 = vand.u32 %v145, 4294901760
    %v5400 = vsub.f32 %v145, %v5399
    %v5401 = vand.u32 %v5400, 4294901760
    %5402 = vmatpush1.msra.mxu0 %v5401
    %v5403 = vand.u32 %v148, 4294901760
    %v5404 = vsub.f32 %v148, %v5403
    %v5405 = vand.u32 %v5404, 4294901760
    %5406 = vmatprep.subr.mxu0 %v5405
    %v5407 = vand.u32 %v147, 4294901760
    %v5408 = vsub.f32 %v147, %v5407
    %v5409 = vand.u32 %v5408, 4294901760
    %5410 = vmatpush1.msra.mxu0 %v5409
    %v5411 = vand.u32 %v150, 4294901760
    %v5412 = vsub.f32 %v150, %v5411
    %v5413 = vand.u32 %v5412, 4294901760
    %5414 = vmatprep.subr.mxu0 %v5413
    %v5415 = vand.u32 %v149, 4294901760
    %v5416 = vsub.f32 %v149, %v5415
    %v5417 = vand.u32 %v5416, 4294901760
    %5418 = vmatpush1.msra.mxu0 %v5417
    %v5419 = vand.u32 %v152, 4294901760
    %v5420 = vsub.f32 %v152, %v5419
    %v5421 = vand.u32 %v5420, 4294901760
    %5422 = vmatprep.subr.mxu0 %v5421
    %v5423 = vand.u32 %v151, 4294901760
    %v5424 = vsub.f32 %v151, %v5423
    %v5425 = vand.u32 %v5424, 4294901760
    %5426 = vmatpush1.msra.mxu0 %v5425
    %v5427 = vand.u32 %v154, 4294901760
    %v5428 = vsub.f32 %v154, %v5427
    %v5429 = vand.u32 %v5428, 4294901760
    %5430 = vmatprep.subr.mxu0 %v5429
    %v5431 = vand.u32 %v153, 4294901760
    %v5432 = vsub.f32 %v153, %v5431
    %v5433 = vand.u32 %v5432, 4294901760
    %5434 = vmatpush1.msra.mxu0 %v5433
    %v5435 = vand.u32 %v156, 4294901760
    %v5436 = vsub.f32 %v156, %v5435
    %v5437 = vand.u32 %v5436, 4294901760
    %5438 = vmatprep.subr.mxu0 %v5437
    %v5439 = vand.u32 %v155, 4294901760
    %v5440 = vsub.f32 %v155, %v5439
    %v5441 = vand.u32 %v5440, 4294901760
    %5442 = vmatpush1.msra.mxu0 %v5441
    %v5443 = vand.u32 %v158, 4294901760
    %v5444 = vsub.f32 %v158, %v5443
    %v5445 = vand.u32 %v5444, 4294901760
    %5446 = vmatprep.subr.mxu0 %v5445
    %v5447 = vand.u32 %v157, 4294901760
    %v5448 = vsub.f32 %v157, %v5447
    %v5449 = vand.u32 %v5448, 4294901760
    %5450 = vmatpush1.msra.mxu0 %v5449
    %v5451 = vand.u32 %v160, 4294901760
    %v5452 = vsub.f32 %v160, %v5451
    %v5453 = vand.u32 %v5452, 4294901760
    %5454 = vmatprep.subr.mxu0 %v5453
    %v5455 = vand.u32 %v159, 4294901760
    %v5456 = vsub.f32 %v159, %v5455
    %v5457 = vand.u32 %v5456, 4294901760
    %5458 = vmatpush1.msra.mxu0 %v5457
    %5459 = vmatprep.subr.mxu0 0.0
    %5460 = vmatpush1.msra.mxu0 0.0
    %5461 = vmatprep.subr.mxu0 0.0
    %5462 = vmatpush1.msra.mxu0 0.0
    %5463 = vmatprep.subr.mxu0 0.0
    %5464 = vmatpush1.msra.mxu0 0.0
    %5465 = vmatprep.subr.mxu0 0.0
    %5466 = vmatpush1.msra.mxu0 0.0
    %5467 = vmatprep.subr.mxu0 0.0
    %5468 = vmatpush1.msra.mxu0 0.0
    %5469 = vmatprep.subr.mxu0 0.0
    %5470 = vmatpush1.msra.mxu0 0.0
    %5471 = vmatprep.subr.mxu0 0.0
    %5472 = vmatpush1.msra.mxu0 0.0
    %5473 = vmatprep.subr.mxu0 0.0
    %5474 = vmatpush1.msra.mxu0 0.0
    %5475 = vmatprep.subr.mxu0 0.0
    %5476 = vmatpush1.msra.mxu0 0.0
    %5477 = vmatprep.subr.mxu0 0.0
    %5478 = vmatpush1.msra.mxu0 0.0
    %5479 = vmatprep.subr.mxu0 0.0
    %5480 = vmatpush1.msra.mxu0 0.0
    %5481 = vmatprep.subr.mxu0 0.0
    %5482 = vmatpush1.msra.mxu0 0.0
    %5483 = vmatprep.subr.mxu0 0.0
    %5484 = vmatpush1.msra.mxu0 0.0
    %5485 = vmatprep.subr.mxu0 0.0
    %5486 = vmatpush1.msra.mxu0 0.0
    %5487 = vmatprep.subr.mxu0 0.0
    %5488 = vmatpush1.msra.mxu0 0.0
    %5489 = vmatprep.subr.mxu0 0.0
    %5490 = vmatpush1.msra.mxu0 0.0
    %5491 = vmatprep.subr.mxu0 0.0
    %5492 = vmatpush1.msra.mxu0 0.0
    %5493 = vmatprep.subr.mxu0 0.0
    %5494 = vmatpush1.msra.mxu0 0.0
    %5495 = vmatprep.subr.mxu0 0.0
    %5496 = vmatpush1.msra.mxu0 0.0
    %5497 = vmatprep.subr.mxu0 0.0
    %5498 = vmatpush1.msra.mxu0 0.0
    %5499 = vmatprep.subr.mxu0 0.0
    %5500 = vmatpush1.msra.mxu0 0.0
    %5501 = vmatprep.subr.mxu0 0.0
    %5502 = vmatpush1.msra.mxu0 0.0
    %5503 = vmatprep.subr.mxu0 0.0
    %5504 = vmatpush1.msra.mxu0 0.0
    %5505 = vmatprep.subr.mxu0 0.0
    %5506 = vmatpush1.msra.mxu0 0.0
    %5507 = vmatprep.mubr.f32.mxu0 0.0
    %v5508 = vand.u32 %v4954, 4294901760
    %5509 = vmatmul.mubr.f32.gmra.mrb[0].mxu0 %v5508
    %v5510 = vpop.f32.mrb[0].mxu0
    %v5511 = vadd.f32 %v5391, %v5510
    %v5512 = vpop.f32.mrb[0].mxu0
    %v5513 = vadd.f32 %v5393, %v5512
    %5514 = vdwg.mxu0
    %v5515 = vand.u32 %v146, 4294901760
    %5516 = vmatprep.subr.mxu0 %v5515
    %v5517 = vand.u32 %v145, 4294901760
    %5518 = vmatpush1.msra.mxu0 %v5517
    %v5519 = vand.u32 %v148, 4294901760
    %5520 = vmatprep.subr.mxu0 %v5519
    %v5521 = vand.u32 %v147, 4294901760
    %5522 = vmatpush1.msra.mxu0 %v5521
    %v5523 = vand.u32 %v150, 4294901760
    %5524 = vmatprep.subr.mxu0 %v5523
    %v5525 = vand.u32 %v149, 4294901760
    %5526 = vmatpush1.msra.mxu0 %v5525
    %v5527 = vand.u32 %v152, 4294901760
    %5528 = vmatprep.subr.mxu0 %v5527
    %v5529 = vand.u32 %v151, 4294901760
    %5530 = vmatpush1.msra.mxu0 %v5529
    %v5531 = vand.u32 %v154, 4294901760
    %5532 = vmatprep.subr.mxu0 %v5531
    %v5533 = vand.u32 %v153, 4294901760
    %5534 = vmatpush1.msra.mxu0 %v5533
    %v5535 = vand.u32 %v156, 4294901760
    %5536 = vmatprep.subr.mxu0 %v5535
    %v5537 = vand.u32 %v155, 4294901760
    %5538 = vmatpush1.msra.mxu0 %v5537
    %v5539 = vand.u32 %v158, 4294901760
    %5540 = vmatprep.subr.mxu0 %v5539
    %v5541 = vand.u32 %v157, 4294901760
    %5542 = vmatpush1.msra.mxu0 %v5541
    %v5543 = vand.u32 %v160, 4294901760
    %5544 = vmatprep.subr.mxu0 %v5543
    %v5545 = vand.u32 %v159, 4294901760
    %5546 = vmatpush1.msra.mxu0 %v5545
    %5547 = vmatprep.subr.mxu0 0.0
    %5548 = vmatpush1.msra.mxu0 0.0
    %5549 = vmatprep.subr.mxu0 0.0
    %5550 = vmatpush1.msra.mxu0 0.0
    %5551 = vmatprep.subr.mxu0 0.0
    %5552 = vmatpush1.msra.mxu0 0.0
    %5553 = vmatprep.subr.mxu0 0.0
    %5554 = vmatpush1.msra.mxu0 0.0
    %5555 = vmatprep.subr.mxu0 0.0
    %5556 = vmatpush1.msra.mxu0 0.0
    %5557 = vmatprep.subr.mxu0 0.0
    %5558 = vmatpush1.msra.mxu0 0.0
    %5559 = vmatprep.subr.mxu0 0.0
    %5560 = vmatpush1.msra.mxu0 0.0
    %5561 = vmatprep.subr.mxu0 0.0
    %5562 = vmatpush1.msra.mxu0 0.0
    %5563 = vmatprep.subr.mxu0 0.0
    %5564 = vmatpush1.msra.mxu0 0.0
    %5565 = vmatprep.subr.mxu0 0.0
    %5566 = vmatpush1.msra.mxu0 0.0
    %5567 = vmatprep.subr.mxu0 0.0
    %5568 = vmatpush1.msra.mxu0 0.0
    %5569 = vmatprep.subr.mxu0 0.0
    %5570 = vmatpush1.msra.mxu0 0.0
    %5571 = vmatprep.subr.mxu0 0.0
    %5572 = vmatpush1.msra.mxu0 0.0
    %5573 = vmatprep.subr.mxu0 0.0
    %5574 = vmatpush1.msra.mxu0 0.0
    %5575 = vmatprep.subr.mxu0 0.0
    %5576 = vmatpush1.msra.mxu0 0.0
    %5577 = vmatprep.subr.mxu0 0.0
    %5578 = vmatpush1.msra.mxu0 0.0
    %5579 = vmatprep.subr.mxu0 0.0
    %5580 = vmatpush1.msra.mxu0 0.0
    %5581 = vmatprep.subr.mxu0 0.0
    %5582 = vmatpush1.msra.mxu0 0.0
    %5583 = vmatprep.subr.mxu0 0.0
    %5584 = vmatpush1.msra.mxu0 0.0
    %5585 = vmatprep.subr.mxu0 0.0
    %5586 = vmatpush1.msra.mxu0 0.0
    %5587 = vmatprep.subr.mxu0 0.0
    %5588 = vmatpush1.msra.mxu0 0.0
    %5589 = vmatprep.subr.mxu0 0.0
    %5590 = vmatpush1.msra.mxu0 0.0
    %5591 = vmatprep.subr.mxu0 0.0
    %5592 = vmatpush1.msra.mxu0 0.0
    %5593 = vmatprep.subr.mxu0 0.0
    %5594 = vmatpush1.msra.mxu0 0.0
    %5595 = vmatprep.mubr.f32.mxu0 0.0
    %v5596 = vand.u32 %v4954, 4294901760
    %5597 = vmatmul.mubr.f32.gmra.mrb[0].mxu0 %v5596
    %v5598 = vpop.f32.mrb[0].mxu0
    %v5599 = vadd.f32 %v5511, %v5598
    %v5600 = vpop.f32.mrb[0].mxu0
    %v5601 = vadd.f32 %v5513, %v5600
    %5602 = vdwg.mxu0
    %v5603 = vadd.f32 %v4953, %v5599
    %v5604 = vxor.u32 %v5603, 2147483648
    %v5605 = vmul.f32 %v5604, 1.442695
    %v5606 = vpow.pop %v5605
    %v5607 = vadd.f32 %v5606, 1.0
    %v5608 = vrcp.pop %v5607
    %v5609 = vmul.f32 1.0, %v5608
    %v5610 = vadd.f32 %v5601, %v825
    %v5611 = vmul.f32 %v5609, %v5610
    %v5613 = vrot.slane %v4953, 1
    %v5615 = vadd.f32 %v5613, %v5611
    %v5616 = vtanh.pop %v5615
    %v5617 = vsub.f32 1.0, %v5609
    %5619 = vrot.lane.b32.xlu0 %v5616, 64
    %v5620 = vpop.permute.xlu0 %5619
    %v5622 = vmul.f32 %v5617, %v5620
    %v5623 = vmul.f32 %v5609, %v4941
    %v5624 = vadd.f32 %v5622, %v5623
    %v5626 = vlaneseq
    %v5627 = vshrl.u32 %v5626, 7
    %v5628 = vsub.s32 0, %v5627
    %v5629 = vrot.slane %v5624, %v5628
    %5630 = vrot.lane.b32.xlu0 %v5629, 64
    %v5631 = vpop.permute.xlu0 %5630
    %5633 = vst.msk [vmem:[#allocation3 + $0x7] sm:$0x1] %vm850, %v5631
    %5634 = vst.msk [vmem:[#allocation3] sm:$0x1] %vm852, %v5631
    %v5635 = vld [vmem:[#allocation3] sm:$0xff]
    %v5636 = vpack.c.bf16 %v5635, %v5635
    %v5637 = vld [vmem:[#allocation7 + $0x20] sm:$0xf]
    %v5638 = vld [vmem:[#allocation7 + $0x28] sm:$0xf]
    %v5639 = vld [vmem:[#allocation7 + $0x30] sm:$0xf]
    %v5640 = vld [vmem:[#allocation7 + $0x38] sm:$0xf]
    %v5641 = vld [vmem:[#allocation7 + $0x40] sm:$0xf]
    %v5642 = vld [vmem:[#allocation7 + $0x48] sm:$0xf]
    %v5643 = vld [vmem:[#allocation7 + $0x50] sm:$0xf]
    %v5644 = vld [vmem:[#allocation7 + $0x58] sm:$0xf]
    %v5646 = vlaneseq
    %v5647 = vshrl.u32 %v5646, 7
    %v5648 = vsub.s32 0, %v5647
    %v5649 = vrot.slane %v60, %v5648
    %v5659 = vunpack.c.l.b16 %v5637
    %v5660 = vunpack.c.l.b16 %v5638
    %v5661 = vunpack.c.l.b16 %v5639
    %v5662 = vunpack.c.l.b16 %v5640
    %v5663 = vunpack.c.l.b16 %v5641
    %v5664 = vunpack.c.l.b16 %v5642
    %v5665 = vunpack.c.l.b16 %v5643
    %v5666 = vunpack.c.l.b16 %v5644
    %v5667 = vpack.c.b16 %v5660, %v5659
    %v5668 = vpack.c.b16 %v5662, %v5661
    %v5669 = vpack.c.b16 %v5664, %v5663
    %v5670 = vpack.c.b16 %v5666, %v5665
    %v5676 = vsel %vm143, %v5636, 0
    %5678 = vmatprep.subr.bf16.mxu0 0
    %5679 = vmatpush1.bf16.msra.mxu0 %v5667
    %5680 = vmatprep.subr.bf16.mxu0 0
    %5681 = vmatpush1.bf16.msra.mxu0 %v5668
    %5682 = vmatprep.subr.bf16.mxu0 0
    %5683 = vmatpush1.bf16.msra.mxu0 %v5669
    %5684 = vmatprep.subr.bf16.mxu0 0
    %5685 = vmatpush1.bf16.msra.mxu0 %v5670
    %5686 = vmatprep.subr.bf16.mxu0 0
    %5687 = vmatpush1.bf16.msra.mxu0 0
    %5688 = vmatprep.subr.bf16.mxu0 0
    %5689 = vmatpush1.bf16.msra.mxu0 0
    %5690 = vmatprep.subr.bf16.mxu0 0
    %5691 = vmatpush1.bf16.msra.mxu0 0
    %5692 = vmatprep.subr.bf16.mxu0 0
    %5693 = vmatpush1.bf16.msra.mxu0 0
    %5694 = vmatprep.subr.bf16.mxu0 0
    %5695 = vmatpush1.bf16.msra.mxu0 0
    %5696 = vmatprep.subr.bf16.mxu0 0
    %5697 = vmatpush1.bf16.msra.mxu0 0
    %5698 = vmatprep.subr.bf16.mxu0 0
    %5699 = vmatpush1.bf16.msra.mxu0 0
    %5700 = vmatprep.subr.bf16.mxu0 0
    %5701 = vmatpush1.bf16.msra.mxu0 0
    %5702 = vmatprep.subr.bf16.mxu0 0
    %5703 = vmatpush1.bf16.msra.mxu0 0
    %5704 = vmatprep.subr.bf16.mxu0 0
    %5705 = vmatpush1.bf16.msra.mxu0 0
    %5706 = vmatprep.subr.bf16.mxu0 0
    %5707 = vmatpush1.bf16.msra.mxu0 0
    %5708 = vmatprep.subr.bf16.mxu0 0
    %5709 = vmatpush1.bf16.msra.mxu0 0
    %5710 = vmatprep.mubr.bf16.mxu0 0
    %5711 = vmatmul.mubr.bf16.gmra.mrb[0].mxu0 %v5676
    %v5712 = vpop.f32.mrb[0].mxu0
    %v5713 = vadd.f32 %v5649, %v5712
    %v5714 = vpop.f32.mrb[0].mxu0
    %v5715 = vpop.f32.mrb[0].mxu0
    %v5716 = vpop.f32.mrb[0].mxu0
    %5717 = vdwg.mxu0
    %vm5718 = vcmask 64512
    %5719 = vst.msk [vmem:[#allocation10] sm:$0xff] %vm5718, %v5713
    // Predicated region
    $region30: #{tpu_custom_call.1} parent=1 // pred_check
      _
    $region31: #{tpu_custom_call.1} parent=1 // pred_check_branch
      %5721 = sbr.rel (0) target = $region33
    $region32: #{tpu_custom_call.1} parent=1 // pred_region
      %s5723 = ssub.s32 128, 128
      %5724 = vsyncadd [#allocation6], %s5723
      %s5726 = sshll.u32 [#allocation10], 4
      %s5727 = int_to_ptr.vmem [resolvable:$true] %s5726
      %5729 = dma.vmem_to_hbm [thread:$0]  %s5727, 128, %s4, [#allocation6]
    $region33: #{tpu_custom_call.1} parent=1 // pred_fallthru
      _
    // Predicated region
    $region34: #{tpu_custom_call.1} parent=1 // pred_check
      _
    $region35: #{tpu_custom_call.1} parent=1 // pred_check_branch
      %5731 = sbr.rel (0) target = $region37
    $region36: #{tpu_custom_call.1} parent=1 // pred_region
      %5732 = dma.done [#allocation6], 128
    $region37: #{tpu_custom_call.1} parent=1 // pred_fallthru
      _
    %5733 = vsyncpa [#allocation5], 1
    %5734 = vsyncpa [#allocation8], 1
    %5735 = vsyncpa [#allocation6], 1

</llo_original>
